<compile_context>
chip_gen: v5e
topology: v5e:2x2
jax: 0.10.0
libtpu: 0.0.40
codegen_flags: <defaults>
</compile_context>

<pallas_src>
import functools

import jax
import jax.numpy as jnp
from jax.experimental import pallas as pl
from jax.experimental.pallas import tpu as pltpu


def _round_up(x, m):
    return (x + m - 1) // m * m


def _fold_bn(gamma, beta, mean, var, eps=1e-5):
    scale = gamma / jnp.sqrt(var + eps)
    bias = beta - mean * scale
    return scale.astype(jnp.float32), bias.astype(jnp.float32)


def _basic_block_kernel(x_ref, w1_ref, w2_ref, b_ref, o_ref, hpad_ref,
                        *, H, W, Cp, We, TR):
    # x_ref   : (1, H+4, Wx, Cp) bf16  spatially zero-padded (2 rows/cols before
    #                                  the data), channels padded to Cp
    # w1_ref  : (3, 3*Cp, Cp)    bf16  conv1 taps (kx,cin stacked on K), BN1 folded
    # w2_ref  : (3, 3*Cp, Cp)    bf16  conv2 taps, BN2 scale folded
    # b_ref   : (2, Cp)          f32   folded BN biases (row 0: bn1, row 1: bn2)
    # o_ref   : (1, TR, W, Cp)   f32   output row slab
    # hpad_ref: (TR+2, We, Cp)   bf16  conv1 output slab incl. conv2's zero halo
    TRp2 = TR + 2
    r0 = pl.program_id(1) * TR
    if TR % 8 == 0:
        r0 = pl.multiple_of(r0, 8)

    # ---- conv1 + bn1 + relu on the extended (TR+2, We) slab.
    # 3 MXU dots of K = 3*Cp (one per ky) instead of one 9-way concat.
    acc1 = None
    for ky in range(3):
        p = jnp.concatenate(
            [x_ref[0, pl.ds(r0 + ky, TRp2), kx:kx + We, :] for kx in range(3)],
            axis=-1).reshape(TRp2 * We, 3 * Cp)
        d = jnp.dot(p, w1_ref[ky], preferred_element_type=jnp.float32)
        acc1 = d if acc1 is None else acc1 + d
    acc1 = acc1.reshape(TRp2, We, Cp)

    # In-kernel interior mask: zero the boundary ring (and alignment columns) so
    # hpad_ref carries exactly conv2's zero padding.  Global h-row gr maps to
    # conv1 output row gr-1; valid interior is 1 <= gr <= H, 1 <= gc <= W.
    grow = r0 + jax.lax.broadcasted_iota(jnp.int32, (TRp2, We, Cp), 0)
    gcol = jax.lax.broadcasted_iota(jnp.int32, (TRp2, We, Cp), 1)
    valid = (grow >= 1) & (grow <= H) & (gcol >= 1) & (gcol <= W)
    b1 = b_ref[0:1, :].reshape(1, 1, Cp)
    h = jnp.where(valid, jnp.maximum(acc1 + b1, 0.0), 0.0)
    hpad_ref[...] = h.astype(hpad_ref.dtype)

    # ---- conv2 + bn2 + residual + relu on the (TR, W) output slab.
    acc2 = None
    for ky in range(3):
        p = jnp.concatenate(
            [hpad_ref[ky:ky + TR, kx:kx + W, :] for kx in range(3)],
            axis=-1).reshape(TR * W, 3 * Cp)
        d = jnp.dot(p, w2_ref[ky], preferred_element_type=jnp.float32)
        acc2 = d if acc2 is None else acc2 + d
    acc2 = acc2.reshape(TR, W, Cp)

    b2 = b_ref[1:2, :].reshape(1, 1, Cp)
    residual = x_ref[0, pl.ds(r0 + 2, TR), 2:W + 2, :].astype(jnp.float32)
    out = acc2 + b2 + residual
    o_ref[...] = jnp.maximum(out, 0.0).reshape(1, TR, W, Cp).astype(o_ref.dtype)


def basic_block_forward(x_nchw, params, *, row_tile=8):
    """BasicBlock forward (stride=1, downsample=None).  Input/output NCHW."""
    N, C, H, W = x_nchw.shape
    assert W % 8 == 0, "demo kernel assumes W is a multiple of 8"
    TR = min(row_tile, H)
    assert H % TR == 0, "H must be divisible by the row tile"
    Cp = _round_up(C, 128)            # lane-dense channel padding
    We = _round_up(W + 2, 8)          # extended conv1-output columns
    Wx = _round_up(We + 2, 8)         # padded input width (sublane multiple)
    TRp2 = TR + 2

    # NCHW -> NHWC once; cast to bf16 before padding (halves DMA bytes).
    x = jnp.transpose(x_nchw, (0, 2, 3, 1)).astype(jnp.bfloat16)
    # One prep pass: 2 zero rows/cols before the data, enough after to reach
    # (H+4, Wx), channel pad to Cp.
    x_pad = jnp.pad(x, ((0, 0), (2, 2), (2, Wx - W - 2), (0, Cp - C)))

    s1, b1 = _fold_bn(params["bn1_gamma"], params["bn1_beta"],
                      params["bn1_mean"], params["bn1_var"])
    s2, b2 = _fold_bn(params["bn2_gamma"], params["bn2_beta"],
                      params["bn2_mean"], params["bn2_var"])

    def prep_w(w_oihw, scale):
        # (Cout,Cin,3,3) -> fold BN scale -> (ky,kx,Cin,Cout) -> pad -> (3, 3*Cp, Cp)
        w = w_oihw.astype(jnp.float32) * scale[:, None, None, None]
        w = jnp.transpose(w, (2, 3, 1, 0))
        w = jnp.pad(w, ((0, 0), (0, 0), (0, Cp - C), (0, Cp - C)))
        return w.reshape(3, 3 * Cp, Cp).astype(jnp.bfloat16)

    w1 = prep_w(params["conv1_w"], s1)
    w2 = prep_w(params["conv2_w"], s2)
    bias = jnp.stack([jnp.pad(b1, (0, Cp - C)),
                      jnp.pad(b2, (0, Cp - C))]).astype(jnp.float32)  # (2, Cp)

    kernel = functools.partial(_basic_block_kernel,
                               H=H, W=W, Cp=Cp, We=We, TR=TR)

    # Explicit VMEM budget: pipeline buffers (x2) for the x / weight / bias /
    # output blocks plus the hpad scratch and in-kernel patch/acc temporaries,
    # with 2x headroom (sized against v7x's 64 MiB physical VMEM).
    work = ((H + 4) * Wx * Cp * 2 * 2                      # x block (bf16) x2
            + 2 * 3 * 3 * Cp * Cp * 2 * 2                  # w1 + w2 (bf16) x2
            + 2 * Cp * 4 * 2                               # bias x2
            + TR * W * Cp * 4 * 2                          # out block (f32) x2
            + TRp2 * We * Cp * 2                           # hpad scratch (bf16)
            + TRp2 * We * 3 * Cp * 2 + TRp2 * We * Cp * 4  # p1 / acc1
            + TR * W * 3 * Cp * 2 + TR * W * Cp * 4)       # p2 / acc2
    vmem_limit = int(min(max(2 * work, 32 * 1024 * 1024), 100 * 1024 * 1024))

    out = pl.pallas_call(
        kernel,
        out_shape=jax.ShapeDtypeStruct((N, H, W, Cp), jnp.float32),
        grid_spec=pltpu.PrefetchScalarGridSpec(
            num_scalar_prefetch=0,
            grid=(N, H // TR),
            in_specs=[
                # Whole padded image per batch step; constant across row tiles.
                pl.BlockSpec((1, H + 4, Wx, Cp), lambda b, r: (b, 0, 0, 0)),
                pl.BlockSpec((3, 3 * Cp, Cp), lambda b, r: (0, 0, 0)),
                pl.BlockSpec((3, 3 * Cp, Cp), lambda b, r: (0, 0, 0)),
                pl.BlockSpec((2, Cp), lambda b, r: (0, 0)),
            ],
            out_specs=pl.BlockSpec((1, TR, W, Cp), lambda b, r: (b, r, 0, 0)),
            scratch_shapes=[pltpu.VMEM((TRp2, We, Cp), jnp.bfloat16)],
        ),
        compiler_params=pltpu.CompilerParams(
            dimension_semantics=("parallel", "parallel"),
            vmem_limit_bytes=vmem_limit),
    )(x_pad, w1, w2, bias)

    out = out[..., :C]                                   # drop padded channels
    return jnp.transpose(out, (0, 3, 1, 2)).astype(x_nchw.dtype)   # NCHW


def _reference_forward(x_nchw, params):
    """Pure-JAX reference (lax conv, f32) for verification."""
    def conv3x3(x, w):
        return jax.lax.conv_general_dilated(
            x, w, window_strides=(1, 1), padding=((1, 1), (1, 1)),
            dimension_numbers=("NCHW", "OIHW", "NCHW"))

    def bn(x, g, b, m, v, eps=1e-5):
        g, b, m, v = [t.reshape(1, -1, 1, 1) for t in (g, b, m, v)]
        return g * (x - m) / jnp.sqrt(v + eps) + b

    residual = x_nchw
    o = conv3x3(x_nchw, params["conv1_w"])
    o = bn(o, params["bn1_gamma"], params["bn1_beta"],
           params["bn1_mean"], params["bn1_var"])
    o = jnp.maximum(o, 0.0)
    o = conv3x3(o, params["conv2_w"])
    o = bn(o, params["bn2_gamma"], params["bn2_beta"],
           params["bn2_mean"], params["bn2_var"])
    o = o + residual
    return jnp.maximum(o, 0.0)


if __name__ == "__main__":
    key = jax.random.PRNGKey(0)
    N, C, H, W = 2, 4, 16, 16          # inplanes = planes = 4, stride = 1
    ks = jax.random.split(key, 11)

    x = jax.random.normal(ks[0], (N, C, H, W), jnp.float32)
    params = {
        "conv1_w": 0.1 * jax.random.normal(ks[1], (C, C, 3, 3), jnp.float32),
        "conv2_w": 0.1 * jax.random.normal(ks[2], (C, C, 3, 3), jnp.float32),
        "bn1_gamma": 1.0 + 0.1 * jax.random.normal(ks[3], (C,), jnp.float32),
        "bn1_beta": 0.1 * jax.random.normal(ks[4], (C,), jnp.float32),
        "bn1_mean": 0.1 * jax.random.normal(ks[5], (C,), jnp.float32),
        "bn1_var": 0.5 + jnp.abs(jax.random.normal(ks[6], (C,), jnp.float32)),
        "bn2_gamma": 1.0 + 0.1 * jax.random.normal(ks[7], (C,), jnp.float32),
        "bn2_beta": 0.1 * jax.random.normal(ks[8], (C,), jnp.float32),
        "bn2_mean": 0.1 * jax.random.normal(ks[9], (C,), jnp.float32),
        "bn2_var": 0.5 + jnp.abs(jax.random.normal(ks[10], (C,), jnp.float32)) * 0.7,
    }

    out = jax.block_until_ready(basic_block_forward(x, params, row_tile=8))
    ref = jax.block_until_ready(_reference_forward(x, params))
    assert out.shape == (N, C, H, W)
    # bf16 MXU operands -> looser tolerance than the pure-f32 version.
    assert jnp.allclose(out, ref, rtol=3e-2, atol=3e-2)
    print("KERNEL_OK")
</pallas_src>

<mosaic_0001>
module attributes {stable_mosaic.version = 11 : i64} {
  func.func @_basic_block_kernel(%arg0: i32, %arg1: i32, %arg2: memref<1x20x32x128xbf16, #tpu.memory_space<vmem>>, %arg3: memref<3x384x128xbf16, #tpu.memory_space<vmem>>, %arg4: memref<3x384x128xbf16, #tpu.memory_space<vmem>>, %arg5: memref<2x128xf32, #tpu.memory_space<vmem>>, %arg6: memref<1x8x16x128xf32, #tpu.memory_space<vmem>>, %arg7: memref<10x24x128xbf16, #tpu.memory_space<vmem>>) attributes {dimension_semantics = [#tpu.dimension_semantics<parallel>, #tpu.dimension_semantics<parallel>], iteration_bounds = array<i64: 2, 2>, scalar_prefetch = 0 : i64, scratch_operands = 1 : i64, tpu.core_type = #tpu.core_type<tc>, window_params = [{transform_indices = @transform_0, window_bounds = array<i64: 1, 20, 32, 128>}, {pipeline_mode = #tpu.pipeline_mode<synchronous>, transform_indices = @transform_1, window_bounds = array<i64: 3, 384, 128>}, {pipeline_mode = #tpu.pipeline_mode<synchronous>, transform_indices = @transform_2, window_bounds = array<i64: 3, 384, 128>}, {pipeline_mode = #tpu.pipeline_mode<synchronous>, transform_indices = @transform_3, window_bounds = array<i64: 2, 128>}, {transform_indices = @transform_4, window_bounds = array<i64: 1, 8, 16, 128>}]} {
    %c8_i32 = arith.constant 8 : i32
    %0 = arith.muli %arg1, %c8_i32 : i32
    %1 = tpu.assume_multiple %0, 8 : i32
    %c0_i32 = arith.constant 0 : i32
    %2 = arith.addi %1, %c0_i32 : i32
    %c0 = arith.constant 0 : index
    %3 = arith.index_cast %2 : i32 to index
    %c0_0 = arith.constant 0 : index
    %c0_1 = arith.constant 0 : index
    %4 = vector.load %arg2[%c0, %3, %c0_0, %c0_1] : memref<1x20x32x128xbf16, #tpu.memory_space<vmem>>, vector<1x10x24x128xbf16>
    %5 = vector.shape_cast %4 : vector<1x10x24x128xbf16> to vector<10x24x128xbf16>
    %c0_i32_2 = arith.constant 0 : i32
    %6 = arith.addi %1, %c0_i32_2 : i32
    %c0_3 = arith.constant 0 : index
    %7 = arith.index_cast %6 : i32 to index
    %c1 = arith.constant 1 : index
    %c0_4 = arith.constant 0 : index
    %8 = vector.load %arg2[%c0_3, %7, %c1, %c0_4] : memref<1x20x32x128xbf16, #tpu.memory_space<vmem>>, vector<1x10x24x128xbf16>
    %9 = vector.shape_cast %8 : vector<1x10x24x128xbf16> to vector<10x24x128xbf16>
    %c0_i32_5 = arith.constant 0 : i32
    %10 = arith.addi %1, %c0_i32_5 : i32
    %c0_6 = arith.constant 0 : index
    %11 = arith.index_cast %10 : i32 to index
    %c2 = arith.constant 2 : index
    %c0_7 = arith.constant 0 : index
    %12 = vector.load %arg2[%c0_6, %11, %c2, %c0_7] : memref<1x20x32x128xbf16, #tpu.memory_space<vmem>>, vector<1x10x24x128xbf16>
    %13 = vector.shape_cast %12 : vector<1x10x24x128xbf16> to vector<10x24x128xbf16>
    %14 = tpu.concatenate %5, %9, %13 in 2 : vector<10x24x128xbf16>, vector<10x24x128xbf16>, vector<10x24x128xbf16> -> vector<10x24x384xbf16>
    %15 = vector.shape_cast %14 : vector<10x24x384xbf16> to vector<240x384xbf16>
    %c0_8 = arith.constant 0 : index
    %c0_9 = arith.constant 0 : index
    %c0_10 = arith.constant 0 : index
    %16 = vector.load %arg3[%c0_8, %c0_9, %c0_10] : memref<3x384x128xbf16, #tpu.memory_space<vmem>>, vector<1x384x128xbf16>
    %17 = vector.shape_cast %16 : vector<1x384x128xbf16> to vector<384x128xbf16>
    %cst = arith.constant dense<0.000000e+00> : vector<240x128xf32>
    %18 = tpu.matmul %15, %17, %cst {dimension_numbers = #tpu.dot_dimension_numbers<[1], [0], [0], [1], [0, 0, 1, 1], [], []>} : vector<240x384xbf16>, vector<384x128xbf16>, vector<240x128xf32> -> vector<240x128xf32>
    %c1_i32 = arith.constant 1 : i32
    %19 = arith.addi %1, %c1_i32 : i32
    %c0_11 = arith.constant 0 : index
    %20 = arith.index_cast %19 : i32 to index
    %c0_12 = arith.constant 0 : index
    %c0_13 = arith.constant 0 : index
    %21 = vector.load %arg2[%c0_11, %20, %c0_12, %c0_13] : memref<1x20x32x128xbf16, #tpu.memory_space<vmem>>, vector<1x10x24x128xbf16>
    %22 = vector.shape_cast %21 : vector<1x10x24x128xbf16> to vector<10x24x128xbf16>
    %c1_i32_14 = arith.constant 1 : i32
    %23 = arith.addi %1, %c1_i32_14 : i32
    %c0_15 = arith.constant 0 : index
    %24 = arith.index_cast %23 : i32 to index
    %c1_16 = arith.constant 1 : index
    %c0_17 = arith.constant 0 : index
    %25 = vector.load %arg2[%c0_15, %24, %c1_16, %c0_17] : memref<1x20x32x128xbf16, #tpu.memory_space<vmem>>, vector<1x10x24x128xbf16>
    %26 = vector.shape_cast %25 : vector<1x10x24x128xbf16> to vector<10x24x128xbf16>
    %c1_i32_18 = arith.constant 1 : i32
    %27 = arith.addi %1, %c1_i32_18 : i32
    %c0_19 = arith.constant 0 : index
    %28 = arith.index_cast %27 : i32 to index
    %c2_20 = arith.constant 2 : index
    %c0_21 = arith.constant 0 : index
    %29 = vector.load %arg2[%c0_19, %28, %c2_20, %c0_21] : memref<1x20x32x128xbf16, #tpu.memory_space<vmem>>, vector<1x10x24x128xbf16>
    %30 = vector.shape_cast %29 : vector<1x10x24x128xbf16> to vector<10x24x128xbf16>
    %31 = tpu.concatenate %22, %26, %30 in 2 : vector<10x24x128xbf16>, vector<10x24x128xbf16>, vector<10x24x128xbf16> -> vector<10x24x384xbf16>
    %32 = vector.shape_cast %31 : vector<10x24x384xbf16> to vector<240x384xbf16>
    %c1_22 = arith.constant 1 : index
    %c0_23 = arith.constant 0 : index
    %c0_24 = arith.constant 0 : index
    %33 = vector.load %arg3[%c1_22, %c0_23, %c0_24] : memref<3x384x128xbf16, #tpu.memory_space<vmem>>, vector<1x384x128xbf16>
    %34 = vector.shape_cast %33 : vector<1x384x128xbf16> to vector<384x128xbf16>
    %cst_25 = arith.constant dense<0.000000e+00> : vector<240x128xf32>
    %35 = tpu.matmul %32, %34, %cst_25 {dimension_numbers = #tpu.dot_dimension_numbers<[1], [0], [0], [1], [0, 0, 1, 1], [], []>} : vector<240x384xbf16>, vector<384x128xbf16>, vector<240x128xf32> -> vector<240x128xf32>
    %36 = arith.addf %18, %35 : vector<240x128xf32>
    %c2_i32 = arith.constant 2 : i32
    %37 = arith.addi %1, %c2_i32 : i32
    %c0_26 = arith.constant 0 : index
    %38 = arith.index_cast %37 : i32 to index
    %c0_27 = arith.constant 0 : index
    %c0_28 = arith.constant 0 : index
    %39 = vector.load %arg2[%c0_26, %38, %c0_27, %c0_28] : memref<1x20x32x128xbf16, #tpu.memory_space<vmem>>, vector<1x10x24x128xbf16>
    %40 = vector.shape_cast %39 : vector<1x10x24x128xbf16> to vector<10x24x128xbf16>
    %c2_i32_29 = arith.constant 2 : i32
    %41 = arith.addi %1, %c2_i32_29 : i32
    %c0_30 = arith.constant 0 : index
    %42 = arith.index_cast %41 : i32 to index
    %c1_31 = arith.constant 1 : index
    %c0_32 = arith.constant 0 : index
    %43 = vector.load %arg2[%c0_30, %42, %c1_31, %c0_32] : memref<1x20x32x128xbf16, #tpu.memory_space<vmem>>, vector<1x10x24x128xbf16>
    %44 = vector.shape_cast %43 : vector<1x10x24x128xbf16> to vector<10x24x128xbf16>
    %c2_i32_33 = arith.constant 2 : i32
    %45 = arith.addi %1, %c2_i32_33 : i32
    %c0_34 = arith.constant 0 : index
    %46 = arith.index_cast %45 : i32 to index
    %c2_35 = arith.constant 2 : index
    %c0_36 = arith.constant 0 : index
    %47 = vector.load %arg2[%c0_34, %46, %c2_35, %c0_36] : memref<1x20x32x128xbf16, #tpu.memory_space<vmem>>, vector<1x10x24x128xbf16>
    %48 = vector.shape_cast %47 : vector<1x10x24x128xbf16> to vector<10x24x128xbf16>
    %49 = tpu.concatenate %40, %44, %48 in 2 : vector<10x24x128xbf16>, vector<10x24x128xbf16>, vector<10x24x128xbf16> -> vector<10x24x384xbf16>
    %50 = vector.shape_cast %49 : vector<10x24x384xbf16> to vector<240x384xbf16>
    %c2_37 = arith.constant 2 : index
    %c0_38 = arith.constant 0 : index
    %c0_39 = arith.constant 0 : index
    %51 = vector.load %arg3[%c2_37, %c0_38, %c0_39] : memref<3x384x128xbf16, #tpu.memory_space<vmem>>, vector<1x384x128xbf16>
    %52 = vector.shape_cast %51 : vector<1x384x128xbf16> to vector<384x128xbf16>
    %cst_40 = arith.constant dense<0.000000e+00> : vector<240x128xf32>
    %53 = tpu.matmul %50, %52, %cst_40 {dimension_numbers = #tpu.dot_dimension_numbers<[1], [0], [0], [1], [0, 0, 1, 1], [], []>} : vector<240x384xbf16>, vector<384x128xbf16>, vector<240x128xf32> -> vector<240x128xf32>
    %54 = arith.addf %36, %53 : vector<240x128xf32>
    %55 = vector.shape_cast %54 : vector<240x128xf32> to vector<10x24x128xf32>
    %56 = tpu.iota {dimensions = array<i32: 0>} : vector<10x24x128xi32>
    %57 = vector.broadcast %1 : i32 to vector<10x24x128xi32>
    %58 = arith.addi %57, %56 : vector<10x24x128xi32>
    %59 = tpu.iota {dimensions = array<i32: 1>} : vector<10x24x128xi32>
    %c1_i32_41 = arith.constant 1 : i32
    %60 = vector.broadcast %c1_i32_41 : i32 to vector<10x24x128xi32>
    %61 = arith.cmpi sge, %58, %60 : vector<10x24x128xi32>
    %c16_i32 = arith.constant 16 : i32
    %62 = vector.broadcast %c16_i32 : i32 to vector<10x24x128xi32>
    %63 = arith.cmpi sle, %58, %62 : vector<10x24x128xi32>
    %64 = arith.andi %61, %63 : vector<10x24x128xi1>
    %c1_i32_42 = arith.constant 1 : i32
    %65 = vector.broadcast %c1_i32_42 : i32 to vector<10x24x128xi32>
    %66 = arith.cmpi sge, %59, %65 : vector<10x24x128xi32>
    %67 = arith.andi %64, %66 : vector<10x24x128xi1>
    %c16_i32_43 = arith.constant 16 : i32
    %68 = vector.broadcast %c16_i32_43 : i32 to vector<10x24x128xi32>
    %69 = arith.cmpi sle, %59, %68 : vector<10x24x128xi32>
    %70 = arith.andi %67, %69 : vector<10x24x128xi1>
    %c0_44 = arith.constant 0 : index
    %c0_45 = arith.constant 0 : index
    %71 = vector.load %arg5[%c0_44, %c0_45] : memref<2x128xf32, #tpu.memory_space<vmem>>, vector<1x128xf32>
    %72 = vector.shape_cast %71 : vector<1x128xf32> to vector<1x1x128xf32>
    %73 = vector.broadcast %72 : vector<1x1x128xf32> to vector<10x24x128xf32>
    %74 = arith.addf %55, %73 : vector<10x24x128xf32>
    %cst_46 = arith.constant 0.000000e+00 : f32
    %75 = vector.broadcast %cst_46 : f32 to vector<10x24x128xf32>
    %76 = arith.maximumf %74, %75 : vector<10x24x128xf32>
    %cst_47 = arith.constant 0.000000e+00 : f32
    %77 = vector.broadcast %cst_47 : f32 to vector<10x24x128xf32>
    %78 = arith.select %70, %76, %77 : vector<10x24x128xi1>, vector<10x24x128xf32>
    %79 = arith.truncf %78 : vector<10x24x128xf32> to vector<10x24x128xbf16>
    %c0_48 = arith.constant 0 : index
    %c0_49 = arith.constant 0 : index
    %c0_50 = arith.constant 0 : index
    %80 = vector.load %arg7[%c0_48, %c0_49, %c0_50] : memref<10x24x128xbf16, #tpu.memory_space<vmem>>, vector<10x24x128xbf16>
    tpu.vector_store %arg7[%c0_48, %c0_49, %c0_50], %79 {strides = array<i32>} : memref<10x24x128xbf16, #tpu.memory_space<vmem>>, vector<10x24x128xbf16>,
    %c0_51 = arith.constant 0 : index
    %c0_52 = arith.constant 0 : index
    %c0_53 = arith.constant 0 : index
    %81 = vector.load %arg7[%c0_51, %c0_52, %c0_53] : memref<10x24x128xbf16, #tpu.memory_space<vmem>>, vector<8x16x128xbf16>
    %c0_54 = arith.constant 0 : index
    %c1_55 = arith.constant 1 : index
    %c0_56 = arith.constant 0 : index
    %82 = vector.load %arg7[%c0_54, %c1_55, %c0_56] : memref<10x24x128xbf16, #tpu.memory_space<vmem>>, vector<8x16x128xbf16>
    %c0_57 = arith.constant 0 : index
    %c2_58 = arith.constant 2 : index
    %c0_59 = arith.constant 0 : index
    %83 = vector.load %arg7[%c0_57, %c2_58, %c0_59] : memref<10x24x128xbf16, #tpu.memory_space<vmem>>, vector<8x16x128xbf16>
    %84 = tpu.concatenate %81, %82, %83 in 2 : vector<8x16x128xbf16>, vector<8x16x128xbf16>, vector<8x16x128xbf16> -> vector<8x16x384xbf16>
    %85 = vector.shape_cast %84 : vector<8x16x384xbf16> to vector<128x384xbf16>
    %c0_60 = arith.constant 0 : index
    %c0_61 = arith.constant 0 : index
    %c0_62 = arith.constant 0 : index
    %86 = vector.load %arg4[%c0_60, %c0_61, %c0_62] : memref<3x384x128xbf16, #tpu.memory_space<vmem>>, vector<1x384x128xbf16>
    %87 = vector.shape_cast %86 : vector<1x384x128xbf16> to vector<384x128xbf16>
    %cst_63 = arith.constant dense<0.000000e+00> : vector<128x128xf32>
    %88 = tpu.matmul %85, %87, %cst_63 {dimension_numbers = #tpu.dot_dimension_numbers<[1], [0], [0], [1], [0, 0, 1, 1], [], []>} : vector<128x384xbf16>, vector<384x128xbf16>, vector<128x128xf32> -> vector<128x128xf32>
    %c1_64 = arith.constant 1 : index
    %c0_65 = arith.constant 0 : index
    %c0_66 = arith.constant 0 : index
    %89 = vector.load %arg7[%c1_64, %c0_65, %c0_66] : memref<10x24x128xbf16, #tpu.memory_space<vmem>>, vector<8x16x128xbf16>
    %c1_67 = arith.constant 1 : index
    %c1_68 = arith.constant 1 : index
    %c0_69 = arith.constant 0 : index
    %90 = vector.load %arg7[%c1_67, %c1_68, %c0_69] : memref<10x24x128xbf16, #tpu.memory_space<vmem>>, vector<8x16x128xbf16>
    %c1_70 = arith.constant 1 : index
    %c2_71 = arith.constant 2 : index
    %c0_72 = arith.constant 0 : index
    %91 = vector.load %arg7[%c1_70, %c2_71, %c0_72] : memref<10x24x128xbf16, #tpu.memory_space<vmem>>, vector<8x16x128xbf16>
    %92 = tpu.concatenate %89, %90, %91 in 2 : vector<8x16x128xbf16>, vector<8x16x128xbf16>, vector<8x16x128xbf16> -> vector<8x16x384xbf16>
    %93 = vector.shape_cast %92 : vector<8x16x384xbf16> to vector<128x384xbf16>
    %c1_73 = arith.constant 1 : index
    %c0_74 = arith.constant 0 : index
    %c0_75 = arith.constant 0 : index
    %94 = vector.load %arg4[%c1_73, %c0_74, %c0_75] : memref<3x384x128xbf16, #tpu.memory_space<vmem>>, vector<1x384x128xbf16>
    %95 = vector.shape_cast %94 : vector<1x384x128xbf16> to vector<384x128xbf16>
    %cst_76 = arith.constant dense<0.000000e+00> : vector<128x128xf32>
    %96 = tpu.matmul %93, %95, %cst_76 {dimension_numbers = #tpu.dot_dimension_numbers<[1], [0], [0], [1], [0, 0, 1, 1], [], []>} : vector<128x384xbf16>, vector<384x128xbf16>, vector<128x128xf32> -> vector<128x128xf32>
    %97 = arith.addf %88, %96 : vector<128x128xf32>
    %c2_77 = arith.constant 2 : index
    %c0_78 = arith.constant 0 : index
    %c0_79 = arith.constant 0 : index
    %98 = vector.load %arg7[%c2_77, %c0_78, %c0_79] : memref<10x24x128xbf16, #tpu.memory_space<vmem>>, vector<8x16x128xbf16>
    %c2_80 = arith.constant 2 : index
    %c1_81 = arith.constant 1 : index
    %c0_82 = arith.constant 0 : index
    %99 = vector.load %arg7[%c2_80, %c1_81, %c0_82] : memref<10x24x128xbf16, #tpu.memory_space<vmem>>, vector<8x16x128xbf16>
    %c2_83 = arith.constant 2 : index
    %c2_84 = arith.constant 2 : index
    %c0_85 = arith.constant 0 : index
    %100 = vector.load %arg7[%c2_83, %c2_84, %c0_85] : memref<10x24x128xbf16, #tpu.memory_space<vmem>>, vector<8x16x128xbf16>
    %101 = tpu.concatenate %98, %99, %100 in 2 : vector<8x16x128xbf16>, vector<8x16x128xbf16>, vector<8x16x128xbf16> -> vector<8x16x384xbf16>
    %102 = vector.shape_cast %101 : vector<8x16x384xbf16> to vector<128x384xbf16>
    %c2_86 = arith.constant 2 : index
    %c0_87 = arith.constant 0 : index
    %c0_88 = arith.constant 0 : index
    %103 = vector.load %arg4[%c2_86, %c0_87, %c0_88] : memref<3x384x128xbf16, #tpu.memory_space<vmem>>, vector<1x384x128xbf16>
    %104 = vector.shape_cast %103 : vector<1x384x128xbf16> to vector<384x128xbf16>
    %cst_89 = arith.constant dense<0.000000e+00> : vector<128x128xf32>
    %105 = tpu.matmul %102, %104, %cst_89 {dimension_numbers = #tpu.dot_dimension_numbers<[1], [0], [0], [1], [0, 0, 1, 1], [], []>} : vector<128x384xbf16>, vector<384x128xbf16>, vector<128x128xf32> -> vector<128x128xf32>
    %106 = arith.addf %97, %105 : vector<128x128xf32>
    %107 = vector.shape_cast %106 : vector<128x128xf32> to vector<8x16x128xf32>
    %c1_90 = arith.constant 1 : index
    %c0_91 = arith.constant 0 : index
    %108 = vector.load %arg5[%c1_90, %c0_91] : memref<2x128xf32, #tpu.memory_space<vmem>>, vector<1x128xf32>
    %109 = vector.shape_cast %108 : vector<1x128xf32> to vector<1x1x128xf32>
    %c2_i32_92 = arith.constant 2 : i32
    %110 = arith.addi %1, %c2_i32_92 : i32
    %c0_93 = arith.constant 0 : index
    %111 = arith.index_cast %110 : i32 to index
    %c2_94 = arith.constant 2 : index
    %c0_95 = arith.constant 0 : index
    %112 = vector.load %arg2[%c0_93, %111, %c2_94, %c0_95] : memref<1x20x32x128xbf16, #tpu.memory_space<vmem>>, vector<1x8x16x128xbf16>
    %113 = vector.shape_cast %112 : vector<1x8x16x128xbf16> to vector<8x16x128xbf16>
    %114 = arith.extf %113 : vector<8x16x128xbf16> to vector<8x16x128xf32>
    %115 = vector.broadcast %109 : vector<1x1x128xf32> to vector<8x16x128xf32>
    %116 = arith.addf %107, %115 : vector<8x16x128xf32>
    %117 = arith.addf %116, %114 : vector<8x16x128xf32>
    %cst_96 = arith.constant 0.000000e+00 : f32
    %118 = vector.broadcast %cst_96 : f32 to vector<8x16x128xf32>
    %119 = arith.maximumf %117, %118 : vector<8x16x128xf32>
    %120 = vector.shape_cast %119 : vector<8x16x128xf32> to vector<1x8x16x128xf32>
    %c0_97 = arith.constant 0 : index
    %c0_98 = arith.constant 0 : index
    %c0_99 = arith.constant 0 : index
    %c0_100 = arith.constant 0 : index
    %121 = vector.load %arg6[%c0_97, %c0_98, %c0_99, %c0_100] : memref<1x8x16x128xf32, #tpu.memory_space<vmem>>, vector<1x8x16x128xf32>
    tpu.vector_store %arg6[%c0_97, %c0_98, %c0_99, %c0_100], %120 {strides = array<i32>} : memref<1x8x16x128xf32, #tpu.memory_space<vmem>>, vector<1x8x16x128xf32>,
    return
  }
  func.func @transform_0(%arg0: i32, %arg1: i32) -> (i32, i32, i32, i32) {
    %c0_i32 = arith.constant 0 : i32
    %c0_i32_0 = arith.constant 0 : i32
    %c0_i32_1 = arith.constant 0 : i32
    %c0_i32_2 = arith.constant 0 : i32
    return %arg0, %c0_i32, %c0_i32_0, %c0_i32_1 : i32, i32, i32, i32
  }
  func.func @transform_1(%arg0: i32, %arg1: i32) -> (i32, i32, i32) {
    %c0_i32 = arith.constant 0 : i32
    %c0_i32_0 = arith.constant 0 : i32
    %c0_i32_1 = arith.constant 0 : i32
    %c0_i32_2 = arith.constant 0 : i32
    return %c0_i32, %c0_i32_0, %c0_i32_1 : i32, i32, i32
  }
  func.func @transform_2(%arg0: i32, %arg1: i32) -> (i32, i32, i32) {
    %c0_i32 = arith.constant 0 : i32
    %c0_i32_0 = arith.constant 0 : i32
    %c0_i32_1 = arith.constant 0 : i32
    %c0_i32_2 = arith.constant 0 : i32
    return %c0_i32, %c0_i32_0, %c0_i32_1 : i32, i32, i32
  }
  func.func @transform_3(%arg0: i32, %arg1: i32) -> (i32, i32) {
    %c0_i32 = arith.constant 0 : i32
    %c0_i32_0 = arith.constant 0 : i32
    %c0_i32_1 = arith.constant 0 : i32
    return %c0_i32, %c0_i32_0 : i32, i32
  }
  func.func @transform_4(%arg0: i32, %arg1: i32) -> (i32, i32, i32, i32) {
    %c0_i32 = arith.constant 0 : i32
    %c0_i32_0 = arith.constant 0 : i32
    %c0_i32_1 = arith.constant 0 : i32
    return %arg0, %arg1, %c0_i32, %c0_i32_0 : i32, i32, i32, i32
  }
}

</mosaic_0001>

<llo_original>
// kernel: tpu_custom_call.1
$region0: #{tpu_custom_call.1}
  #allocation0 [shape = 'u32[]', space=smem, size = 0x4, offset = 0x4, fixed_abs, tag = 'smem constant byte address 0x4 - core index']
  #allocation1 [shape = 'u32[72,128]{1,0:T(1,128)}', space=vmem, size = 0x9000, scoped, tag = 'internal scratch']
  #allocation2 [shape = 'bf16[10,24,128]{2,1,0:T(8,128)(2,1)}', space=vmem, size = 0xf000, scoped, tag = 'scratch operand']
  %s0 = inlined_call_operand.hbm [shape: bf16[2,20,32,128], index: 0, kind: input, shape index: {}]
  %s1 = inlined_call_operand.hbm [shape: bf16[3,384,128], index: 1, kind: input, shape index: {}]
  %s2 = inlined_call_operand.hbm [shape: bf16[3,384,128], index: 2, kind: input, shape index: {}]
  %s3 = inlined_call_operand.vmem [shape: f32[2,128], index: 3, kind: input, shape index: {}]
  %s4 = inlined_call_operand.hbm [shape: f32[2,16,16,128], index: 4, kind: output, shape index: {}]
  %s5 = sld [smem:[#allocation0]]
  $region61: #{tpu_custom_call.1} parent=0
    _
  %s7 = ssub.s32 1, %s5
  %s8 = scalar_select 0, %s7, %s5
  $region1: #{tpu_custom_call.1} parent=0
    #allocation3 [shape = 'u8[327680]{0}', space=vmem, size = 0x50000, scoped, tag = 'input window, operand 0']
    #allocation4 [shape = 's32[2]{0}', space=sflag, size = 0x8, scoped, tag = 'scoped memory for tpu_custom_call.1']
    #allocation5 [shape = 's32[2]{0}', space=sflag, size = 0x8, scoped, tag = 'scoped memory for tpu_custom_call.1']
    #allocation6 [shape = 'u8[294912]{0}', space=vmem, size = 0x48000, scoped, tag = 'input window, operand 1, single buffered']
    #allocation7 [shape = 's32[1]{0}', space=sflag, size = 0x4, scoped, tag = 'scoped memory for tpu_custom_call.1']
    #allocation8 [shape = 'u8[294912]{0}', space=vmem, size = 0x48000, scoped, tag = 'input window, operand 2, single buffered']
    #allocation9 [shape = 'u8[131072]{0}', space=vmem, size = 0x20000, scoped, tag = 'output window, operand 0']
    %9 = vsyncpa [#allocation4], 0
    %s10 = scalar_lea.sflag [#allocation4], 1
    %11 = vsyncpa %s10, 0
    %12 = vsyncpa [#allocation7], 0
    %13 = vsyncpa [#allocation5], 0
    %s14 = scalar_lea.sflag [#allocation5], 1
    %15 = vsyncpa %s14, 0
    loop: start=0, step=1, limit=6
    $region2: #{tpu_custom_call.1} parent=1 // loop_pre_header
      _
    $region3: #{tpu_custom_call.1} parent=1 // loop_header
      %s17 = sphi 0, %s21
      %p18 = scmp.ge.s32.totalorder %s17, 6
      %s24 = sphi 0, %s36
      %s25 = sphi 0, %s32
      %s26 = sphi 0, %s24
      %s27 = sphi 0, %s25
      %s28 = sphi 0, %s26
      %s29 = sphi 0, %s27
      %s39 = sphi 0, %s41
      %s42 = sphi 0, %s39
      %s43 = sphi 0, %s42
      %s59 = sphi 0, %s43
      %s63 = sphi 0, %s63
      %s65 = sphi 0, %s63
      %s66 = sphi 0, %s65
      %s80 = sphi 0, %s66
      %s84 = sphi 0, %s84
      %s86 = sphi 0, %s84
      %s87 = sphi 0, %s86
      %s101 = sphi 0, %s87
      %s105 = sphi 0, %s105
      %s107 = sphi 0, %s105
      %s108 = sphi 0, %s107
      %s122 = sphi 0, %s108
      %s130 = sphi 0, %s132
      %s133 = sphi 0, %s130
      %s134 = sphi 0, %s133
      %s150 = sphi 0, %s134
    $region4: #{tpu_custom_call.1} parent=1 // loop_header_branch
      %20 = sbr.rel (%p18) target = $region8
    $region5: #{tpu_custom_call.1} parent=1 // loop_body
      %s22 = ssub.s32 %s17, 1
      %s23 = ssub.s32 %s17, 2
      %s30 = sadd.s32 1, %s25
      %p31 = scmp.ge.s32.totalorder %s30, 2
      %s32 = scalar_select %p31, 0, %s30
      %s33 = sadd.s32 1, %s24
      %s34 = scalar_select %p31, %s33, %s24
      %p35 = scmp.ge.s32.totalorder %s34, 2
      %s36 = scalar_select %p35, 0, %s34
      %s37 = ssub.s32 %s24, %s36
      %p38 = scmp.eq.s32.totalorder %s37, 0
      %s40 = sadd.s32 %s39, 1
      %s41 = scalar_select %p38, %s39, %s40
      %p44 = pneg %p38
      %p45 = scmp.eq.s32.totalorder %s17, 3
      %p46 = por %p44, %p45
      %p47 = scmp.ne.s32.totalorder %s39, %s42
      %p48 = scmp.eq.s32.totalorder %s17, 0
      %p49 = por %p47, %p48
      %p50 = scmp.ne.s32.totalorder %s39, %s42
      %p51 = scmp.eq.s32.totalorder %s22, 3
      %p52 = por %p50, %p51
      %p53 = scmp.ne.s32.totalorder %s42, %s43
      %p54 = scmp.eq.s32.totalorder %s22, 0
      %p55 = por %p53, %p54
      %p56 = scmp.ne.s32.totalorder %s42, %s43
      %p57 = scmp.eq.s32.totalorder %s23, 3
      %p58 = por %p56, %p57
      %p60 = scmp.ne.s32.totalorder %s43, %s59
      %p61 = scmp.eq.s32.totalorder %s23, 0
      %p62 = por %p60, %p61
      %s64 = sadd.s32 %s63, 1
      %p67 = scmp.eq.s32.totalorder %s17, 3
      %p68 = scmp.ne.s32.totalorder %s63, %s65
      %p69 = scmp.eq.s32.totalorder %s17, 0
      %p70 = por %p68, %p69
      %p71 = scmp.ne.s32.totalorder %s63, %s65
      %p72 = scmp.eq.s32.totalorder %s22, 3
      %p73 = por %p71, %p72
      %p74 = scmp.ne.s32.totalorder %s65, %s66
      %p75 = scmp.eq.s32.totalorder %s22, 0
      %p76 = por %p74, %p75
      %p77 = scmp.ne.s32.totalorder %s65, %s66
      %p78 = scmp.eq.s32.totalorder %s23, 3
      %p79 = por %p77, %p78
      %p81 = scmp.ne.s32.totalorder %s66, %s80
      %p82 = scmp.eq.s32.totalorder %s23, 0
      %p83 = por %p81, %p82
      %s85 = sadd.s32 %s84, 1
      %p88 = scmp.eq.s32.totalorder %s17, 3
      %p89 = scmp.ne.s32.totalorder %s84, %s86
      %p90 = scmp.eq.s32.totalorder %s17, 0
      %p91 = por %p89, %p90
      %p92 = scmp.ne.s32.totalorder %s84, %s86
      %p93 = scmp.eq.s32.totalorder %s22, 3
      %p94 = por %p92, %p93
      %p95 = scmp.ne.s32.totalorder %s86, %s87
      %p96 = scmp.eq.s32.totalorder %s22, 0
      %p97 = por %p95, %p96
      %p98 = scmp.ne.s32.totalorder %s86, %s87
      %p99 = scmp.eq.s32.totalorder %s23, 3
      %p100 = por %p98, %p99
      %p102 = scmp.ne.s32.totalorder %s87, %s101
      %p103 = scmp.eq.s32.totalorder %s23, 0
      %p104 = por %p102, %p103
      %s106 = sadd.s32 %s105, 1
      %p109 = scmp.eq.s32.totalorder %s17, 3
      %p110 = scmp.ne.s32.totalorder %s105, %s107
      %p111 = scmp.eq.s32.totalorder %s17, 0
      %p112 = por %p110, %p111
      %p113 = scmp.ne.s32.totalorder %s105, %s107
      %p114 = scmp.eq.s32.totalorder %s22, 3
      %p115 = por %p113, %p114
      %p116 = scmp.ne.s32.totalorder %s107, %s108
      %p117 = scmp.eq.s32.totalorder %s22, 0
      %p118 = por %p116, %p117
      %p119 = scmp.ne.s32.totalorder %s107, %s108
      %p120 = scmp.eq.s32.totalorder %s23, 3
      %p121 = por %p119, %p120
      %p123 = scmp.ne.s32.totalorder %s108, %s122
      %p124 = scmp.eq.s32.totalorder %s23, 0
      %p125 = por %p123, %p124
      %s126 = ssub.s32 %s24, %s36
      %s127 = ssub.s32 %s25, %s32
      %s128 = sor.u32 %s126, %s127
      %p129 = scmp.eq.s32.totalorder %s128, 0
      %s131 = sadd.s32 %s130, 1
      %s132 = scalar_select %p129, %s130, %s131
      %p135 = pneg %p129
      %p136 = scmp.eq.s32.totalorder %s17, 3
      %p137 = por %p135, %p136
      %p138 = scmp.ne.s32.totalorder %s130, %s133
      %p139 = scmp.eq.s32.totalorder %s17, 0
      %p140 = por %p138, %p139
      %p141 = scmp.ne.s32.totalorder %s130, %s133
      %p142 = scmp.eq.s32.totalorder %s22, 3
      %p143 = por %p141, %p142
      %p144 = scmp.ne.s32.totalorder %s133, %s134
      %p145 = scmp.eq.s32.totalorder %s22, 0
      %p146 = por %p144, %p145
      %p147 = scmp.ne.s32.totalorder %s133, %s134
      %p148 = scmp.eq.s32.totalorder %s23, 3
      %p149 = por %p147, %p148
      %p151 = scmp.ne.s32.totalorder %s134, %s150
      %p152 = scmp.eq.s32.totalorder %s23, 0
      %p153 = por %p151, %p152
      %p154 = scmp.le.s32.totalorder 1, %s17
      %p155 = scmp.lt.s32.totalorder %s17, 5
      %p156 = pnand %p154, %p155
      %p157 = pneg %p156
      // Predicated region
      $region9: #{tpu_custom_call.1} parent=5 // pred_check
        _
      $region10: #{tpu_custom_call.1} parent=5 // pred_check_branch
        %159 = sbr.rel (%p156) target = $region12
      $region11: #{tpu_custom_call.1} parent=5 // pred_region
        %s160 = ssub.s32 %s17, 1
        // Predicated region
        $region13: #{tpu_custom_call.1} parent=11 // pred_check
          %p161 = pneg %p76
        $region14: #{tpu_custom_call.1} parent=11 // pred_check_branch
          %163 = sbr.rel (%p161) target = $region16
        $region15: #{tpu_custom_call.1} parent=11 // pred_region
          %165 = vsyncadd [#allocation7], 0
          %s166 = sshll.u32 %s1, 4
          %s167 = int_to_ptr.hbm [resolvable:$true] %s166
          %s168 = sshll.u32 [#allocation6], 4
          %s169 = int_to_ptr.vmem [resolvable:$true] %s168
          %174 = dma.hbm_to_vmem [thread:$0]  %s167, 9216, %s169, [#allocation7], 64, 64, 4
        $region16: #{tpu_custom_call.1} parent=11 // pred_fallthru
          _
        // Predicated region
        $region17: #{tpu_custom_call.1} parent=11 // pred_check
          %p175 = pneg %p97
        $region18: #{tpu_custom_call.1} parent=11 // pred_check_branch
          %177 = sbr.rel (%p175) target = $region20
        $region19: #{tpu_custom_call.1} parent=11 // pred_region
          %179 = vsyncadd [#allocation7], 0
          %s180 = sshll.u32 %s2, 4
          %s181 = int_to_ptr.hbm [resolvable:$true] %s180
          %s182 = sshll.u32 [#allocation8], 4
          %s183 = int_to_ptr.vmem [resolvable:$true] %s182
          %188 = dma.hbm_to_vmem [thread:$0]  %s181, 9216, %s183, [#allocation7], 64, 64, 4
        $region20: #{tpu_custom_call.1} parent=11 // pred_fallthru
          _
        // Predicated region
        $region21: #{tpu_custom_call.1} parent=11 // pred_check
          %p189 = pneg %p118
        $region22: #{tpu_custom_call.1} parent=11 // pred_check_branch
          %191 = sbr.rel (%p189) target = $region24
        $region23: #{tpu_custom_call.1} parent=11 // pred_region
          _
        $region24: #{tpu_custom_call.1} parent=11 // pred_fallthru
          _
      $region12: #{tpu_custom_call.1} parent=5 // pred_fallthru
        _
      %p192 = scmp.lt.s32.totalorder %s17, 4
      // Predicated region
      $region25: #{tpu_custom_call.1} parent=5 // pred_check
        %p193 = pneg %p192
      $region26: #{tpu_custom_call.1} parent=5 // pred_check_branch
        %195 = sbr.rel (%p193) target = $region28
      $region27: #{tpu_custom_call.1} parent=5 // pred_region
        // Predicated region
        $region29: #{tpu_custom_call.1} parent=27 // pred_check
          %p196 = pneg %p49
        $region30: #{tpu_custom_call.1} parent=27 // pred_check_branch
          %198 = sbr.rel (%p196) target = $region32
        $region31: #{tpu_custom_call.1} parent=27 // pred_region
          %s199 = sand.u32 %s39, 1
          %s200 = scalar_lea.sflag [#allocation4], %s199
          %s201 = sand.u32 %s39, 1
          %s202 = smul.addr %s201, 320
          %s203 = scalar_lea.vmem [#allocation3], %s202
          %205 = vsyncadd %s200, 0
          %s206 = smul.addr %s24, 80
          %s207 = smul.addr %s206, 4
          %s208 = scalar_lea.hbm %s0, %s207
          %s209 = sshll.u32 %s208, 4
          %s210 = int_to_ptr.hbm [resolvable:$true] %s209
          %s211 = sshll.u32 %s203, 4
          %s212 = int_to_ptr.vmem [resolvable:$true] %s211
          %217 = dma.hbm_to_vmem [thread:$0]  %s210, 5120, %s212, %s200, 64, 64, 4
        $region32: #{tpu_custom_call.1} parent=27 // pred_fallthru
          _
      $region28: #{tpu_custom_call.1} parent=5 // pred_fallthru
        _
      %p218 = scmp.le.s32.totalorder 1, %s17
      %p219 = scmp.lt.s32.totalorder %s17, 5
      %p220 = pnand %p218, %p219
      %p221 = pneg %p220
      // Predicated region
      $region33: #{tpu_custom_call.1} parent=5 // pred_check
        _
      $region34: #{tpu_custom_call.1} parent=5 // pred_check_branch
        %223 = sbr.rel (%p220) target = $region36
      $region35: #{tpu_custom_call.1} parent=5 // pred_region
        %s224 = ssub.s32 %s17, 1
        %s225 = sand.u32 %s42, 1
        %s226 = scalar_lea.sflag [#allocation4], %s225
        %s227 = sand.u32 %s42, 1
        %s228 = smul.addr %s227, 320
        %s229 = scalar_lea.vmem [#allocation3], %s228
        // Predicated region
        $region37: #{tpu_custom_call.1} parent=35 // pred_check
          %p230 = pneg %p55
        $region38: #{tpu_custom_call.1} parent=35 // pred_check_branch
          %232 = sbr.rel (%p230) target = $region40
        $region39: #{tpu_custom_call.1} parent=35 // pred_region
          %234 = dma.done %s226, 5120
        $region40: #{tpu_custom_call.1} parent=35 // pred_fallthru
          _
        // Predicated region
        $region41: #{tpu_custom_call.1} parent=35 // pred_check
          %p235 = pneg %p76
        $region42: #{tpu_custom_call.1} parent=35 // pred_check_branch
          %237 = sbr.rel (%p235) target = $region44
        $region43: #{tpu_custom_call.1} parent=35 // pred_region
          %239 = dma.done [#allocation7], 9216
        $region44: #{tpu_custom_call.1} parent=35 // pred_fallthru
          _
        // Predicated region
        $region45: #{tpu_custom_call.1} parent=35 // pred_check
          %p240 = pneg %p97
        $region46: #{tpu_custom_call.1} parent=35 // pred_check_branch
          %242 = sbr.rel (%p240) target = $region48
        $region47: #{tpu_custom_call.1} parent=35 // pred_region
          %244 = dma.done [#allocation7], 9216
        $region48: #{tpu_custom_call.1} parent=35 // pred_fallthru
          _
        %s245 = sand.u32 %s42, 1
        %s246 = scalar_lea.sflag [#allocation4], %s245
        %s247 = sand.u32 %s42, 1
        %s248 = smul.addr %s247, 320
        %s249 = scalar_lea.vmem [#allocation3], %s248
        %p250 = pneg %p55
        %p251 = pneg %p52
        %p252 = pneg %p76
        %p253 = pneg %p73
        %p254 = pneg %p97
        %p255 = pneg %p94
        %p256 = pneg %p118
        %p257 = pneg %p115
        %p258 = pneg %p146
        %p259 = pneg %p143
        %s260 = sand.u32 %s133, 1
        %s261 = scalar_lea.sflag [#allocation5], %s260
        %s262 = sand.u32 %s133, 1
        %s263 = smul.addr %s262, 128
        %s264 = scalar_lea.vmem [#allocation9], %s263
        %s265 = smul.u32 8, %s27
        %s266 = smul.u32 %s27, 8
        %s267 = smul.u32 %s266, 4
        %s268 = smul.addr %s267, 4
        %s269 = scalar_lea.vmem %s229, %s268 [#allocation3]
        %v270 = vld [vmem:[%s269] sm:$0xf]
        %v271 = vld [vmem:[%s269 + $0x4] sm:$0xf]
        %v272 = vld [vmem:[%s269 + $0x8] sm:$0xf]
        %v273 = vld [vmem:[%s269 + $0x10] sm:$0xf]
        %v274 = vld [vmem:[%s269 + $0x14] sm:$0xf]
        %v275 = vld [vmem:[%s269 + $0x18] sm:$0xf]
        %v276 = vld [vmem:[%s269 + $0x20] sm:$0xf]
        %v277 = vld [vmem:[%s269 + $0x24] sm:$0xf]
        %v278 = vld [vmem:[%s269 + $0x28] sm:$0xf]
        %v279 = vld [vmem:[%s269 + $0x30] sm:$0xf]
        %v280 = vld [vmem:[%s269 + $0x34] sm:$0xf]
        %v281 = vld [vmem:[%s269 + $0x38] sm:$0xf]
        %v282 = vld [vmem:[%s269 + $0x40] sm:$0xf]
        %v283 = vld [vmem:[%s269 + $0x44] sm:$0xf]
        %v284 = vld [vmem:[%s269 + $0x48] sm:$0xf]
        %v285 = vld [vmem:[%s269 + $0x50] sm:$0xf]
        %v286 = vld [vmem:[%s269 + $0x54] sm:$0xf]
        %v287 = vld [vmem:[%s269 + $0x58] sm:$0xf]
        %v288 = vld [vmem:[%s269 + $0x60] sm:$0xf]
        %v289 = vld [vmem:[%s269 + $0x64] sm:$0xf]
        %v290 = vld [vmem:[%s269 + $0x68] sm:$0xf]
        %v291 = vld [vmem:[%s269 + $0x70] sm:$0xf]
        %v292 = vld [vmem:[%s269 + $0x74] sm:$0xf]
        %v293 = vld [vmem:[%s269 + $0x78] sm:$0xf]
        %v294 = vld [vmem:[%s269 + $0x80] sm:$0xf]
        %v295 = vld [vmem:[%s269 + $0x84] sm:$0xf]
        %v296 = vld [vmem:[%s269 + $0x88] sm:$0xf]
        %v297 = vld [vmem:[%s269 + $0x90] sm:$0xf]
        %v298 = vld [vmem:[%s269 + $0x94] sm:$0xf]
        %v299 = vld [vmem:[%s269 + $0x98] sm:$0xf]
        %v300 = vld [vmem:[%s269 + $0xc] sm:$0x1]
        %v301 = vld [vmem:[%s269 + $0x1c] sm:$0x1]
        %v302 = vld [vmem:[%s269 + $0x2c] sm:$0x1]
        %v303 = vld [vmem:[%s269 + $0x3c] sm:$0x1]
        %v304 = vld [vmem:[%s269 + $0x4c] sm:$0x1]
        %v305 = vld [vmem:[%s269 + $0x5c] sm:$0x1]
        %v306 = vld [vmem:[%s269 + $0x6c] sm:$0x1]
        %v307 = vld [vmem:[%s269 + $0x7c] sm:$0x1]
        %v308 = vld [vmem:[%s269 + $0x8c] sm:$0x1]
        %v309 = vld [vmem:[%s269 + $0x9c] sm:$0x1]
        %v310 = vld [vmem:[%s269] sm:$0xe]
        %v311 = vld [vmem:[%s269 + $0x10] sm:$0xe]
        %v312 = vld [vmem:[%s269 + $0x20] sm:$0xe]
        %v313 = vld [vmem:[%s269 + $0x30] sm:$0xe]
        %v314 = vld [vmem:[%s269 + $0x40] sm:$0xe]
        %v315 = vld [vmem:[%s269 + $0x50] sm:$0xe]
        %v316 = vld [vmem:[%s269 + $0x60] sm:$0xe]
        %v317 = vld [vmem:[%s269 + $0x70] sm:$0xe]
        %v318 = vld [vmem:[%s269 + $0x80] sm:$0xe]
        %v319 = vld [vmem:[%s269 + $0x90] sm:$0xe]
        %v350 = vunpack.c.l.b16 %v270
        %v351 = vunpack.c.l.b16 %v271
        %v352 = vunpack.c.l.b16 %v272
        %v353 = vunpack.c.l.b16 %v273
        %v354 = vunpack.c.l.b16 %v274
        %v355 = vunpack.c.l.b16 %v275
        %v356 = vunpack.c.l.b16 %v276
        %v357 = vunpack.c.l.b16 %v277
        %v358 = vunpack.c.l.b16 %v278
        %v359 = vunpack.c.l.b16 %v279
        %v360 = vunpack.c.l.b16 %v280
        %v361 = vunpack.c.l.b16 %v281
        %v362 = vunpack.c.l.b16 %v282
        %v363 = vunpack.c.l.b16 %v283
        %v364 = vunpack.c.l.b16 %v284
        %v365 = vunpack.c.l.b16 %v285
        %v366 = vunpack.c.l.b16 %v286
        %v367 = vunpack.c.l.b16 %v287
        %v368 = vunpack.c.l.b16 %v288
        %v369 = vunpack.c.l.b16 %v289
        %v370 = vunpack.c.l.b16 %v290
        %v371 = vunpack.c.l.b16 %v291
        %v372 = vunpack.c.l.b16 %v292
        %v373 = vunpack.c.l.b16 %v293
        %v374 = vunpack.c.l.b16 %v294
        %v375 = vunpack.c.l.b16 %v295
        %v376 = vunpack.c.l.b16 %v296
        %v377 = vunpack.c.l.b16 %v297
        %v378 = vunpack.c.l.b16 %v298
        %v379 = vunpack.c.l.b16 %v299
        %v390 = vunpack.c.l.b16 %v300
        %v391 = vunpack.c.l.b16 %v301
        %v392 = vunpack.c.l.b16 %v302
        %v393 = vunpack.c.l.b16 %v303
        %v394 = vunpack.c.l.b16 %v304
        %v395 = vunpack.c.l.b16 %v305
        %v396 = vunpack.c.l.b16 %v306
        %v397 = vunpack.c.l.b16 %v307
        %v398 = vunpack.c.l.b16 %v308
        %v399 = vunpack.c.l.b16 %v309
        %v400 = vpack.c.b16 %v351, %v350
        %v401 = vpack.c.b16 %v390, %v352
        %v402 = vpack.c.b16 %v354, %v353
        %v403 = vpack.c.b16 %v391, %v355
        %v404 = vpack.c.b16 %v357, %v356
        %v405 = vpack.c.b16 %v392, %v358
        %v406 = vpack.c.b16 %v360, %v359
        %v407 = vpack.c.b16 %v393, %v361
        %v408 = vpack.c.b16 %v363, %v362
        %v409 = vpack.c.b16 %v394, %v364
        %v410 = vpack.c.b16 %v366, %v365
        %v411 = vpack.c.b16 %v395, %v367
        %v412 = vpack.c.b16 %v369, %v368
        %v413 = vpack.c.b16 %v396, %v370
        %v414 = vpack.c.b16 %v372, %v371
        %v415 = vpack.c.b16 %v397, %v373
        %v416 = vpack.c.b16 %v375, %v374
        %v417 = vpack.c.b16 %v398, %v376
        %v418 = vpack.c.b16 %v378, %v377
        %v419 = vpack.c.b16 %v399, %v379
        %vm420 = vsmask.f32 7424
        %v422 = vshrl.u32 %v400, 16
        %v424 = vshll.u32 %v400, 16
        %v426 = vrot.slane %v424, 1
        %v427 = vor.u32 %v422, %v426
        %v429 = vshll.u32 %v401, 16
        %v431 = vrot.slane %v429, 1
        %v432 = vsel %vm420, %v427, %v431
        %v433 = vshrl.u32 %v401, 16
        %v435 = vor.u32 %v433, %v431
        %v437 = vshrl.u32 %v402, 16
        %v439 = vshll.u32 %v402, 16
        %v441 = vrot.slane %v439, 1
        %v442 = vor.u32 %v437, %v441
        %v444 = vshll.u32 %v403, 16
        %v446 = vrot.slane %v444, 1
        %v447 = vsel %vm420, %v442, %v446
        %v448 = vshrl.u32 %v403, 16
        %v450 = vor.u32 %v448, %v446
        %v452 = vshrl.u32 %v404, 16
        %v454 = vshll.u32 %v404, 16
        %v456 = vrot.slane %v454, 1
        %v457 = vor.u32 %v452, %v456
        %v459 = vshll.u32 %v405, 16
        %v461 = vrot.slane %v459, 1
        %v462 = vsel %vm420, %v457, %v461
        %v463 = vshrl.u32 %v405, 16
        %v465 = vor.u32 %v463, %v461
        %v467 = vshrl.u32 %v406, 16
        %v469 = vshll.u32 %v406, 16
        %v471 = vrot.slane %v469, 1
        %v472 = vor.u32 %v467, %v471
        %v474 = vshll.u32 %v407, 16
        %v476 = vrot.slane %v474, 1
        %v477 = vsel %vm420, %v472, %v476
        %v478 = vshrl.u32 %v407, 16
        %v480 = vor.u32 %v478, %v476
        %v482 = vshrl.u32 %v408, 16
        %v484 = vshll.u32 %v408, 16
        %v486 = vrot.slane %v484, 1
        %v487 = vor.u32 %v482, %v486
        %v489 = vshll.u32 %v409, 16
        %v491 = vrot.slane %v489, 1
        %v492 = vsel %vm420, %v487, %v491
        %v493 = vshrl.u32 %v409, 16
        %v495 = vor.u32 %v493, %v491
        %v497 = vshrl.u32 %v410, 16
        %v499 = vshll.u32 %v410, 16
        %v501 = vrot.slane %v499, 1
        %v502 = vor.u32 %v497, %v501
        %v504 = vshll.u32 %v411, 16
        %v506 = vrot.slane %v504, 1
        %v507 = vsel %vm420, %v502, %v506
        %v508 = vshrl.u32 %v411, 16
        %v510 = vor.u32 %v508, %v506
        %v512 = vshrl.u32 %v412, 16
        %v514 = vshll.u32 %v412, 16
        %v516 = vrot.slane %v514, 1
        %v517 = vor.u32 %v512, %v516
        %v519 = vshll.u32 %v413, 16
        %v521 = vrot.slane %v519, 1
        %v522 = vsel %vm420, %v517, %v521
        %v523 = vshrl.u32 %v413, 16
        %v525 = vor.u32 %v523, %v521
        %v527 = vshrl.u32 %v414, 16
        %v529 = vshll.u32 %v414, 16
        %v531 = vrot.slane %v529, 1
        %v532 = vor.u32 %v527, %v531
        %v534 = vshll.u32 %v415, 16
        %v536 = vrot.slane %v534, 1
        %v537 = vsel %vm420, %v532, %v536
        %v538 = vshrl.u32 %v415, 16
        %v540 = vor.u32 %v538, %v536
        %v542 = vshrl.u32 %v416, 16
        %v544 = vshll.u32 %v416, 16
        %v546 = vrot.slane %v544, 1
        %v547 = vor.u32 %v542, %v546
        %v549 = vshll.u32 %v417, 16
        %v551 = vrot.slane %v549, 1
        %v552 = vsel %vm420, %v547, %v551
        %v553 = vshrl.u32 %v417, 16
        %v555 = vor.u32 %v553, %v551
        %v557 = vshrl.u32 %v418, 16
        %v559 = vshll.u32 %v418, 16
        %v561 = vrot.slane %v559, 1
        %v562 = vor.u32 %v557, %v561
        %v564 = vshll.u32 %v419, 16
        %v566 = vrot.slane %v564, 1
        %v567 = vsel %vm420, %v562, %v566
        %v568 = vshrl.u32 %v419, 16
        %v570 = vor.u32 %v568, %v566
        %v581 = vunpack.c.l.b16 %v310
        %v582 = vunpack.c.l.b16 %v311
        %v583 = vunpack.c.l.b16 %v312
        %v584 = vunpack.c.l.b16 %v313
        %v585 = vunpack.c.l.b16 %v314
        %v586 = vunpack.c.l.b16 %v315
        %v587 = vunpack.c.l.b16 %v316
        %v588 = vunpack.c.l.b16 %v317
        %v589 = vunpack.c.l.b16 %v318
        %v590 = vunpack.c.l.b16 %v319
        %v591 = vpack.c.b16 %v351, %v581
        %v592 = vpack.c.b16 %v354, %v582
        %v593 = vpack.c.b16 %v357, %v583
        %v594 = vpack.c.b16 %v360, %v584
        %v595 = vpack.c.b16 %v363, %v585
        %v596 = vpack.c.b16 %v366, %v586
        %v597 = vpack.c.b16 %v369, %v587
        %v598 = vpack.c.b16 %v372, %v588
        %v599 = vpack.c.b16 %v375, %v589
        %v600 = vpack.c.b16 %v378, %v590
        %vm601 = vcmask 1046528
        %v602 = vrot.slane %v591, 1
        %v603 = vrot.slane %v401, 1
        %v604 = vsel %vm601, %v602, %v603
        %v605 = vrot.slane %v592, 1
        %v606 = vrot.slane %v403, 1
        %v607 = vsel %vm601, %v605, %v606
        %v608 = vrot.slane %v593, 1
        %v609 = vrot.slane %v405, 1
        %v610 = vsel %vm601, %v608, %v609
        %v611 = vrot.slane %v594, 1
        %v612 = vrot.slane %v407, 1
        %v613 = vsel %vm601, %v611, %v612
        %v614 = vrot.slane %v595, 1
        %v615 = vrot.slane %v409, 1
        %v616 = vsel %vm601, %v614, %v615
        %v617 = vrot.slane %v596, 1
        %v618 = vrot.slane %v411, 1
        %v619 = vsel %vm601, %v617, %v618
        %v620 = vrot.slane %v597, 1
        %v621 = vrot.slane %v413, 1
        %v622 = vsel %vm601, %v620, %v621
        %v623 = vrot.slane %v598, 1
        %v624 = vrot.slane %v415, 1
        %v625 = vsel %vm601, %v623, %v624
        %v626 = vrot.slane %v599, 1
        %v627 = vrot.slane %v417, 1
        %v628 = vsel %vm601, %v626, %v627
        %v629 = vrot.slane %v600, 1
        %v630 = vrot.slane %v419, 1
        %v631 = vsel %vm601, %v629, %v630
        %v632 = vunpack.c.l.b16 %v432
        %v633 = vunpack.c.l.b16 %v604
        %v634 = vunpack.c.h.b16 %v432
        %v635 = vunpack.c.h.b16 %v604
        %v636 = vunpack.c.l.b16 %v435
        %v637 = vunpack.c.l.b16 %v603
        %v638 = vunpack.c.l.b16 %v447
        %v639 = vunpack.c.l.b16 %v607
        %v640 = vunpack.c.h.b16 %v447
        %v641 = vunpack.c.h.b16 %v607
        %v642 = vunpack.c.l.b16 %v450
        %v643 = vunpack.c.l.b16 %v606
        %v644 = vunpack.c.l.b16 %v462
        %v645 = vunpack.c.l.b16 %v610
        %v646 = vunpack.c.h.b16 %v462
        %v647 = vunpack.c.h.b16 %v610
        %v648 = vunpack.c.l.b16 %v465
        %v649 = vunpack.c.l.b16 %v609
        %v650 = vunpack.c.l.b16 %v477
        %v651 = vunpack.c.l.b16 %v613
        %v652 = vunpack.c.h.b16 %v477
        %v653 = vunpack.c.h.b16 %v613
        %v654 = vunpack.c.l.b16 %v480
        %v655 = vunpack.c.l.b16 %v612
        %v656 = vunpack.c.l.b16 %v492
        %v657 = vunpack.c.l.b16 %v616
        %v658 = vunpack.c.h.b16 %v492
        %v659 = vunpack.c.h.b16 %v616
        %v660 = vunpack.c.l.b16 %v495
        %v661 = vunpack.c.l.b16 %v615
        %v662 = vunpack.c.l.b16 %v507
        %v663 = vunpack.c.l.b16 %v619
        %v664 = vunpack.c.h.b16 %v507
        %v665 = vunpack.c.h.b16 %v619
        %v666 = vunpack.c.l.b16 %v510
        %v667 = vunpack.c.l.b16 %v618
        %v668 = vunpack.c.l.b16 %v522
        %v669 = vunpack.c.l.b16 %v622
        %v670 = vunpack.c.h.b16 %v522
        %v671 = vunpack.c.h.b16 %v622
        %v672 = vunpack.c.l.b16 %v525
        %v673 = vunpack.c.l.b16 %v621
        %v674 = vunpack.c.l.b16 %v537
        %v675 = vunpack.c.l.b16 %v625
        %v676 = vunpack.c.h.b16 %v537
        %v677 = vunpack.c.h.b16 %v625
        %v678 = vunpack.c.l.b16 %v540
        %v679 = vunpack.c.l.b16 %v624
        %v680 = vunpack.c.l.b16 %v552
        %v681 = vunpack.c.l.b16 %v628
        %v682 = vunpack.c.h.b16 %v552
        %v683 = vunpack.c.h.b16 %v628
        %v684 = vunpack.c.l.b16 %v555
        %v685 = vunpack.c.l.b16 %v627
        %v686 = vunpack.c.l.b16 %v567
        %v687 = vunpack.c.l.b16 %v631
        %v688 = vunpack.c.h.b16 %v567
        %v689 = vunpack.c.h.b16 %v631
        %v690 = vunpack.c.l.b16 %v570
        %v691 = vunpack.c.l.b16 %v630
        %v692 = vld [vmem:[#allocation6] sm:$0xf]
        %v693 = vld [vmem:[#allocation6 + $0x4] sm:$0xf]
        %v694 = vld [vmem:[#allocation6 + $0x8] sm:$0xf]
        %v695 = vld [vmem:[#allocation6 + $0xc] sm:$0xf]
        %v696 = vld [vmem:[#allocation6 + $0x10] sm:$0xf]
        %v697 = vld [vmem:[#allocation6 + $0x14] sm:$0xf]
        %v698 = vld [vmem:[#allocation6 + $0x18] sm:$0xf]
        %v699 = vld [vmem:[#allocation6 + $0x1c] sm:$0xf]
        %v700 = vld [vmem:[#allocation6 + $0x20] sm:$0xf]
        %v701 = vld [vmem:[#allocation6 + $0x24] sm:$0xf]
        %v702 = vld [vmem:[#allocation6 + $0x28] sm:$0xf]
        %v703 = vld [vmem:[#allocation6 + $0x2c] sm:$0xf]
        %v704 = vld [vmem:[#allocation6 + $0x30] sm:$0xf]
        %v705 = vld [vmem:[#allocation6 + $0x34] sm:$0xf]
        %v706 = vld [vmem:[#allocation6 + $0x38] sm:$0xf]
        %v707 = vld [vmem:[#allocation6 + $0x3c] sm:$0xf]
        %v708 = vld [vmem:[#allocation6 + $0x40] sm:$0xf]
        %v709 = vld [vmem:[#allocation6 + $0x44] sm:$0xf]
        %v710 = vld [vmem:[#allocation6 + $0x48] sm:$0xf]
        %v711 = vld [vmem:[#allocation6 + $0x4c] sm:$0xf]
        %v712 = vld [vmem:[#allocation6 + $0x50] sm:$0xf]
        %v713 = vld [vmem:[#allocation6 + $0x54] sm:$0xf]
        %v714 = vld [vmem:[#allocation6 + $0x58] sm:$0xf]
        %v715 = vld [vmem:[#allocation6 + $0x5c] sm:$0xf]
        %v716 = vld [vmem:[#allocation6 + $0x60] sm:$0xf]
        %v717 = vld [vmem:[#allocation6 + $0x64] sm:$0xf]
        %v718 = vld [vmem:[#allocation6 + $0x68] sm:$0xf]
        %v719 = vld [vmem:[#allocation6 + $0x6c] sm:$0xf]
        %v720 = vld [vmem:[#allocation6 + $0x70] sm:$0xf]
        %v721 = vld [vmem:[#allocation6 + $0x74] sm:$0xf]
        %v722 = vld [vmem:[#allocation6 + $0x78] sm:$0xf]
        %v723 = vld [vmem:[#allocation6 + $0x7c] sm:$0xf]
        %v724 = vld [vmem:[#allocation6 + $0x80] sm:$0xf]
        %v725 = vld [vmem:[#allocation6 + $0x84] sm:$0xf]
        %v726 = vld [vmem:[#allocation6 + $0x88] sm:$0xf]
        %v727 = vld [vmem:[#allocation6 + $0x8c] sm:$0xf]
        %v728 = vld [vmem:[#allocation6 + $0x90] sm:$0xf]
        %v729 = vld [vmem:[#allocation6 + $0x94] sm:$0xf]
        %v730 = vld [vmem:[#allocation6 + $0x98] sm:$0xf]
        %v731 = vld [vmem:[#allocation6 + $0x9c] sm:$0xf]
        %v732 = vld [vmem:[#allocation6 + $0xa0] sm:$0xf]
        %v733 = vld [vmem:[#allocation6 + $0xa4] sm:$0xf]
        %v734 = vld [vmem:[#allocation6 + $0xa8] sm:$0xf]
        %v735 = vld [vmem:[#allocation6 + $0xac] sm:$0xf]
        %v736 = vld [vmem:[#allocation6 + $0xb0] sm:$0xf]
        %v737 = vld [vmem:[#allocation6 + $0xb4] sm:$0xf]
        %v738 = vld [vmem:[#allocation6 + $0xb8] sm:$0xf]
        %v739 = vld [vmem:[#allocation6 + $0xbc] sm:$0xf]
        %s740 = sadd.s32 %s266, 1
        %s741 = smul.u32 %s740, 4
        %s742 = smul.addr %s741, 4
        %s743 = scalar_lea.vmem %s229, %s742 [#allocation3]
        %v744 = vld [vmem:[%s743] sm:$0xf]
        %v745 = vld [vmem:[%s743 + $0x4] sm:$0xf]
        %v746 = vld [vmem:[%s743 + $0x8] sm:$0xf]
        %v747 = vld [vmem:[%s743 + $0x10] sm:$0xf]
        %v748 = vld [vmem:[%s743 + $0x14] sm:$0xf]
        %v749 = vld [vmem:[%s743 + $0x18] sm:$0xf]
        %v750 = vld [vmem:[%s743 + $0x20] sm:$0xf]
        %v751 = vld [vmem:[%s743 + $0x24] sm:$0xf]
        %v752 = vld [vmem:[%s743 + $0x28] sm:$0xf]
        %v753 = vld [vmem:[%s743 + $0x30] sm:$0xf]
        %v754 = vld [vmem:[%s743 + $0x34] sm:$0xf]
        %v755 = vld [vmem:[%s743 + $0x38] sm:$0xf]
        %v756 = vld [vmem:[%s743 + $0x40] sm:$0xf]
        %v757 = vld [vmem:[%s743 + $0x44] sm:$0xf]
        %v758 = vld [vmem:[%s743 + $0x48] sm:$0xf]
        %v759 = vld [vmem:[%s743 + $0x50] sm:$0xf]
        %v760 = vld [vmem:[%s743 + $0x54] sm:$0xf]
        %v761 = vld [vmem:[%s743 + $0x58] sm:$0xf]
        %v762 = vld [vmem:[%s743 + $0x60] sm:$0xf]
        %v763 = vld [vmem:[%s743 + $0x64] sm:$0xf]
        %v764 = vld [vmem:[%s743 + $0x68] sm:$0xf]
        %v765 = vld [vmem:[%s743 + $0x70] sm:$0xf]
        %v766 = vld [vmem:[%s743 + $0x74] sm:$0xf]
        %v767 = vld [vmem:[%s743 + $0x78] sm:$0xf]
        %v768 = vld [vmem:[%s743 + $0x80] sm:$0xf]
        %v769 = vld [vmem:[%s743 + $0x84] sm:$0xf]
        %v770 = vld [vmem:[%s743 + $0x88] sm:$0xf]
        %v771 = vld [vmem:[%s743 + $0x90] sm:$0xf]
        %v772 = vld [vmem:[%s743 + $0x94] sm:$0xf]
        %v773 = vld [vmem:[%s743 + $0x98] sm:$0xf]
        %v774 = vld [vmem:[%s743 + $0xc] sm:$0x1]
        %v775 = vld [vmem:[%s743 + $0x1c] sm:$0x1]
        %v776 = vld [vmem:[%s743 + $0x2c] sm:$0x1]
        %v777 = vld [vmem:[%s743 + $0x3c] sm:$0x1]
        %v778 = vld [vmem:[%s743 + $0x4c] sm:$0x1]
        %v779 = vld [vmem:[%s743 + $0x5c] sm:$0x1]
        %v780 = vld [vmem:[%s743 + $0x6c] sm:$0x1]
        %v781 = vld [vmem:[%s743 + $0x7c] sm:$0x1]
        %v782 = vld [vmem:[%s743 + $0x8c] sm:$0x1]
        %v783 = vld [vmem:[%s743 + $0x9c] sm:$0x1]
        %v784 = vld [vmem:[%s743] sm:$0xe]
        %v785 = vld [vmem:[%s743 + $0x10] sm:$0xe]
        %v786 = vld [vmem:[%s743 + $0x20] sm:$0xe]
        %v787 = vld [vmem:[%s743 + $0x30] sm:$0xe]
        %v788 = vld [vmem:[%s743 + $0x40] sm:$0xe]
        %v789 = vld [vmem:[%s743 + $0x50] sm:$0xe]
        %v790 = vld [vmem:[%s743 + $0x60] sm:$0xe]
        %v791 = vld [vmem:[%s743 + $0x70] sm:$0xe]
        %v792 = vld [vmem:[%s743 + $0x80] sm:$0xe]
        %v793 = vld [vmem:[%s743 + $0x90] sm:$0xe]
        %v824 = vunpack.c.l.b16 %v744
        %v825 = vunpack.c.l.b16 %v745
        %v826 = vunpack.c.l.b16 %v746
        %v827 = vunpack.c.l.b16 %v747
        %v828 = vunpack.c.l.b16 %v748
        %v829 = vunpack.c.l.b16 %v749
        %v830 = vunpack.c.l.b16 %v750
        %v831 = vunpack.c.l.b16 %v751
        %v832 = vunpack.c.l.b16 %v752
        %v833 = vunpack.c.l.b16 %v753
        %v834 = vunpack.c.l.b16 %v754
        %v835 = vunpack.c.l.b16 %v755
        %v836 = vunpack.c.l.b16 %v756
        %v837 = vunpack.c.l.b16 %v757
        %v838 = vunpack.c.l.b16 %v758
        %v839 = vunpack.c.l.b16 %v759
        %v840 = vunpack.c.l.b16 %v760
        %v841 = vunpack.c.l.b16 %v761
        %v842 = vunpack.c.l.b16 %v762
        %v843 = vunpack.c.l.b16 %v763
        %v844 = vunpack.c.l.b16 %v764
        %v845 = vunpack.c.l.b16 %v765
        %v846 = vunpack.c.l.b16 %v766
        %v847 = vunpack.c.l.b16 %v767
        %v848 = vunpack.c.l.b16 %v768
        %v849 = vunpack.c.l.b16 %v769
        %v850 = vunpack.c.l.b16 %v770
        %v851 = vunpack.c.l.b16 %v771
        %v852 = vunpack.c.l.b16 %v772
        %v853 = vunpack.c.l.b16 %v773
        %v864 = vunpack.c.l.b16 %v774
        %v865 = vunpack.c.l.b16 %v775
        %v866 = vunpack.c.l.b16 %v776
        %v867 = vunpack.c.l.b16 %v777
        %v868 = vunpack.c.l.b16 %v778
        %v869 = vunpack.c.l.b16 %v779
        %v870 = vunpack.c.l.b16 %v780
        %v871 = vunpack.c.l.b16 %v781
        %v872 = vunpack.c.l.b16 %v782
        %v873 = vunpack.c.l.b16 %v783
        %v874 = vpack.c.b16 %v825, %v824
        %v875 = vpack.c.b16 %v864, %v826
        %v876 = vpack.c.b16 %v828, %v827
        %v877 = vpack.c.b16 %v865, %v829
        %v878 = vpack.c.b16 %v831, %v830
        %v879 = vpack.c.b16 %v866, %v832
        %v880 = vpack.c.b16 %v834, %v833
        %v881 = vpack.c.b16 %v867, %v835
        %v882 = vpack.c.b16 %v837, %v836
        %v883 = vpack.c.b16 %v868, %v838
        %v884 = vpack.c.b16 %v840, %v839
        %v885 = vpack.c.b16 %v869, %v841
        %v886 = vpack.c.b16 %v843, %v842
        %v887 = vpack.c.b16 %v870, %v844
        %v888 = vpack.c.b16 %v846, %v845
        %v889 = vpack.c.b16 %v871, %v847
        %v890 = vpack.c.b16 %v849, %v848
        %v891 = vpack.c.b16 %v872, %v850
        %v892 = vpack.c.b16 %v852, %v851
        %v893 = vpack.c.b16 %v873, %v853
        %v895 = vshrl.u32 %v874, 16
        %v897 = vshll.u32 %v874, 16
        %v899 = vrot.slane %v897, 1
        %v900 = vor.u32 %v895, %v899
        %v902 = vshll.u32 %v875, 16
        %v904 = vrot.slane %v902, 1
        %v905 = vsel %vm420, %v900, %v904
        %v906 = vshrl.u32 %v875, 16
        %v908 = vor.u32 %v906, %v904
        %v910 = vshrl.u32 %v876, 16
        %v912 = vshll.u32 %v876, 16
        %v914 = vrot.slane %v912, 1
        %v915 = vor.u32 %v910, %v914
        %v917 = vshll.u32 %v877, 16
        %v919 = vrot.slane %v917, 1
        %v920 = vsel %vm420, %v915, %v919
        %v921 = vshrl.u32 %v877, 16
        %v923 = vor.u32 %v921, %v919
        %v925 = vshrl.u32 %v878, 16
        %v927 = vshll.u32 %v878, 16
        %v929 = vrot.slane %v927, 1
        %v930 = vor.u32 %v925, %v929
        %v932 = vshll.u32 %v879, 16
        %v934 = vrot.slane %v932, 1
        %v935 = vsel %vm420, %v930, %v934
        %v936 = vshrl.u32 %v879, 16
        %v938 = vor.u32 %v936, %v934
        %v940 = vshrl.u32 %v880, 16
        %v942 = vshll.u32 %v880, 16
        %v944 = vrot.slane %v942, 1
        %v945 = vor.u32 %v940, %v944
        %v947 = vshll.u32 %v881, 16
        %v949 = vrot.slane %v947, 1
        %v950 = vsel %vm420, %v945, %v949
        %v951 = vshrl.u32 %v881, 16
        %v953 = vor.u32 %v951, %v949
        %v955 = vshrl.u32 %v882, 16
        %v957 = vshll.u32 %v882, 16
        %v959 = vrot.slane %v957, 1
        %v960 = vor.u32 %v955, %v959
        %v962 = vshll.u32 %v883, 16
        %v964 = vrot.slane %v962, 1
        %v965 = vsel %vm420, %v960, %v964
        %v966 = vshrl.u32 %v883, 16
        %v968 = vor.u32 %v966, %v964
        %v970 = vshrl.u32 %v884, 16
        %v972 = vshll.u32 %v884, 16
        %v974 = vrot.slane %v972, 1
        %v975 = vor.u32 %v970, %v974
        %v977 = vshll.u32 %v885, 16
        %v979 = vrot.slane %v977, 1
        %v980 = vsel %vm420, %v975, %v979
        %v981 = vshrl.u32 %v885, 16
        %v983 = vor.u32 %v981, %v979
        %v985 = vshrl.u32 %v886, 16
        %v987 = vshll.u32 %v886, 16
        %v989 = vrot.slane %v987, 1
        %v990 = vor.u32 %v985, %v989
        %v992 = vshll.u32 %v887, 16
        %v994 = vrot.slane %v992, 1
        %v995 = vsel %vm420, %v990, %v994
        %v996 = vshrl.u32 %v887, 16
        %v998 = vor.u32 %v996, %v994
        %v1000 = vshrl.u32 %v888, 16
        %v1002 = vshll.u32 %v888, 16
        %v1004 = vrot.slane %v1002, 1
        %v1005 = vor.u32 %v1000, %v1004
        %v1007 = vshll.u32 %v889, 16
        %v1009 = vrot.slane %v1007, 1
        %v1010 = vsel %vm420, %v1005, %v1009
        %v1011 = vshrl.u32 %v889, 16
        %v1013 = vor.u32 %v1011, %v1009
        %v1015 = vshrl.u32 %v890, 16
        %v1017 = vshll.u32 %v890, 16
        %v1019 = vrot.slane %v1017, 1
        %v1020 = vor.u32 %v1015, %v1019
        %v1022 = vshll.u32 %v891, 16
        %v1024 = vrot.slane %v1022, 1
        %v1025 = vsel %vm420, %v1020, %v1024
        %v1026 = vshrl.u32 %v891, 16
        %v1028 = vor.u32 %v1026, %v1024
        %v1030 = vshrl.u32 %v892, 16
        %v1032 = vshll.u32 %v892, 16
        %v1034 = vrot.slane %v1032, 1
        %v1035 = vor.u32 %v1030, %v1034
        %v1037 = vshll.u32 %v893, 16
        %v1039 = vrot.slane %v1037, 1
        %v1040 = vsel %vm420, %v1035, %v1039
        %v1041 = vshrl.u32 %v893, 16
        %v1043 = vor.u32 %v1041, %v1039
        %v1054 = vunpack.c.l.b16 %v784
        %v1055 = vunpack.c.l.b16 %v785
        %v1056 = vunpack.c.l.b16 %v786
        %v1057 = vunpack.c.l.b16 %v787
        %v1058 = vunpack.c.l.b16 %v788
        %v1059 = vunpack.c.l.b16 %v789
        %v1060 = vunpack.c.l.b16 %v790
        %v1061 = vunpack.c.l.b16 %v791
        %v1062 = vunpack.c.l.b16 %v792
        %v1063 = vunpack.c.l.b16 %v793
        %v1064 = vpack.c.b16 %v825, %v1054
        %v1065 = vpack.c.b16 %v828, %v1055
        %v1066 = vpack.c.b16 %v831, %v1056
        %v1067 = vpack.c.b16 %v834, %v1057
        %v1068 = vpack.c.b16 %v837, %v1058
        %v1069 = vpack.c.b16 %v840, %v1059
        %v1070 = vpack.c.b16 %v843, %v1060
        %v1071 = vpack.c.b16 %v846, %v1061
        %v1072 = vpack.c.b16 %v849, %v1062
        %v1073 = vpack.c.b16 %v852, %v1063
        %v1074 = vrot.slane %v1064, 1
        %v1075 = vrot.slane %v875, 1
        %v1076 = vsel %vm601, %v1074, %v1075
        %v1077 = vrot.slane %v1065, 1
        %v1078 = vrot.slane %v877, 1
        %v1079 = vsel %vm601, %v1077, %v1078
        %v1080 = vrot.slane %v1066, 1
        %v1081 = vrot.slane %v879, 1
        %v1082 = vsel %vm601, %v1080, %v1081
        %v1083 = vrot.slane %v1067, 1
        %v1084 = vrot.slane %v881, 1
        %v1085 = vsel %vm601, %v1083, %v1084
        %v1086 = vrot.slane %v1068, 1
        %v1087 = vrot.slane %v883, 1
        %v1088 = vsel %vm601, %v1086, %v1087
        %v1089 = vrot.slane %v1069, 1
        %v1090 = vrot.slane %v885, 1
        %v1091 = vsel %vm601, %v1089, %v1090
        %v1092 = vrot.slane %v1070, 1
        %v1093 = vrot.slane %v887, 1
        %v1094 = vsel %vm601, %v1092, %v1093
        %v1095 = vrot.slane %v1071, 1
        %v1096 = vrot.slane %v889, 1
        %v1097 = vsel %vm601, %v1095, %v1096
        %v1098 = vrot.slane %v1072, 1
        %v1099 = vrot.slane %v891, 1
        %v1100 = vsel %vm601, %v1098, %v1099
        %v1101 = vrot.slane %v1073, 1
        %v1102 = vrot.slane %v893, 1
        %v1103 = vsel %vm601, %v1101, %v1102
        %v1104 = vunpack.c.l.b16 %v905
        %v1105 = vunpack.c.l.b16 %v1076
        %v1106 = vunpack.c.h.b16 %v905
        %v1107 = vunpack.c.h.b16 %v1076
        %v1108 = vunpack.c.l.b16 %v908
        %v1109 = vunpack.c.l.b16 %v1075
        %v1110 = vunpack.c.l.b16 %v920
        %v1111 = vunpack.c.l.b16 %v1079
        %v1112 = vunpack.c.h.b16 %v920
        %v1113 = vunpack.c.h.b16 %v1079
        %v1114 = vunpack.c.l.b16 %v923
        %v1115 = vunpack.c.l.b16 %v1078
        %v1116 = vunpack.c.l.b16 %v935
        %v1117 = vunpack.c.l.b16 %v1082
        %v1118 = vunpack.c.h.b16 %v935
        %v1119 = vunpack.c.h.b16 %v1082
        %v1120 = vunpack.c.l.b16 %v938
        %v1121 = vunpack.c.l.b16 %v1081
        %v1122 = vunpack.c.l.b16 %v950
        %v1123 = vunpack.c.l.b16 %v1085
        %v1124 = vunpack.c.h.b16 %v950
        %v1125 = vunpack.c.h.b16 %v1085
        %v1126 = vunpack.c.l.b16 %v953
        %v1127 = vunpack.c.l.b16 %v1084
        %v1128 = vunpack.c.l.b16 %v965
        %v1129 = vunpack.c.l.b16 %v1088
        %v1130 = vunpack.c.h.b16 %v965
        %v1131 = vunpack.c.h.b16 %v1088
        %v1132 = vunpack.c.l.b16 %v968
        %v1133 = vunpack.c.l.b16 %v1087
        %v1134 = vunpack.c.l.b16 %v980
        %v1135 = vunpack.c.l.b16 %v1091
        %v1136 = vunpack.c.h.b16 %v980
        %v1137 = vunpack.c.h.b16 %v1091
        %v1138 = vunpack.c.l.b16 %v983
        %v1139 = vunpack.c.l.b16 %v1090
        %v1140 = vunpack.c.l.b16 %v995
        %v1141 = vunpack.c.l.b16 %v1094
        %v1142 = vunpack.c.h.b16 %v995
        %v1143 = vunpack.c.h.b16 %v1094
        %v1144 = vunpack.c.l.b16 %v998
        %v1145 = vunpack.c.l.b16 %v1093
        %v1146 = vunpack.c.l.b16 %v1010
        %v1147 = vunpack.c.l.b16 %v1097
        %v1148 = vunpack.c.h.b16 %v1010
        %v1149 = vunpack.c.h.b16 %v1097
        %v1150 = vunpack.c.l.b16 %v1013
        %v1151 = vunpack.c.l.b16 %v1096
        %v1152 = vunpack.c.l.b16 %v1025
        %v1153 = vunpack.c.l.b16 %v1100
        %v1154 = vunpack.c.h.b16 %v1025
        %v1155 = vunpack.c.h.b16 %v1100
        %v1156 = vunpack.c.l.b16 %v1028
        %v1157 = vunpack.c.l.b16 %v1099
        %v1158 = vunpack.c.l.b16 %v1040
        %v1159 = vunpack.c.l.b16 %v1103
        %v1160 = vunpack.c.h.b16 %v1040
        %v1161 = vunpack.c.h.b16 %v1103
        %v1162 = vunpack.c.l.b16 %v1043
        %v1163 = vunpack.c.l.b16 %v1102
        %s1164 = scalar_lea.vmem [#allocation6], 192
        %v1165 = vld [vmem:[%s1164] sm:$0xf]
        %v1166 = vld [vmem:[%s1164 + $0x4] sm:$0xf]
        %v1167 = vld [vmem:[%s1164 + $0x8] sm:$0xf]
        %v1168 = vld [vmem:[%s1164 + $0xc] sm:$0xf]
        %v1169 = vld [vmem:[%s1164 + $0x10] sm:$0xf]
        %v1170 = vld [vmem:[%s1164 + $0x14] sm:$0xf]
        %v1171 = vld [vmem:[%s1164 + $0x18] sm:$0xf]
        %v1172 = vld [vmem:[%s1164 + $0x1c] sm:$0xf]
        %v1173 = vld [vmem:[%s1164 + $0x20] sm:$0xf]
        %v1174 = vld [vmem:[%s1164 + $0x24] sm:$0xf]
        %v1175 = vld [vmem:[%s1164 + $0x28] sm:$0xf]
        %v1176 = vld [vmem:[%s1164 + $0x2c] sm:$0xf]
        %v1177 = vld [vmem:[%s1164 + $0x30] sm:$0xf]
        %v1178 = vld [vmem:[%s1164 + $0x34] sm:$0xf]
        %v1179 = vld [vmem:[%s1164 + $0x38] sm:$0xf]
        %v1180 = vld [vmem:[%s1164 + $0x3c] sm:$0xf]
        %v1181 = vld [vmem:[%s1164 + $0x40] sm:$0xf]
        %v1182 = vld [vmem:[%s1164 + $0x44] sm:$0xf]
        %v1183 = vld [vmem:[%s1164 + $0x48] sm:$0xf]
        %v1184 = vld [vmem:[%s1164 + $0x4c] sm:$0xf]
        %v1185 = vld [vmem:[%s1164 + $0x50] sm:$0xf]
        %v1186 = vld [vmem:[%s1164 + $0x54] sm:$0xf]
        %v1187 = vld [vmem:[%s1164 + $0x58] sm:$0xf]
        %v1188 = vld [vmem:[%s1164 + $0x5c] sm:$0xf]
        %v1189 = vld [vmem:[%s1164 + $0x60] sm:$0xf]
        %v1190 = vld [vmem:[%s1164 + $0x64] sm:$0xf]
        %v1191 = vld [vmem:[%s1164 + $0x68] sm:$0xf]
        %v1192 = vld [vmem:[%s1164 + $0x6c] sm:$0xf]
        %v1193 = vld [vmem:[%s1164 + $0x70] sm:$0xf]
        %v1194 = vld [vmem:[%s1164 + $0x74] sm:$0xf]
        %v1195 = vld [vmem:[%s1164 + $0x78] sm:$0xf]
        %v1196 = vld [vmem:[%s1164 + $0x7c] sm:$0xf]
        %v1197 = vld [vmem:[%s1164 + $0x80] sm:$0xf]
        %v1198 = vld [vmem:[%s1164 + $0x84] sm:$0xf]
        %v1199 = vld [vmem:[%s1164 + $0x88] sm:$0xf]
        %v1200 = vld [vmem:[%s1164 + $0x8c] sm:$0xf]
        %v1201 = vld [vmem:[%s1164 + $0x90] sm:$0xf]
        %v1202 = vld [vmem:[%s1164 + $0x94] sm:$0xf]
        %v1203 = vld [vmem:[%s1164 + $0x98] sm:$0xf]
        %v1204 = vld [vmem:[%s1164 + $0x9c] sm:$0xf]
        %v1205 = vld [vmem:[%s1164 + $0xa0] sm:$0xf]
        %v1206 = vld [vmem:[%s1164 + $0xa4] sm:$0xf]
        %v1207 = vld [vmem:[%s1164 + $0xa8] sm:$0xf]
        %v1208 = vld [vmem:[%s1164 + $0xac] sm:$0xf]
        %v1209 = vld [vmem:[%s1164 + $0xb0] sm:$0xf]
        %v1210 = vld [vmem:[%s1164 + $0xb4] sm:$0xf]
        %v1211 = vld [vmem:[%s1164 + $0xb8] sm:$0xf]
        %v1212 = vld [vmem:[%s1164 + $0xbc] sm:$0xf]
        %v1213 = vpack.c.b16 %v1106, %v1104
        %v1214 = vpack.c.b16 %v1107, %v1105
        %v1215 = vpack.c.b16 %v827, %v826
        %v1216 = vpack.c.b16 %v1110, %v1108
        %v1217 = vpack.c.b16 %v1111, %v1109
        %v1218 = vpack.c.b16 %v829, %v828
        %v1219 = vpack.c.b16 %v1114, %v1112
        %v1220 = vpack.c.b16 %v1115, %v1113
        %v1221 = vpack.c.b16 %v1118, %v1116
        %v1222 = vpack.c.b16 %v1119, %v1117
        %v1223 = vpack.c.b16 %v833, %v832
        %v1224 = vpack.c.b16 %v1122, %v1120
        %v1225 = vpack.c.b16 %v1123, %v1121
        %v1226 = vpack.c.b16 %v835, %v834
        %v1227 = vpack.c.b16 %v1126, %v1124
        %v1228 = vpack.c.b16 %v1127, %v1125
        %v1229 = vpack.c.b16 %v1130, %v1128
        %v1230 = vpack.c.b16 %v1131, %v1129
        %v1231 = vpack.c.b16 %v839, %v838
        %v1232 = vpack.c.b16 %v1134, %v1132
        %v1233 = vpack.c.b16 %v1135, %v1133
        %v1234 = vpack.c.b16 %v841, %v840
        %v1235 = vpack.c.b16 %v1138, %v1136
        %v1236 = vpack.c.b16 %v1139, %v1137
        %v1237 = vpack.c.b16 %v1142, %v1140
        %v1238 = vpack.c.b16 %v1143, %v1141
        %v1239 = vpack.c.b16 %v845, %v844
        %v1240 = vpack.c.b16 %v1146, %v1144
        %v1241 = vpack.c.b16 %v1147, %v1145
        %v1242 = vpack.c.b16 %v847, %v846
        %v1243 = vpack.c.b16 %v1150, %v1148
        %v1244 = vpack.c.b16 %v1151, %v1149
        %v1245 = vpack.c.b16 %v1154, %v1152
        %v1246 = vpack.c.b16 %v1155, %v1153
        %v1247 = vpack.c.b16 %v851, %v850
        %v1248 = vpack.c.b16 %v1158, %v1156
        %v1249 = vpack.c.b16 %v1159, %v1157
        %v1250 = vpack.c.b16 %v853, %v852
        %v1251 = vpack.c.b16 %v1162, %v1160
        %v1252 = vpack.c.b16 %v1163, %v1161
        %v1346 = vunpack.c.l.b16 %v1165
        %v1347 = vunpack.c.l.b16 %v1166
        %v1348 = vunpack.c.l.b16 %v1167
        %v1349 = vunpack.c.l.b16 %v1168
        %v1350 = vunpack.c.l.b16 %v1169
        %v1351 = vunpack.c.l.b16 %v1170
        %v1352 = vunpack.c.l.b16 %v1171
        %v1353 = vunpack.c.l.b16 %v1172
        %v1354 = vunpack.c.l.b16 %v1173
        %v1355 = vunpack.c.l.b16 %v1174
        %v1356 = vunpack.c.l.b16 %v1175
        %v1357 = vunpack.c.l.b16 %v1176
        %v1358 = vunpack.c.l.b16 %v1177
        %v1359 = vunpack.c.l.b16 %v1178
        %v1360 = vunpack.c.l.b16 %v1179
        %v1361 = vunpack.c.l.b16 %v1180
        %v1362 = vunpack.c.l.b16 %v1181
        %v1363 = vunpack.c.l.b16 %v1182
        %v1364 = vunpack.c.l.b16 %v1183
        %v1365 = vunpack.c.l.b16 %v1184
        %v1366 = vunpack.c.l.b16 %v1185
        %v1367 = vunpack.c.l.b16 %v1186
        %v1368 = vunpack.c.l.b16 %v1187
        %v1369 = vunpack.c.l.b16 %v1188
        %v1370 = vunpack.c.l.b16 %v1189
        %v1371 = vunpack.c.l.b16 %v1190
        %v1372 = vunpack.c.l.b16 %v1191
        %v1373 = vunpack.c.l.b16 %v1192
        %v1374 = vunpack.c.l.b16 %v1193
        %v1375 = vunpack.c.l.b16 %v1194
        %v1376 = vunpack.c.l.b16 %v1195
        %v1377 = vunpack.c.l.b16 %v1196
        %v1378 = vunpack.c.l.b16 %v1197
        %v1379 = vunpack.c.l.b16 %v1198
        %v1380 = vunpack.c.l.b16 %v1199
        %v1381 = vunpack.c.l.b16 %v1200
        %v1382 = vunpack.c.l.b16 %v1201
        %v1383 = vunpack.c.l.b16 %v1202
        %v1384 = vunpack.c.l.b16 %v1203
        %v1385 = vunpack.c.l.b16 %v1204
        %v1386 = vunpack.c.l.b16 %v1205
        %v1387 = vunpack.c.l.b16 %v1206
        %v1388 = vunpack.c.l.b16 %v1207
        %v1389 = vunpack.c.l.b16 %v1208
        %v1390 = vunpack.c.l.b16 %v1209
        %v1391 = vunpack.c.l.b16 %v1210
        %v1392 = vunpack.c.l.b16 %v1211
        %v1393 = vunpack.c.l.b16 %v1212
        %v1394 = vpack.c.b16 %v1347, %v1346
        %v1395 = vpack.c.b16 %v1349, %v1348
        %v1396 = vpack.c.b16 %v1351, %v1350
        %v1397 = vpack.c.b16 %v1353, %v1352
        %v1398 = vpack.c.b16 %v1355, %v1354
        %v1399 = vpack.c.b16 %v1357, %v1356
        %v1400 = vpack.c.b16 %v1359, %v1358
        %v1401 = vpack.c.b16 %v1361, %v1360
        %v1402 = vpack.c.b16 %v1363, %v1362
        %v1403 = vpack.c.b16 %v1365, %v1364
        %v1404 = vpack.c.b16 %v1367, %v1366
        %v1405 = vpack.c.b16 %v1369, %v1368
        %v1406 = vpack.c.b16 %v1371, %v1370
        %v1407 = vpack.c.b16 %v1373, %v1372
        %v1408 = vpack.c.b16 %v1375, %v1374
        %v1409 = vpack.c.b16 %v1377, %v1376
        %v1410 = vpack.c.b16 %v1379, %v1378
        %v1411 = vpack.c.b16 %v1381, %v1380
        %v1412 = vpack.c.b16 %v1383, %v1382
        %v1413 = vpack.c.b16 %v1385, %v1384
        %v1414 = vpack.c.b16 %v1387, %v1386
        %v1415 = vpack.c.b16 %v1389, %v1388
        %v1416 = vpack.c.b16 %v1391, %v1390
        %v1417 = vpack.c.b16 %v1393, %v1392
        %1442 = vmatpush.bf16.msra.mxu0 %v1401
        %1443 = vmatpush.bf16.msra.mxu0 %v1400
        %1444 = vmatpush.bf16.msra.mxu0 %v1399
        %1445 = vmatpush.bf16.msra.mxu0 %v1398
        %1446 = vmatpush.bf16.msra.mxu0 %v1397
        %1447 = vmatpush.bf16.msra.mxu0 %v1396
        %1448 = vmatpush.bf16.msra.mxu0 %v1395
        %1449 = vmatpush.bf16.msra.mxu0 %v1394
        %1450 = vmatmul.bf16.gmra.mxu0 %v874
        %v1451 = vpop.f32.mrf.mxu0
        %v1452 = vadd.f32 0.0, %v1451
        %v1453 = vpop.f32.mrf.mxu0
        %v1454 = vadd.f32 0.0, %v1453
        %1455 = vmatmul.bf16.gmra.mxu0 %v1215
        %v1456 = vpop.f32.mrf.mxu0
        %v1457 = vadd.f32 0.0, %v1456
        %v1458 = vpop.f32.mrf.mxu0
        %v1459 = vadd.f32 0.0, %v1458
        %1460 = vmatmul.bf16.gmra.mxu0 %v1218
        %v1461 = vpop.f32.mrf.mxu0
        %v1462 = vadd.f32 0.0, %v1461
        %v1463 = vpop.f32.mrf.mxu0
        %v1464 = vadd.f32 0.0, %v1463
        %1465 = vmatmul.bf16.gmra.mxu0 %v878
        %v1466 = vpop.f32.mrf.mxu0
        %v1467 = vadd.f32 0.0, %v1466
        %v1468 = vpop.f32.mrf.mxu0
        %v1469 = vadd.f32 0.0, %v1468
        %1470 = vmatmul.bf16.gmra.mxu0 %v1223
        %v1471 = vpop.f32.mrf.mxu0
        %v1472 = vadd.f32 0.0, %v1471
        %v1473 = vpop.f32.mrf.mxu0
        %v1474 = vadd.f32 0.0, %v1473
        %1475 = vmatmul.bf16.gmra.mxu0 %v1226
        %v1476 = vpop.f32.mrf.mxu0
        %v1477 = vadd.f32 0.0, %v1476
        %v1478 = vpop.f32.mrf.mxu0
        %v1479 = vadd.f32 0.0, %v1478
        %1480 = vmatmul.bf16.gmra.mxu0 %v882
        %v1481 = vpop.f32.mrf.mxu0
        %v1482 = vadd.f32 0.0, %v1481
        %v1483 = vpop.f32.mrf.mxu0
        %v1484 = vadd.f32 0.0, %v1483
        %1485 = vmatmul.bf16.gmra.mxu0 %v1231
        %v1486 = vpop.f32.mrf.mxu0
        %v1487 = vadd.f32 0.0, %v1486
        %v1488 = vpop.f32.mrf.mxu0
        %v1489 = vadd.f32 0.0, %v1488
        %1490 = vmatmul.bf16.gmra.mxu0 %v1234
        %v1491 = vpop.f32.mrf.mxu0
        %v1492 = vadd.f32 0.0, %v1491
        %v1493 = vpop.f32.mrf.mxu0
        %v1494 = vadd.f32 0.0, %v1493
        %1495 = vmatmul.bf16.gmra.mxu0 %v886
        %v1496 = vpop.f32.mrf.mxu0
        %v1497 = vadd.f32 0.0, %v1496
        %v1498 = vpop.f32.mrf.mxu0
        %v1499 = vadd.f32 0.0, %v1498
        %1500 = vmatmul.bf16.gmra.mxu0 %v1239
        %v1501 = vpop.f32.mrf.mxu0
        %v1502 = vadd.f32 0.0, %v1501
        %v1503 = vpop.f32.mrf.mxu0
        %v1504 = vadd.f32 0.0, %v1503
        %1505 = vmatmul.bf16.gmra.mxu0 %v1242
        %v1506 = vpop.f32.mrf.mxu0
        %v1507 = vadd.f32 0.0, %v1506
        %v1508 = vpop.f32.mrf.mxu0
        %v1509 = vadd.f32 0.0, %v1508
        %1510 = vmatmul.bf16.gmra.mxu0 %v890
        %v1511 = vpop.f32.mrf.mxu0
        %v1512 = vadd.f32 0.0, %v1511
        %v1513 = vpop.f32.mrf.mxu0
        %v1514 = vadd.f32 0.0, %v1513
        %1515 = vmatmul.bf16.gmra.mxu0 %v1247
        %v1516 = vpop.f32.mrf.mxu0
        %v1517 = vadd.f32 0.0, %v1516
        %v1518 = vpop.f32.mrf.mxu0
        %v1519 = vadd.f32 0.0, %v1518
        %1520 = vmatmul.bf16.gmra.mxu0 %v1250
        %v1521 = vpop.f32.mrf.mxu0
        %v1522 = vadd.f32 0.0, %v1521
        %v1523 = vpop.f32.mrf.mxu0
        %v1524 = vadd.f32 0.0, %v1523
        %1525 = vdwg.mxu0
        %1526 = vmatpush.bf16.msra.mxu0 %v1409
        %1527 = vmatpush.bf16.msra.mxu0 %v1408
        %1528 = vmatpush.bf16.msra.mxu0 %v1407
        %1529 = vmatpush.bf16.msra.mxu0 %v1406
        %1530 = vmatpush.bf16.msra.mxu0 %v1405
        %1531 = vmatpush.bf16.msra.mxu0 %v1404
        %1532 = vmatpush.bf16.msra.mxu0 %v1403
        %1533 = vmatpush.bf16.msra.mxu0 %v1402
        %1534 = vmatmul.bf16.gmra.mxu0 %v1213
        %v1535 = vpop.f32.mrf.mxu0
        %v1536 = vadd.f32 %v1452, %v1535
        %v1537 = vpop.f32.mrf.mxu0
        %v1538 = vadd.f32 %v1454, %v1537
        %1539 = vmatmul.bf16.gmra.mxu0 %v1216
        %v1540 = vpop.f32.mrf.mxu0
        %v1541 = vadd.f32 %v1457, %v1540
        %v1542 = vpop.f32.mrf.mxu0
        %v1543 = vadd.f32 %v1459, %v1542
        %1544 = vmatmul.bf16.gmra.mxu0 %v1219
        %v1545 = vpop.f32.mrf.mxu0
        %v1546 = vadd.f32 %v1462, %v1545
        %v1547 = vpop.f32.mrf.mxu0
        %v1548 = vadd.f32 %v1464, %v1547
        %1549 = vmatmul.bf16.gmra.mxu0 %v1221
        %v1550 = vpop.f32.mrf.mxu0
        %v1551 = vadd.f32 %v1467, %v1550
        %v1552 = vpop.f32.mrf.mxu0
        %v1553 = vadd.f32 %v1469, %v1552
        %1554 = vmatmul.bf16.gmra.mxu0 %v1224
        %v1555 = vpop.f32.mrf.mxu0
        %v1556 = vadd.f32 %v1472, %v1555
        %v1557 = vpop.f32.mrf.mxu0
        %v1558 = vadd.f32 %v1474, %v1557
        %1559 = vmatmul.bf16.gmra.mxu0 %v1227
        %v1560 = vpop.f32.mrf.mxu0
        %v1561 = vadd.f32 %v1477, %v1560
        %v1562 = vpop.f32.mrf.mxu0
        %v1563 = vadd.f32 %v1479, %v1562
        %1564 = vmatmul.bf16.gmra.mxu0 %v1229
        %v1565 = vpop.f32.mrf.mxu0
        %v1566 = vadd.f32 %v1482, %v1565
        %v1567 = vpop.f32.mrf.mxu0
        %v1568 = vadd.f32 %v1484, %v1567
        %1569 = vmatmul.bf16.gmra.mxu0 %v1232
        %v1570 = vpop.f32.mrf.mxu0
        %v1571 = vadd.f32 %v1487, %v1570
        %v1572 = vpop.f32.mrf.mxu0
        %v1573 = vadd.f32 %v1489, %v1572
        %1574 = vmatmul.bf16.gmra.mxu0 %v1235
        %v1575 = vpop.f32.mrf.mxu0
        %v1576 = vadd.f32 %v1492, %v1575
        %v1577 = vpop.f32.mrf.mxu0
        %v1578 = vadd.f32 %v1494, %v1577
        %1579 = vmatmul.bf16.gmra.mxu0 %v1237
        %v1580 = vpop.f32.mrf.mxu0
        %v1581 = vadd.f32 %v1497, %v1580
        %v1582 = vpop.f32.mrf.mxu0
        %v1583 = vadd.f32 %v1499, %v1582
        %1584 = vmatmul.bf16.gmra.mxu0 %v1240
        %v1585 = vpop.f32.mrf.mxu0
        %v1586 = vadd.f32 %v1502, %v1585
        %v1587 = vpop.f32.mrf.mxu0
        %v1588 = vadd.f32 %v1504, %v1587
        %1589 = vmatmul.bf16.gmra.mxu0 %v1243
        %v1590 = vpop.f32.mrf.mxu0
        %v1591 = vadd.f32 %v1507, %v1590
        %v1592 = vpop.f32.mrf.mxu0
        %v1593 = vadd.f32 %v1509, %v1592
        %1594 = vmatmul.bf16.gmra.mxu0 %v1245
        %v1595 = vpop.f32.mrf.mxu0
        %v1596 = vadd.f32 %v1512, %v1595
        %v1597 = vpop.f32.mrf.mxu0
        %v1598 = vadd.f32 %v1514, %v1597
        %1599 = vmatmul.bf16.gmra.mxu0 %v1248
        %v1600 = vpop.f32.mrf.mxu0
        %v1601 = vadd.f32 %v1517, %v1600
        %v1602 = vpop.f32.mrf.mxu0
        %v1603 = vadd.f32 %v1519, %v1602
        %1604 = vmatmul.bf16.gmra.mxu0 %v1251
        %v1605 = vpop.f32.mrf.mxu0
        %v1606 = vadd.f32 %v1522, %v1605
        %v1607 = vpop.f32.mrf.mxu0
        %v1608 = vadd.f32 %v1524, %v1607
        %1609 = vdwg.mxu0
        %1610 = vmatpush.bf16.msra.mxu0 %v1417
        %1611 = vmatpush.bf16.msra.mxu0 %v1416
        %1612 = vmatpush.bf16.msra.mxu0 %v1415
        %1613 = vmatpush.bf16.msra.mxu0 %v1414
        %1614 = vmatpush.bf16.msra.mxu0 %v1413
        %1615 = vmatpush.bf16.msra.mxu0 %v1412
        %1616 = vmatpush.bf16.msra.mxu0 %v1411
        %1617 = vmatpush.bf16.msra.mxu0 %v1410
        %1618 = vmatmul.bf16.gmra.mxu0 %v1214
        %v1619 = vpop.f32.mrf.mxu0
        %v1620 = vadd.f32 %v1536, %v1619
        %v1621 = vpop.f32.mrf.mxu0
        %v1622 = vadd.f32 %v1538, %v1621
        %1623 = vmatmul.bf16.gmra.mxu0 %v1217
        %v1624 = vpop.f32.mrf.mxu0
        %v1625 = vadd.f32 %v1541, %v1624
        %v1626 = vpop.f32.mrf.mxu0
        %v1627 = vadd.f32 %v1543, %v1626
        %1628 = vmatmul.bf16.gmra.mxu0 %v1220
        %v1629 = vpop.f32.mrf.mxu0
        %v1630 = vadd.f32 %v1546, %v1629
        %v1631 = vpop.f32.mrf.mxu0
        %v1632 = vadd.f32 %v1548, %v1631
        %1633 = vmatmul.bf16.gmra.mxu0 %v1222
        %v1634 = vpop.f32.mrf.mxu0
        %v1635 = vadd.f32 %v1551, %v1634
        %v1636 = vpop.f32.mrf.mxu0
        %v1637 = vadd.f32 %v1553, %v1636
        %1638 = vmatmul.bf16.gmra.mxu0 %v1225
        %v1639 = vpop.f32.mrf.mxu0
        %v1640 = vadd.f32 %v1556, %v1639
        %v1641 = vpop.f32.mrf.mxu0
        %v1642 = vadd.f32 %v1558, %v1641
        %1643 = vmatmul.bf16.gmra.mxu0 %v1228
        %v1644 = vpop.f32.mrf.mxu0
        %v1645 = vadd.f32 %v1561, %v1644
        %v1646 = vpop.f32.mrf.mxu0
        %v1647 = vadd.f32 %v1563, %v1646
        %1648 = vmatmul.bf16.gmra.mxu0 %v1230
        %v1649 = vpop.f32.mrf.mxu0
        %v1650 = vadd.f32 %v1566, %v1649
        %v1651 = vpop.f32.mrf.mxu0
        %v1652 = vadd.f32 %v1568, %v1651
        %1653 = vmatmul.bf16.gmra.mxu0 %v1233
        %v1654 = vpop.f32.mrf.mxu0
        %v1655 = vadd.f32 %v1571, %v1654
        %v1656 = vpop.f32.mrf.mxu0
        %v1657 = vadd.f32 %v1573, %v1656
        %1658 = vmatmul.bf16.gmra.mxu0 %v1236
        %v1659 = vpop.f32.mrf.mxu0
        %v1660 = vadd.f32 %v1576, %v1659
        %v1661 = vpop.f32.mrf.mxu0
        %v1662 = vadd.f32 %v1578, %v1661
        %1663 = vmatmul.bf16.gmra.mxu0 %v1238
        %v1664 = vpop.f32.mrf.mxu0
        %v1665 = vadd.f32 %v1581, %v1664
        %v1666 = vpop.f32.mrf.mxu0
        %v1667 = vadd.f32 %v1583, %v1666
        %1668 = vmatmul.bf16.gmra.mxu0 %v1241
        %v1669 = vpop.f32.mrf.mxu0
        %v1670 = vadd.f32 %v1586, %v1669
        %v1671 = vpop.f32.mrf.mxu0
        %v1672 = vadd.f32 %v1588, %v1671
        %1673 = vmatmul.bf16.gmra.mxu0 %v1244
        %v1674 = vpop.f32.mrf.mxu0
        %v1675 = vadd.f32 %v1591, %v1674
        %v1676 = vpop.f32.mrf.mxu0
        %v1677 = vadd.f32 %v1593, %v1676
        %1678 = vmatmul.bf16.gmra.mxu0 %v1246
        %v1679 = vpop.f32.mrf.mxu0
        %v1680 = vadd.f32 %v1596, %v1679
        %v1681 = vpop.f32.mrf.mxu0
        %v1682 = vadd.f32 %v1598, %v1681
        %1683 = vmatmul.bf16.gmra.mxu0 %v1249
        %v1684 = vpop.f32.mrf.mxu0
        %v1685 = vadd.f32 %v1601, %v1684
        %v1686 = vpop.f32.mrf.mxu0
        %v1687 = vadd.f32 %v1603, %v1686
        %1688 = vmatmul.bf16.gmra.mxu0 %v1252
        %v1689 = vpop.f32.mrf.mxu0
        %v1690 = vadd.f32 %v1606, %v1689
        %v1691 = vpop.f32.mrf.mxu0
        %v1692 = vadd.f32 %v1608, %v1691
        %1693 = vdwg.mxu0
        %v1694 = vpack.c.b16 %v634, %v632
        %v1695 = vpack.c.b16 %v635, %v633
        %v1696 = vpack.c.b16 %v353, %v352
        %v1697 = vpack.c.b16 %v638, %v636
        %v1698 = vpack.c.b16 %v639, %v637
        %v1699 = vpack.c.b16 %v355, %v354
        %v1700 = vpack.c.b16 %v642, %v640
        %v1701 = vpack.c.b16 %v643, %v641
        %v1702 = vpack.c.b16 %v646, %v644
        %v1703 = vpack.c.b16 %v647, %v645
        %v1704 = vpack.c.b16 %v359, %v358
        %v1705 = vpack.c.b16 %v650, %v648
        %v1706 = vpack.c.b16 %v651, %v649
        %v1707 = vpack.c.b16 %v361, %v360
        %v1708 = vpack.c.b16 %v654, %v652
        %v1709 = vpack.c.b16 %v655, %v653
        %v1710 = vpack.c.b16 %v658, %v656
        %v1711 = vpack.c.b16 %v659, %v657
        %v1712 = vpack.c.b16 %v365, %v364
        %v1713 = vpack.c.b16 %v662, %v660
        %v1714 = vpack.c.b16 %v663, %v661
        %v1715 = vpack.c.b16 %v367, %v366
        %v1716 = vpack.c.b16 %v666, %v664
        %v1717 = vpack.c.b16 %v667, %v665
        %v1718 = vpack.c.b16 %v670, %v668
        %v1719 = vpack.c.b16 %v671, %v669
        %v1720 = vpack.c.b16 %v371, %v370
        %v1721 = vpack.c.b16 %v674, %v672
        %v1722 = vpack.c.b16 %v675, %v673
        %v1723 = vpack.c.b16 %v373, %v372
        %v1724 = vpack.c.b16 %v678, %v676
        %v1725 = vpack.c.b16 %v679, %v677
        %v1726 = vpack.c.b16 %v682, %v680
        %v1727 = vpack.c.b16 %v683, %v681
        %v1728 = vpack.c.b16 %v377, %v376
        %v1729 = vpack.c.b16 %v686, %v684
        %v1730 = vpack.c.b16 %v687, %v685
        %v1731 = vpack.c.b16 %v379, %v378
        %v1732 = vpack.c.b16 %v690, %v688
        %v1733 = vpack.c.b16 %v691, %v689
        %v1827 = vunpack.c.l.b16 %v692
        %v1828 = vunpack.c.l.b16 %v693
        %v1829 = vunpack.c.l.b16 %v694
        %v1830 = vunpack.c.l.b16 %v695
        %v1831 = vunpack.c.l.b16 %v696
        %v1832 = vunpack.c.l.b16 %v697
        %v1833 = vunpack.c.l.b16 %v698
        %v1834 = vunpack.c.l.b16 %v699
        %v1835 = vunpack.c.l.b16 %v700
        %v1836 = vunpack.c.l.b16 %v701
        %v1837 = vunpack.c.l.b16 %v702
        %v1838 = vunpack.c.l.b16 %v703
        %v1839 = vunpack.c.l.b16 %v704
        %v1840 = vunpack.c.l.b16 %v705
        %v1841 = vunpack.c.l.b16 %v706
        %v1842 = vunpack.c.l.b16 %v707
        %v1843 = vunpack.c.l.b16 %v708
        %v1844 = vunpack.c.l.b16 %v709
        %v1845 = vunpack.c.l.b16 %v710
        %v1846 = vunpack.c.l.b16 %v711
        %v1847 = vunpack.c.l.b16 %v712
        %v1848 = vunpack.c.l.b16 %v713
        %v1849 = vunpack.c.l.b16 %v714
        %v1850 = vunpack.c.l.b16 %v715
        %v1851 = vunpack.c.l.b16 %v716
        %v1852 = vunpack.c.l.b16 %v717
        %v1853 = vunpack.c.l.b16 %v718
        %v1854 = vunpack.c.l.b16 %v719
        %v1855 = vunpack.c.l.b16 %v720
        %v1856 = vunpack.c.l.b16 %v721
        %v1857 = vunpack.c.l.b16 %v722
        %v1858 = vunpack.c.l.b16 %v723
        %v1859 = vunpack.c.l.b16 %v724
        %v1860 = vunpack.c.l.b16 %v725
        %v1861 = vunpack.c.l.b16 %v726
        %v1862 = vunpack.c.l.b16 %v727
        %v1863 = vunpack.c.l.b16 %v728
        %v1864 = vunpack.c.l.b16 %v729
        %v1865 = vunpack.c.l.b16 %v730
        %v1866 = vunpack.c.l.b16 %v731
        %v1867 = vunpack.c.l.b16 %v732
        %v1868 = vunpack.c.l.b16 %v733
        %v1869 = vunpack.c.l.b16 %v734
        %v1870 = vunpack.c.l.b16 %v735
        %v1871 = vunpack.c.l.b16 %v736
        %v1872 = vunpack.c.l.b16 %v737
        %v1873 = vunpack.c.l.b16 %v738
        %v1874 = vunpack.c.l.b16 %v739
        %v1875 = vpack.c.b16 %v1828, %v1827
        %v1876 = vpack.c.b16 %v1830, %v1829
        %v1877 = vpack.c.b16 %v1832, %v1831
        %v1878 = vpack.c.b16 %v1834, %v1833
        %v1879 = vpack.c.b16 %v1836, %v1835
        %v1880 = vpack.c.b16 %v1838, %v1837
        %v1881 = vpack.c.b16 %v1840, %v1839
        %v1882 = vpack.c.b16 %v1842, %v1841
        %v1883 = vpack.c.b16 %v1844, %v1843
        %v1884 = vpack.c.b16 %v1846, %v1845
        %v1885 = vpack.c.b16 %v1848, %v1847
        %v1886 = vpack.c.b16 %v1850, %v1849
        %v1887 = vpack.c.b16 %v1852, %v1851
        %v1888 = vpack.c.b16 %v1854, %v1853
        %v1889 = vpack.c.b16 %v1856, %v1855
        %v1890 = vpack.c.b16 %v1858, %v1857
        %v1891 = vpack.c.b16 %v1860, %v1859
        %v1892 = vpack.c.b16 %v1862, %v1861
        %v1893 = vpack.c.b16 %v1864, %v1863
        %v1894 = vpack.c.b16 %v1866, %v1865
        %v1895 = vpack.c.b16 %v1868, %v1867
        %v1896 = vpack.c.b16 %v1870, %v1869
        %v1897 = vpack.c.b16 %v1872, %v1871
        %v1898 = vpack.c.b16 %v1874, %v1873
        %1923 = vmatpush.bf16.msra.mxu0 %v1882
        %1924 = vmatpush.bf16.msra.mxu0 %v1881
        %1925 = vmatpush.bf16.msra.mxu0 %v1880
        %1926 = vmatpush.bf16.msra.mxu0 %v1879
        %1927 = vmatpush.bf16.msra.mxu0 %v1878
        %1928 = vmatpush.bf16.msra.mxu0 %v1877
        %1929 = vmatpush.bf16.msra.mxu0 %v1876
        %1930 = vmatpush.bf16.msra.mxu0 %v1875
        %1931 = vmatmul.bf16.gmra.mxu0 %v400
        %v1932 = vpop.f32.mrf.mxu0
        %v1933 = vadd.f32 %v1620, %v1932
        %v1934 = vpop.f32.mrf.mxu0
        %v1935 = vadd.f32 %v1622, %v1934
        %1936 = vmatmul.bf16.gmra.mxu0 %v1696
        %v1937 = vpop.f32.mrf.mxu0
        %v1938 = vadd.f32 %v1625, %v1937
        %v1939 = vpop.f32.mrf.mxu0
        %v1940 = vadd.f32 %v1627, %v1939
        %1941 = vmatmul.bf16.gmra.mxu0 %v1699
        %v1942 = vpop.f32.mrf.mxu0
        %v1943 = vadd.f32 %v1630, %v1942
        %v1944 = vpop.f32.mrf.mxu0
        %v1945 = vadd.f32 %v1632, %v1944
        %1946 = vmatmul.bf16.gmra.mxu0 %v404
        %v1947 = vpop.f32.mrf.mxu0
        %v1948 = vadd.f32 %v1635, %v1947
        %v1949 = vpop.f32.mrf.mxu0
        %v1950 = vadd.f32 %v1637, %v1949
        %1951 = vmatmul.bf16.gmra.mxu0 %v1704
        %v1952 = vpop.f32.mrf.mxu0
        %v1953 = vadd.f32 %v1640, %v1952
        %v1954 = vpop.f32.mrf.mxu0
        %v1955 = vadd.f32 %v1642, %v1954
        %1956 = vmatmul.bf16.gmra.mxu0 %v1707
        %v1957 = vpop.f32.mrf.mxu0
        %v1958 = vadd.f32 %v1645, %v1957
        %v1959 = vpop.f32.mrf.mxu0
        %v1960 = vadd.f32 %v1647, %v1959
        %1961 = vmatmul.bf16.gmra.mxu0 %v408
        %v1962 = vpop.f32.mrf.mxu0
        %v1963 = vadd.f32 %v1650, %v1962
        %v1964 = vpop.f32.mrf.mxu0
        %v1965 = vadd.f32 %v1652, %v1964
        %1966 = vmatmul.bf16.gmra.mxu0 %v1712
        %v1967 = vpop.f32.mrf.mxu0
        %v1968 = vadd.f32 %v1655, %v1967
        %v1969 = vpop.f32.mrf.mxu0
        %v1970 = vadd.f32 %v1657, %v1969
        %1971 = vmatmul.bf16.gmra.mxu0 %v1715
        %v1972 = vpop.f32.mrf.mxu0
        %v1973 = vadd.f32 %v1660, %v1972
        %v1974 = vpop.f32.mrf.mxu0
        %v1975 = vadd.f32 %v1662, %v1974
        %1976 = vmatmul.bf16.gmra.mxu0 %v412
        %v1977 = vpop.f32.mrf.mxu0
        %v1978 = vadd.f32 %v1665, %v1977
        %v1979 = vpop.f32.mrf.mxu0
        %v1980 = vadd.f32 %v1667, %v1979
        %1981 = vmatmul.bf16.gmra.mxu0 %v1720
        %v1982 = vpop.f32.mrf.mxu0
        %v1983 = vadd.f32 %v1670, %v1982
        %v1984 = vpop.f32.mrf.mxu0
        %v1985 = vadd.f32 %v1672, %v1984
        %1986 = vmatmul.bf16.gmra.mxu0 %v1723
        %v1987 = vpop.f32.mrf.mxu0
        %v1988 = vadd.f32 %v1675, %v1987
        %v1989 = vpop.f32.mrf.mxu0
        %v1990 = vadd.f32 %v1677, %v1989
        %1991 = vmatmul.bf16.gmra.mxu0 %v416
        %v1992 = vpop.f32.mrf.mxu0
        %v1993 = vadd.f32 %v1680, %v1992
        %v1994 = vpop.f32.mrf.mxu0
        %v1995 = vadd.f32 %v1682, %v1994
        %1996 = vmatmul.bf16.gmra.mxu0 %v1728
        %v1997 = vpop.f32.mrf.mxu0
        %v1998 = vadd.f32 %v1685, %v1997
        %v1999 = vpop.f32.mrf.mxu0
        %v2000 = vadd.f32 %v1687, %v1999
        %2001 = vmatmul.bf16.gmra.mxu0 %v1731
        %v2002 = vpop.f32.mrf.mxu0
        %v2003 = vadd.f32 %v1690, %v2002
        %v2004 = vpop.f32.mrf.mxu0
        %v2005 = vadd.f32 %v1692, %v2004
        %2006 = vdwg.mxu0
        %2007 = vmatpush.bf16.msra.mxu0 %v1890
        %2008 = vmatpush.bf16.msra.mxu0 %v1889
        %2009 = vmatpush.bf16.msra.mxu0 %v1888
        %2010 = vmatpush.bf16.msra.mxu0 %v1887
        %2011 = vmatpush.bf16.msra.mxu0 %v1886
        %2012 = vmatpush.bf16.msra.mxu0 %v1885
        %2013 = vmatpush.bf16.msra.mxu0 %v1884
        %2014 = vmatpush.bf16.msra.mxu0 %v1883
        %2015 = vmatmul.bf16.gmra.mxu0 %v1694
        %v2016 = vpop.f32.mrf.mxu0
        %v2017 = vadd.f32 %v1933, %v2016
        %v2018 = vpop.f32.mrf.mxu0
        %v2019 = vadd.f32 %v1935, %v2018
        %2020 = vmatmul.bf16.gmra.mxu0 %v1697
        %v2021 = vpop.f32.mrf.mxu0
        %v2022 = vadd.f32 %v1938, %v2021
        %v2023 = vpop.f32.mrf.mxu0
        %v2024 = vadd.f32 %v1940, %v2023
        %2025 = vmatmul.bf16.gmra.mxu0 %v1700
        %v2026 = vpop.f32.mrf.mxu0
        %v2027 = vadd.f32 %v1943, %v2026
        %v2028 = vpop.f32.mrf.mxu0
        %v2029 = vadd.f32 %v1945, %v2028
        %2030 = vmatmul.bf16.gmra.mxu0 %v1702
        %v2031 = vpop.f32.mrf.mxu0
        %v2032 = vadd.f32 %v1948, %v2031
        %v2033 = vpop.f32.mrf.mxu0
        %v2034 = vadd.f32 %v1950, %v2033
        %2035 = vmatmul.bf16.gmra.mxu0 %v1705
        %v2036 = vpop.f32.mrf.mxu0
        %v2037 = vadd.f32 %v1953, %v2036
        %v2038 = vpop.f32.mrf.mxu0
        %v2039 = vadd.f32 %v1955, %v2038
        %2040 = vmatmul.bf16.gmra.mxu0 %v1708
        %v2041 = vpop.f32.mrf.mxu0
        %v2042 = vadd.f32 %v1958, %v2041
        %v2043 = vpop.f32.mrf.mxu0
        %v2044 = vadd.f32 %v1960, %v2043
        %2045 = vmatmul.bf16.gmra.mxu0 %v1710
        %v2046 = vpop.f32.mrf.mxu0
        %v2047 = vadd.f32 %v1963, %v2046
        %v2048 = vpop.f32.mrf.mxu0
        %v2049 = vadd.f32 %v1965, %v2048
        %2050 = vmatmul.bf16.gmra.mxu0 %v1713
        %v2051 = vpop.f32.mrf.mxu0
        %v2052 = vadd.f32 %v1968, %v2051
        %v2053 = vpop.f32.mrf.mxu0
        %v2054 = vadd.f32 %v1970, %v2053
        %2055 = vmatmul.bf16.gmra.mxu0 %v1716
        %v2056 = vpop.f32.mrf.mxu0
        %v2057 = vadd.f32 %v1973, %v2056
        %v2058 = vpop.f32.mrf.mxu0
        %v2059 = vadd.f32 %v1975, %v2058
        %2060 = vmatmul.bf16.gmra.mxu0 %v1718
        %v2061 = vpop.f32.mrf.mxu0
        %v2062 = vadd.f32 %v1978, %v2061
        %v2063 = vpop.f32.mrf.mxu0
        %v2064 = vadd.f32 %v1980, %v2063
        %2065 = vmatmul.bf16.gmra.mxu0 %v1721
        %v2066 = vpop.f32.mrf.mxu0
        %v2067 = vadd.f32 %v1983, %v2066
        %v2068 = vpop.f32.mrf.mxu0
        %v2069 = vadd.f32 %v1985, %v2068
        %2070 = vmatmul.bf16.gmra.mxu0 %v1724
        %v2071 = vpop.f32.mrf.mxu0
        %v2072 = vadd.f32 %v1988, %v2071
        %v2073 = vpop.f32.mrf.mxu0
        %v2074 = vadd.f32 %v1990, %v2073
        %2075 = vmatmul.bf16.gmra.mxu0 %v1726
        %v2076 = vpop.f32.mrf.mxu0
        %v2077 = vadd.f32 %v1993, %v2076
        %v2078 = vpop.f32.mrf.mxu0
        %v2079 = vadd.f32 %v1995, %v2078
        %2080 = vmatmul.bf16.gmra.mxu0 %v1729
        %v2081 = vpop.f32.mrf.mxu0
        %v2082 = vadd.f32 %v1998, %v2081
        %v2083 = vpop.f32.mrf.mxu0
        %v2084 = vadd.f32 %v2000, %v2083
        %2085 = vmatmul.bf16.gmra.mxu0 %v1732
        %v2086 = vpop.f32.mrf.mxu0
        %v2087 = vadd.f32 %v2003, %v2086
        %v2088 = vpop.f32.mrf.mxu0
        %v2089 = vadd.f32 %v2005, %v2088
        %2090 = vdwg.mxu0
        %2091 = vmatpush.bf16.msra.mxu0 %v1898
        %2092 = vmatpush.bf16.msra.mxu0 %v1897
        %2093 = vmatpush.bf16.msra.mxu0 %v1896
        %2094 = vmatpush.bf16.msra.mxu0 %v1895
        %2095 = vmatpush.bf16.msra.mxu0 %v1894
        %2096 = vmatpush.bf16.msra.mxu0 %v1893
        %2097 = vmatpush.bf16.msra.mxu0 %v1892
        %2098 = vmatpush.bf16.msra.mxu0 %v1891
        %2099 = vmatmul.bf16.gmra.mxu0 %v1695
        %v2100 = vpop.f32.mrf.mxu0
        %v2101 = vadd.f32 %v2017, %v2100
        %v2102 = vpop.f32.mrf.mxu0
        %v2103 = vadd.f32 %v2019, %v2102
        %2104 = vmatmul.bf16.gmra.mxu0 %v1698
        %v2105 = vpop.f32.mrf.mxu0
        %v2106 = vadd.f32 %v2022, %v2105
        %v2107 = vpop.f32.mrf.mxu0
        %v2108 = vadd.f32 %v2024, %v2107
        %2109 = vmatmul.bf16.gmra.mxu0 %v1701
        %v2110 = vpop.f32.mrf.mxu0
        %v2111 = vadd.f32 %v2027, %v2110
        %v2112 = vpop.f32.mrf.mxu0
        %v2113 = vadd.f32 %v2029, %v2112
        %2114 = vmatmul.bf16.gmra.mxu0 %v1703
        %v2115 = vpop.f32.mrf.mxu0
        %v2116 = vadd.f32 %v2032, %v2115
        %v2117 = vpop.f32.mrf.mxu0
        %v2118 = vadd.f32 %v2034, %v2117
        %2119 = vmatmul.bf16.gmra.mxu0 %v1706
        %v2120 = vpop.f32.mrf.mxu0
        %v2121 = vadd.f32 %v2037, %v2120
        %v2122 = vpop.f32.mrf.mxu0
        %v2123 = vadd.f32 %v2039, %v2122
        %2124 = vmatmul.bf16.gmra.mxu0 %v1709
        %v2125 = vpop.f32.mrf.mxu0
        %v2126 = vadd.f32 %v2042, %v2125
        %v2127 = vpop.f32.mrf.mxu0
        %v2128 = vadd.f32 %v2044, %v2127
        %2129 = vmatmul.bf16.gmra.mxu0 %v1711
        %v2130 = vpop.f32.mrf.mxu0
        %v2131 = vadd.f32 %v2047, %v2130
        %v2132 = vpop.f32.mrf.mxu0
        %v2133 = vadd.f32 %v2049, %v2132
        %2134 = vmatmul.bf16.gmra.mxu0 %v1714
        %v2135 = vpop.f32.mrf.mxu0
        %v2136 = vadd.f32 %v2052, %v2135
        %v2137 = vpop.f32.mrf.mxu0
        %v2138 = vadd.f32 %v2054, %v2137
        %2139 = vmatmul.bf16.gmra.mxu0 %v1717
        %v2140 = vpop.f32.mrf.mxu0
        %v2141 = vadd.f32 %v2057, %v2140
        %v2142 = vpop.f32.mrf.mxu0
        %v2143 = vadd.f32 %v2059, %v2142
        %2144 = vmatmul.bf16.gmra.mxu0 %v1719
        %v2145 = vpop.f32.mrf.mxu0
        %v2146 = vadd.f32 %v2062, %v2145
        %v2147 = vpop.f32.mrf.mxu0
        %v2148 = vadd.f32 %v2064, %v2147
        %2149 = vmatmul.bf16.gmra.mxu0 %v1722
        %v2150 = vpop.f32.mrf.mxu0
        %v2151 = vadd.f32 %v2067, %v2150
        %v2152 = vpop.f32.mrf.mxu0
        %v2153 = vadd.f32 %v2069, %v2152
        %2154 = vmatmul.bf16.gmra.mxu0 %v1725
        %v2155 = vpop.f32.mrf.mxu0
        %v2156 = vadd.f32 %v2072, %v2155
        %v2157 = vpop.f32.mrf.mxu0
        %v2158 = vadd.f32 %v2074, %v2157
        %2159 = vmatmul.bf16.gmra.mxu0 %v1727
        %v2160 = vpop.f32.mrf.mxu0
        %v2161 = vadd.f32 %v2077, %v2160
        %v2162 = vpop.f32.mrf.mxu0
        %v2163 = vadd.f32 %v2079, %v2162
        %2164 = vmatmul.bf16.gmra.mxu0 %v1730
        %v2165 = vpop.f32.mrf.mxu0
        %v2166 = vadd.f32 %v2082, %v2165
        %v2167 = vpop.f32.mrf.mxu0
        %v2168 = vadd.f32 %v2084, %v2167
        %2169 = vmatmul.bf16.gmra.mxu0 %v1733
        %v2170 = vpop.f32.mrf.mxu0
        %v2171 = vadd.f32 %v2087, %v2170
        %v2172 = vpop.f32.mrf.mxu0
        %v2173 = vadd.f32 %v2089, %v2172
        %2174 = vdwg.mxu0
        %s2175 = sadd.s32 %s266, 2
        %s2176 = smul.u32 %s2175, 4
        %s2177 = smul.addr %s2176, 4
        %s2178 = scalar_lea.vmem %s229, %s2177 [#allocation3]
        %v2179 = vld [vmem:[%s2178] sm:$0xf]
        %v2180 = vld [vmem:[%s2178 + $0x4] sm:$0xf]
        %v2181 = vld [vmem:[%s2178 + $0x8] sm:$0xf]
        %v2182 = vld [vmem:[%s2178 + $0x10] sm:$0xf]
        %v2183 = vld [vmem:[%s2178 + $0x14] sm:$0xf]
        %v2184 = vld [vmem:[%s2178 + $0x18] sm:$0xf]
        %v2185 = vld [vmem:[%s2178 + $0x20] sm:$0xf]
        %v2186 = vld [vmem:[%s2178 + $0x24] sm:$0xf]
        %v2187 = vld [vmem:[%s2178 + $0x28] sm:$0xf]
        %v2188 = vld [vmem:[%s2178 + $0x30] sm:$0xf]
        %v2189 = vld [vmem:[%s2178 + $0x34] sm:$0xf]
        %v2190 = vld [vmem:[%s2178 + $0x38] sm:$0xf]
        %v2191 = vld [vmem:[%s2178 + $0x40] sm:$0xf]
        %v2192 = vld [vmem:[%s2178 + $0x44] sm:$0xf]
        %v2193 = vld [vmem:[%s2178 + $0x48] sm:$0xf]
        %v2194 = vld [vmem:[%s2178 + $0x50] sm:$0xf]
        %v2195 = vld [vmem:[%s2178 + $0x54] sm:$0xf]
        %v2196 = vld [vmem:[%s2178 + $0x58] sm:$0xf]
        %v2197 = vld [vmem:[%s2178 + $0x60] sm:$0xf]
        %v2198 = vld [vmem:[%s2178 + $0x64] sm:$0xf]
        %v2199 = vld [vmem:[%s2178 + $0x68] sm:$0xf]
        %v2200 = vld [vmem:[%s2178 + $0x70] sm:$0xf]
        %v2201 = vld [vmem:[%s2178 + $0x74] sm:$0xf]
        %v2202 = vld [vmem:[%s2178 + $0x78] sm:$0xf]
        %v2203 = vld [vmem:[%s2178 + $0x80] sm:$0xf]
        %v2204 = vld [vmem:[%s2178 + $0x84] sm:$0xf]
        %v2205 = vld [vmem:[%s2178 + $0x88] sm:$0xf]
        %v2206 = vld [vmem:[%s2178 + $0x90] sm:$0xf]
        %v2207 = vld [vmem:[%s2178 + $0x94] sm:$0xf]
        %v2208 = vld [vmem:[%s2178 + $0x98] sm:$0xf]
        %v2209 = vld [vmem:[%s2178 + $0xc] sm:$0x1]
        %v2210 = vld [vmem:[%s2178 + $0x1c] sm:$0x1]
        %v2211 = vld [vmem:[%s2178 + $0x2c] sm:$0x1]
        %v2212 = vld [vmem:[%s2178 + $0x3c] sm:$0x1]
        %v2213 = vld [vmem:[%s2178 + $0x4c] sm:$0x1]
        %v2214 = vld [vmem:[%s2178 + $0x5c] sm:$0x1]
        %v2215 = vld [vmem:[%s2178 + $0x6c] sm:$0x1]
        %v2216 = vld [vmem:[%s2178 + $0x7c] sm:$0x1]
        %v2217 = vld [vmem:[%s2178 + $0x8c] sm:$0x1]
        %v2218 = vld [vmem:[%s2178 + $0x9c] sm:$0x1]
        %v2219 = vld [vmem:[%s2178] sm:$0xe]
        %v2220 = vld [vmem:[%s2178 + $0x10] sm:$0xe]
        %v2221 = vld [vmem:[%s2178 + $0x20] sm:$0xe]
        %v2222 = vld [vmem:[%s2178 + $0x30] sm:$0xe]
        %v2223 = vld [vmem:[%s2178 + $0x40] sm:$0xe]
        %v2224 = vld [vmem:[%s2178 + $0x50] sm:$0xe]
        %v2225 = vld [vmem:[%s2178 + $0x60] sm:$0xe]
        %v2226 = vld [vmem:[%s2178 + $0x70] sm:$0xe]
        %v2227 = vld [vmem:[%s2178 + $0x80] sm:$0xe]
        %v2228 = vld [vmem:[%s2178 + $0x90] sm:$0xe]
        %v2259 = vunpack.c.l.b16 %v2179
        %v2260 = vunpack.c.l.b16 %v2180
        %v2261 = vunpack.c.l.b16 %v2181
        %v2262 = vunpack.c.l.b16 %v2182
        %v2263 = vunpack.c.l.b16 %v2183
        %v2264 = vunpack.c.l.b16 %v2184
        %v2265 = vunpack.c.l.b16 %v2185
        %v2266 = vunpack.c.l.b16 %v2186
        %v2267 = vunpack.c.l.b16 %v2187
        %v2268 = vunpack.c.l.b16 %v2188
        %v2269 = vunpack.c.l.b16 %v2189
        %v2270 = vunpack.c.l.b16 %v2190
        %v2271 = vunpack.c.l.b16 %v2191
        %v2272 = vunpack.c.l.b16 %v2192
        %v2273 = vunpack.c.l.b16 %v2193
        %v2274 = vunpack.c.l.b16 %v2194
        %v2275 = vunpack.c.l.b16 %v2195
        %v2276 = vunpack.c.l.b16 %v2196
        %v2277 = vunpack.c.l.b16 %v2197
        %v2278 = vunpack.c.l.b16 %v2198
        %v2279 = vunpack.c.l.b16 %v2199
        %v2280 = vunpack.c.l.b16 %v2200
        %v2281 = vunpack.c.l.b16 %v2201
        %v2282 = vunpack.c.l.b16 %v2202
        %v2283 = vunpack.c.l.b16 %v2203
        %v2284 = vunpack.c.l.b16 %v2204
        %v2285 = vunpack.c.l.b16 %v2205
        %v2286 = vunpack.c.l.b16 %v2206
        %v2287 = vunpack.c.l.b16 %v2207
        %v2288 = vunpack.c.l.b16 %v2208
        %v2299 = vunpack.c.l.b16 %v2209
        %v2300 = vunpack.c.l.b16 %v2210
        %v2301 = vunpack.c.l.b16 %v2211
        %v2302 = vunpack.c.l.b16 %v2212
        %v2303 = vunpack.c.l.b16 %v2213
        %v2304 = vunpack.c.l.b16 %v2214
        %v2305 = vunpack.c.l.b16 %v2215
        %v2306 = vunpack.c.l.b16 %v2216
        %v2307 = vunpack.c.l.b16 %v2217
        %v2308 = vunpack.c.l.b16 %v2218
        %v2309 = vpack.c.b16 %v2260, %v2259
        %v2310 = vpack.c.b16 %v2299, %v2261
        %v2311 = vpack.c.b16 %v2263, %v2262
        %v2312 = vpack.c.b16 %v2300, %v2264
        %v2313 = vpack.c.b16 %v2266, %v2265
        %v2314 = vpack.c.b16 %v2301, %v2267
        %v2315 = vpack.c.b16 %v2269, %v2268
        %v2316 = vpack.c.b16 %v2302, %v2270
        %v2317 = vpack.c.b16 %v2272, %v2271
        %v2318 = vpack.c.b16 %v2303, %v2273
        %v2319 = vpack.c.b16 %v2275, %v2274
        %v2320 = vpack.c.b16 %v2304, %v2276
        %v2321 = vpack.c.b16 %v2278, %v2277
        %v2322 = vpack.c.b16 %v2305, %v2279
        %v2323 = vpack.c.b16 %v2281, %v2280
        %v2324 = vpack.c.b16 %v2306, %v2282
        %v2325 = vpack.c.b16 %v2284, %v2283
        %v2326 = vpack.c.b16 %v2307, %v2285
        %v2327 = vpack.c.b16 %v2287, %v2286
        %v2328 = vpack.c.b16 %v2308, %v2288
        %v2330 = vshrl.u32 %v2309, 16
        %v2332 = vshll.u32 %v2309, 16
        %v2334 = vrot.slane %v2332, 1
        %v2335 = vor.u32 %v2330, %v2334
        %v2337 = vshll.u32 %v2310, 16
        %v2339 = vrot.slane %v2337, 1
        %v2340 = vsel %vm420, %v2335, %v2339
        %v2341 = vshrl.u32 %v2310, 16
        %v2343 = vor.u32 %v2341, %v2339
        %v2345 = vshrl.u32 %v2311, 16
        %v2347 = vshll.u32 %v2311, 16
        %v2349 = vrot.slane %v2347, 1
        %v2350 = vor.u32 %v2345, %v2349
        %v2352 = vshll.u32 %v2312, 16
        %v2354 = vrot.slane %v2352, 1
        %v2355 = vsel %vm420, %v2350, %v2354
        %v2356 = vshrl.u32 %v2312, 16
        %v2358 = vor.u32 %v2356, %v2354
        %v2360 = vshrl.u32 %v2313, 16
        %v2362 = vshll.u32 %v2313, 16
        %v2364 = vrot.slane %v2362, 1
        %v2365 = vor.u32 %v2360, %v2364
        %v2367 = vshll.u32 %v2314, 16
        %v2369 = vrot.slane %v2367, 1
        %v2370 = vsel %vm420, %v2365, %v2369
        %v2371 = vshrl.u32 %v2314, 16
        %v2373 = vor.u32 %v2371, %v2369
        %v2375 = vshrl.u32 %v2315, 16
        %v2377 = vshll.u32 %v2315, 16
        %v2379 = vrot.slane %v2377, 1
        %v2380 = vor.u32 %v2375, %v2379
        %v2382 = vshll.u32 %v2316, 16
        %v2384 = vrot.slane %v2382, 1
        %v2385 = vsel %vm420, %v2380, %v2384
        %v2386 = vshrl.u32 %v2316, 16
        %v2388 = vor.u32 %v2386, %v2384
        %v2390 = vshrl.u32 %v2317, 16
        %v2392 = vshll.u32 %v2317, 16
        %v2394 = vrot.slane %v2392, 1
        %v2395 = vor.u32 %v2390, %v2394
        %v2397 = vshll.u32 %v2318, 16
        %v2399 = vrot.slane %v2397, 1
        %v2400 = vsel %vm420, %v2395, %v2399
        %v2401 = vshrl.u32 %v2318, 16
        %v2403 = vor.u32 %v2401, %v2399
        %v2405 = vshrl.u32 %v2319, 16
        %v2407 = vshll.u32 %v2319, 16
        %v2409 = vrot.slane %v2407, 1
        %v2410 = vor.u32 %v2405, %v2409
        %v2412 = vshll.u32 %v2320, 16
        %v2414 = vrot.slane %v2412, 1
        %v2415 = vsel %vm420, %v2410, %v2414
        %v2416 = vshrl.u32 %v2320, 16
        %v2418 = vor.u32 %v2416, %v2414
        %v2420 = vshrl.u32 %v2321, 16
        %v2422 = vshll.u32 %v2321, 16
        %v2424 = vrot.slane %v2422, 1
        %v2425 = vor.u32 %v2420, %v2424
        %v2427 = vshll.u32 %v2322, 16
        %v2429 = vrot.slane %v2427, 1
        %v2430 = vsel %vm420, %v2425, %v2429
        %v2431 = vshrl.u32 %v2322, 16
        %v2433 = vor.u32 %v2431, %v2429
        %v2435 = vshrl.u32 %v2323, 16
        %v2437 = vshll.u32 %v2323, 16
        %v2439 = vrot.slane %v2437, 1
        %v2440 = vor.u32 %v2435, %v2439
        %v2442 = vshll.u32 %v2324, 16
        %v2444 = vrot.slane %v2442, 1
        %v2445 = vsel %vm420, %v2440, %v2444
        %v2446 = vshrl.u32 %v2324, 16
        %v2448 = vor.u32 %v2446, %v2444
        %v2450 = vshrl.u32 %v2325, 16
        %v2452 = vshll.u32 %v2325, 16
        %v2454 = vrot.slane %v2452, 1
        %v2455 = vor.u32 %v2450, %v2454
        %v2457 = vshll.u32 %v2326, 16
        %v2459 = vrot.slane %v2457, 1
        %v2460 = vsel %vm420, %v2455, %v2459
        %v2461 = vshrl.u32 %v2326, 16
        %v2463 = vor.u32 %v2461, %v2459
        %v2465 = vshrl.u32 %v2327, 16
        %v2467 = vshll.u32 %v2327, 16
        %v2469 = vrot.slane %v2467, 1
        %v2470 = vor.u32 %v2465, %v2469
        %v2472 = vshll.u32 %v2328, 16
        %v2474 = vrot.slane %v2472, 1
        %v2475 = vsel %vm420, %v2470, %v2474
        %v2476 = vshrl.u32 %v2328, 16
        %v2478 = vor.u32 %v2476, %v2474
        %v2489 = vunpack.c.l.b16 %v2219
        %v2490 = vunpack.c.l.b16 %v2220
        %v2491 = vunpack.c.l.b16 %v2221
        %v2492 = vunpack.c.l.b16 %v2222
        %v2493 = vunpack.c.l.b16 %v2223
        %v2494 = vunpack.c.l.b16 %v2224
        %v2495 = vunpack.c.l.b16 %v2225
        %v2496 = vunpack.c.l.b16 %v2226
        %v2497 = vunpack.c.l.b16 %v2227
        %v2498 = vunpack.c.l.b16 %v2228
        %v2499 = vpack.c.b16 %v2260, %v2489
        %v2500 = vpack.c.b16 %v2263, %v2490
        %v2501 = vpack.c.b16 %v2266, %v2491
        %v2502 = vpack.c.b16 %v2269, %v2492
        %v2503 = vpack.c.b16 %v2272, %v2493
        %v2504 = vpack.c.b16 %v2275, %v2494
        %v2505 = vpack.c.b16 %v2278, %v2495
        %v2506 = vpack.c.b16 %v2281, %v2496
        %v2507 = vpack.c.b16 %v2284, %v2497
        %v2508 = vpack.c.b16 %v2287, %v2498
        %v2509 = vrot.slane %v2499, 1
        %v2510 = vrot.slane %v2310, 1
        %v2511 = vsel %vm601, %v2509, %v2510
        %v2512 = vrot.slane %v2500, 1
        %v2513 = vrot.slane %v2312, 1
        %v2514 = vsel %vm601, %v2512, %v2513
        %v2515 = vrot.slane %v2501, 1
        %v2516 = vrot.slane %v2314, 1
        %v2517 = vsel %vm601, %v2515, %v2516
        %v2518 = vrot.slane %v2502, 1
        %v2519 = vrot.slane %v2316, 1
        %v2520 = vsel %vm601, %v2518, %v2519
        %v2521 = vrot.slane %v2503, 1
        %v2522 = vrot.slane %v2318, 1
        %v2523 = vsel %vm601, %v2521, %v2522
        %v2524 = vrot.slane %v2504, 1
        %v2525 = vrot.slane %v2320, 1
        %v2526 = vsel %vm601, %v2524, %v2525
        %v2527 = vrot.slane %v2505, 1
        %v2528 = vrot.slane %v2322, 1
        %v2529 = vsel %vm601, %v2527, %v2528
        %v2530 = vrot.slane %v2506, 1
        %v2531 = vrot.slane %v2324, 1
        %v2532 = vsel %vm601, %v2530, %v2531
        %v2533 = vrot.slane %v2507, 1
        %v2534 = vrot.slane %v2326, 1
        %v2535 = vsel %vm601, %v2533, %v2534
        %v2536 = vrot.slane %v2508, 1
        %v2537 = vrot.slane %v2328, 1
        %v2538 = vsel %vm601, %v2536, %v2537
        %v2539 = vunpack.c.l.b16 %v2340
        %v2540 = vunpack.c.l.b16 %v2511
        %v2541 = vunpack.c.h.b16 %v2340
        %v2542 = vunpack.c.h.b16 %v2511
        %v2543 = vunpack.c.l.b16 %v2343
        %v2544 = vunpack.c.l.b16 %v2510
        %v2545 = vunpack.c.l.b16 %v2355
        %v2546 = vunpack.c.l.b16 %v2514
        %v2547 = vunpack.c.h.b16 %v2355
        %v2548 = vunpack.c.h.b16 %v2514
        %v2549 = vunpack.c.l.b16 %v2358
        %v2550 = vunpack.c.l.b16 %v2513
        %v2551 = vunpack.c.l.b16 %v2370
        %v2552 = vunpack.c.l.b16 %v2517
        %v2553 = vunpack.c.h.b16 %v2370
        %v2554 = vunpack.c.h.b16 %v2517
        %v2555 = vunpack.c.l.b16 %v2373
        %v2556 = vunpack.c.l.b16 %v2516
        %v2557 = vunpack.c.l.b16 %v2385
        %v2558 = vunpack.c.l.b16 %v2520
        %v2559 = vunpack.c.h.b16 %v2385
        %v2560 = vunpack.c.h.b16 %v2520
        %v2561 = vunpack.c.l.b16 %v2388
        %v2562 = vunpack.c.l.b16 %v2519
        %v2563 = vunpack.c.l.b16 %v2400
        %v2564 = vunpack.c.l.b16 %v2523
        %v2565 = vunpack.c.h.b16 %v2400
        %v2566 = vunpack.c.h.b16 %v2523
        %v2567 = vunpack.c.l.b16 %v2403
        %v2568 = vunpack.c.l.b16 %v2522
        %v2569 = vunpack.c.l.b16 %v2415
        %v2570 = vunpack.c.l.b16 %v2526
        %v2571 = vunpack.c.h.b16 %v2415
        %v2572 = vunpack.c.h.b16 %v2526
        %v2573 = vunpack.c.l.b16 %v2418
        %v2574 = vunpack.c.l.b16 %v2525
        %v2575 = vunpack.c.l.b16 %v2430
        %v2576 = vunpack.c.l.b16 %v2529
        %v2577 = vunpack.c.h.b16 %v2430
        %v2578 = vunpack.c.h.b16 %v2529
        %v2579 = vunpack.c.l.b16 %v2433
        %v2580 = vunpack.c.l.b16 %v2528
        %v2581 = vunpack.c.l.b16 %v2445
        %v2582 = vunpack.c.l.b16 %v2532
        %v2583 = vunpack.c.h.b16 %v2445
        %v2584 = vunpack.c.h.b16 %v2532
        %v2585 = vunpack.c.l.b16 %v2448
        %v2586 = vunpack.c.l.b16 %v2531
        %v2587 = vunpack.c.l.b16 %v2460
        %v2588 = vunpack.c.l.b16 %v2535
        %v2589 = vunpack.c.h.b16 %v2460
        %v2590 = vunpack.c.h.b16 %v2535
        %v2591 = vunpack.c.l.b16 %v2463
        %v2592 = vunpack.c.l.b16 %v2534
        %v2593 = vunpack.c.l.b16 %v2475
        %v2594 = vunpack.c.l.b16 %v2538
        %v2595 = vunpack.c.h.b16 %v2475
        %v2596 = vunpack.c.h.b16 %v2538
        %v2597 = vunpack.c.l.b16 %v2478
        %v2598 = vunpack.c.l.b16 %v2537
        %s2599 = scalar_lea.vmem [#allocation6], 384
        %v2600 = vld [vmem:[%s2599] sm:$0xf]
        %v2601 = vld [vmem:[%s2599 + $0x4] sm:$0xf]
        %v2602 = vld [vmem:[%s2599 + $0x8] sm:$0xf]
        %v2603 = vld [vmem:[%s2599 + $0xc] sm:$0xf]
        %v2604 = vld [vmem:[%s2599 + $0x10] sm:$0xf]
        %v2605 = vld [vmem:[%s2599 + $0x14] sm:$0xf]
        %v2606 = vld [vmem:[%s2599 + $0x18] sm:$0xf]
        %v2607 = vld [vmem:[%s2599 + $0x1c] sm:$0xf]
        %v2608 = vld [vmem:[%s2599 + $0x20] sm:$0xf]
        %v2609 = vld [vmem:[%s2599 + $0x24] sm:$0xf]
        %v2610 = vld [vmem:[%s2599 + $0x28] sm:$0xf]
        %v2611 = vld [vmem:[%s2599 + $0x2c] sm:$0xf]
        %v2612 = vld [vmem:[%s2599 + $0x30] sm:$0xf]
        %v2613 = vld [vmem:[%s2599 + $0x34] sm:$0xf]
        %v2614 = vld [vmem:[%s2599 + $0x38] sm:$0xf]
        %v2615 = vld [vmem:[%s2599 + $0x3c] sm:$0xf]
        %v2616 = vld [vmem:[%s2599 + $0x40] sm:$0xf]
        %v2617 = vld [vmem:[%s2599 + $0x44] sm:$0xf]
        %v2618 = vld [vmem:[%s2599 + $0x48] sm:$0xf]
        %v2619 = vld [vmem:[%s2599 + $0x4c] sm:$0xf]
        %v2620 = vld [vmem:[%s2599 + $0x50] sm:$0xf]
        %v2621 = vld [vmem:[%s2599 + $0x54] sm:$0xf]
        %v2622 = vld [vmem:[%s2599 + $0x58] sm:$0xf]
        %v2623 = vld [vmem:[%s2599 + $0x5c] sm:$0xf]
        %v2624 = vld [vmem:[%s2599 + $0x60] sm:$0xf]
        %v2625 = vld [vmem:[%s2599 + $0x64] sm:$0xf]
        %v2626 = vld [vmem:[%s2599 + $0x68] sm:$0xf]
        %v2627 = vld [vmem:[%s2599 + $0x6c] sm:$0xf]
        %v2628 = vld [vmem:[%s2599 + $0x70] sm:$0xf]
        %v2629 = vld [vmem:[%s2599 + $0x74] sm:$0xf]
        %v2630 = vld [vmem:[%s2599 + $0x78] sm:$0xf]
        %v2631 = vld [vmem:[%s2599 + $0x7c] sm:$0xf]
        %v2632 = vld [vmem:[%s2599 + $0x80] sm:$0xf]
        %v2633 = vld [vmem:[%s2599 + $0x84] sm:$0xf]
        %v2634 = vld [vmem:[%s2599 + $0x88] sm:$0xf]
        %v2635 = vld [vmem:[%s2599 + $0x8c] sm:$0xf]
        %v2636 = vld [vmem:[%s2599 + $0x90] sm:$0xf]
        %v2637 = vld [vmem:[%s2599 + $0x94] sm:$0xf]
        %v2638 = vld [vmem:[%s2599 + $0x98] sm:$0xf]
        %v2639 = vld [vmem:[%s2599 + $0x9c] sm:$0xf]
        %v2640 = vld [vmem:[%s2599 + $0xa0] sm:$0xf]
        %v2641 = vld [vmem:[%s2599 + $0xa4] sm:$0xf]
        %v2642 = vld [vmem:[%s2599 + $0xa8] sm:$0xf]
        %v2643 = vld [vmem:[%s2599 + $0xac] sm:$0xf]
        %v2644 = vld [vmem:[%s2599 + $0xb0] sm:$0xf]
        %v2645 = vld [vmem:[%s2599 + $0xb4] sm:$0xf]
        %v2646 = vld [vmem:[%s2599 + $0xb8] sm:$0xf]
        %v2647 = vld [vmem:[%s2599 + $0xbc] sm:$0xf]
        %v2648 = vpack.c.b16 %v2541, %v2539
        %v2649 = vpack.c.b16 %v2542, %v2540
        %v2650 = vpack.c.b16 %v2262, %v2261
        %v2651 = vpack.c.b16 %v2545, %v2543
        %v2652 = vpack.c.b16 %v2546, %v2544
        %v2653 = vpack.c.b16 %v2264, %v2263
        %v2654 = vpack.c.b16 %v2549, %v2547
        %v2655 = vpack.c.b16 %v2550, %v2548
        %v2656 = vpack.c.b16 %v2553, %v2551
        %v2657 = vpack.c.b16 %v2554, %v2552
        %v2658 = vpack.c.b16 %v2268, %v2267
        %v2659 = vpack.c.b16 %v2557, %v2555
        %v2660 = vpack.c.b16 %v2558, %v2556
        %v2661 = vpack.c.b16 %v2270, %v2269
        %v2662 = vpack.c.b16 %v2561, %v2559
        %v2663 = vpack.c.b16 %v2562, %v2560
        %v2664 = vpack.c.b16 %v2565, %v2563
        %v2665 = vpack.c.b16 %v2566, %v2564
        %v2666 = vpack.c.b16 %v2274, %v2273
        %v2667 = vpack.c.b16 %v2569, %v2567
        %v2668 = vpack.c.b16 %v2570, %v2568
        %v2669 = vpack.c.b16 %v2276, %v2275
        %v2670 = vpack.c.b16 %v2573, %v2571
        %v2671 = vpack.c.b16 %v2574, %v2572
        %v2672 = vpack.c.b16 %v2577, %v2575
        %v2673 = vpack.c.b16 %v2578, %v2576
        %v2674 = vpack.c.b16 %v2280, %v2279
        %v2675 = vpack.c.b16 %v2581, %v2579
        %v2676 = vpack.c.b16 %v2582, %v2580
        %v2677 = vpack.c.b16 %v2282, %v2281
        %v2678 = vpack.c.b16 %v2585, %v2583
        %v2679 = vpack.c.b16 %v2586, %v2584
        %v2680 = vpack.c.b16 %v2589, %v2587
        %v2681 = vpack.c.b16 %v2590, %v2588
        %v2682 = vpack.c.b16 %v2286, %v2285
        %v2683 = vpack.c.b16 %v2593, %v2591
        %v2684 = vpack.c.b16 %v2594, %v2592
        %v2685 = vpack.c.b16 %v2288, %v2287
        %v2686 = vpack.c.b16 %v2597, %v2595
        %v2687 = vpack.c.b16 %v2598, %v2596
        %v2781 = vunpack.c.l.b16 %v2600
        %v2782 = vunpack.c.l.b16 %v2601
        %v2783 = vunpack.c.l.b16 %v2602
        %v2784 = vunpack.c.l.b16 %v2603
        %v2785 = vunpack.c.l.b16 %v2604
        %v2786 = vunpack.c.l.b16 %v2605
        %v2787 = vunpack.c.l.b16 %v2606
        %v2788 = vunpack.c.l.b16 %v2607
        %v2789 = vunpack.c.l.b16 %v2608
        %v2790 = vunpack.c.l.b16 %v2609
        %v2791 = vunpack.c.l.b16 %v2610
        %v2792 = vunpack.c.l.b16 %v2611
        %v2793 = vunpack.c.l.b16 %v2612
        %v2794 = vunpack.c.l.b16 %v2613
        %v2795 = vunpack.c.l.b16 %v2614
        %v2796 = vunpack.c.l.b16 %v2615
        %v2797 = vunpack.c.l.b16 %v2616
        %v2798 = vunpack.c.l.b16 %v2617
        %v2799 = vunpack.c.l.b16 %v2618
        %v2800 = vunpack.c.l.b16 %v2619
        %v2801 = vunpack.c.l.b16 %v2620
        %v2802 = vunpack.c.l.b16 %v2621
        %v2803 = vunpack.c.l.b16 %v2622
        %v2804 = vunpack.c.l.b16 %v2623
        %v2805 = vunpack.c.l.b16 %v2624
        %v2806 = vunpack.c.l.b16 %v2625
        %v2807 = vunpack.c.l.b16 %v2626
        %v2808 = vunpack.c.l.b16 %v2627
        %v2809 = vunpack.c.l.b16 %v2628
        %v2810 = vunpack.c.l.b16 %v2629
        %v2811 = vunpack.c.l.b16 %v2630
        %v2812 = vunpack.c.l.b16 %v2631
        %v2813 = vunpack.c.l.b16 %v2632
        %v2814 = vunpack.c.l.b16 %v2633
        %v2815 = vunpack.c.l.b16 %v2634
        %v2816 = vunpack.c.l.b16 %v2635
        %v2817 = vunpack.c.l.b16 %v2636
        %v2818 = vunpack.c.l.b16 %v2637
        %v2819 = vunpack.c.l.b16 %v2638
        %v2820 = vunpack.c.l.b16 %v2639
        %v2821 = vunpack.c.l.b16 %v2640
        %v2822 = vunpack.c.l.b16 %v2641
        %v2823 = vunpack.c.l.b16 %v2642
        %v2824 = vunpack.c.l.b16 %v2643
        %v2825 = vunpack.c.l.b16 %v2644
        %v2826 = vunpack.c.l.b16 %v2645
        %v2827 = vunpack.c.l.b16 %v2646
        %v2828 = vunpack.c.l.b16 %v2647
        %v2829 = vpack.c.b16 %v2782, %v2781
        %v2830 = vpack.c.b16 %v2784, %v2783
        %v2831 = vpack.c.b16 %v2786, %v2785
        %v2832 = vpack.c.b16 %v2788, %v2787
        %v2833 = vpack.c.b16 %v2790, %v2789
        %v2834 = vpack.c.b16 %v2792, %v2791
        %v2835 = vpack.c.b16 %v2794, %v2793
        %v2836 = vpack.c.b16 %v2796, %v2795
        %v2837 = vpack.c.b16 %v2798, %v2797
        %v2838 = vpack.c.b16 %v2800, %v2799
        %v2839 = vpack.c.b16 %v2802, %v2801
        %v2840 = vpack.c.b16 %v2804, %v2803
        %v2841 = vpack.c.b16 %v2806, %v2805
        %v2842 = vpack.c.b16 %v2808, %v2807
        %v2843 = vpack.c.b16 %v2810, %v2809
        %v2844 = vpack.c.b16 %v2812, %v2811
        %v2845 = vpack.c.b16 %v2814, %v2813
        %v2846 = vpack.c.b16 %v2816, %v2815
        %v2847 = vpack.c.b16 %v2818, %v2817
        %v2848 = vpack.c.b16 %v2820, %v2819
        %v2849 = vpack.c.b16 %v2822, %v2821
        %v2850 = vpack.c.b16 %v2824, %v2823
        %v2851 = vpack.c.b16 %v2826, %v2825
        %v2852 = vpack.c.b16 %v2828, %v2827
        %2877 = vmatpush.bf16.msra.mxu0 %v2836
        %2878 = vmatpush.bf16.msra.mxu0 %v2835
        %2879 = vmatpush.bf16.msra.mxu0 %v2834
        %2880 = vmatpush.bf16.msra.mxu0 %v2833
        %2881 = vmatpush.bf16.msra.mxu0 %v2832
        %2882 = vmatpush.bf16.msra.mxu0 %v2831
        %2883 = vmatpush.bf16.msra.mxu0 %v2830
        %2884 = vmatpush.bf16.msra.mxu0 %v2829
        %2885 = vmatmul.bf16.gmra.mxu0 %v2309
        %v2886 = vpop.f32.mrf.mxu0
        %v2887 = vadd.f32 0.0, %v2886
        %v2888 = vpop.f32.mrf.mxu0
        %v2889 = vadd.f32 0.0, %v2888
        %2890 = vmatmul.bf16.gmra.mxu0 %v2650
        %v2891 = vpop.f32.mrf.mxu0
        %v2892 = vadd.f32 0.0, %v2891
        %v2893 = vpop.f32.mrf.mxu0
        %v2894 = vadd.f32 0.0, %v2893
        %2895 = vmatmul.bf16.gmra.mxu0 %v2653
        %v2896 = vpop.f32.mrf.mxu0
        %v2897 = vadd.f32 0.0, %v2896
        %v2898 = vpop.f32.mrf.mxu0
        %v2899 = vadd.f32 0.0, %v2898
        %2900 = vmatmul.bf16.gmra.mxu0 %v2313
        %v2901 = vpop.f32.mrf.mxu0
        %v2902 = vadd.f32 0.0, %v2901
        %v2903 = vpop.f32.mrf.mxu0
        %v2904 = vadd.f32 0.0, %v2903
        %2905 = vmatmul.bf16.gmra.mxu0 %v2658
        %v2906 = vpop.f32.mrf.mxu0
        %v2907 = vadd.f32 0.0, %v2906
        %v2908 = vpop.f32.mrf.mxu0
        %v2909 = vadd.f32 0.0, %v2908
        %2910 = vmatmul.bf16.gmra.mxu0 %v2661
        %v2911 = vpop.f32.mrf.mxu0
        %v2912 = vadd.f32 0.0, %v2911
        %v2913 = vpop.f32.mrf.mxu0
        %v2914 = vadd.f32 0.0, %v2913
        %2915 = vmatmul.bf16.gmra.mxu0 %v2317
        %v2916 = vpop.f32.mrf.mxu0
        %v2917 = vadd.f32 0.0, %v2916
        %v2918 = vpop.f32.mrf.mxu0
        %v2919 = vadd.f32 0.0, %v2918
        %2920 = vmatmul.bf16.gmra.mxu0 %v2666
        %v2921 = vpop.f32.mrf.mxu0
        %v2922 = vadd.f32 0.0, %v2921
        %v2923 = vpop.f32.mrf.mxu0
        %v2924 = vadd.f32 0.0, %v2923
        %2925 = vmatmul.bf16.gmra.mxu0 %v2669
        %v2926 = vpop.f32.mrf.mxu0
        %v2927 = vadd.f32 0.0, %v2926
        %v2928 = vpop.f32.mrf.mxu0
        %v2929 = vadd.f32 0.0, %v2928
        %2930 = vmatmul.bf16.gmra.mxu0 %v2321
        %v2931 = vpop.f32.mrf.mxu0
        %v2932 = vadd.f32 0.0, %v2931
        %v2933 = vpop.f32.mrf.mxu0
        %v2934 = vadd.f32 0.0, %v2933
        %2935 = vmatmul.bf16.gmra.mxu0 %v2674
        %v2936 = vpop.f32.mrf.mxu0
        %v2937 = vadd.f32 0.0, %v2936
        %v2938 = vpop.f32.mrf.mxu0
        %v2939 = vadd.f32 0.0, %v2938
        %2940 = vmatmul.bf16.gmra.mxu0 %v2677
        %v2941 = vpop.f32.mrf.mxu0
        %v2942 = vadd.f32 0.0, %v2941
        %v2943 = vpop.f32.mrf.mxu0
        %v2944 = vadd.f32 0.0, %v2943
        %2945 = vmatmul.bf16.gmra.mxu0 %v2325
        %v2946 = vpop.f32.mrf.mxu0
        %v2947 = vadd.f32 0.0, %v2946
        %v2948 = vpop.f32.mrf.mxu0
        %v2949 = vadd.f32 0.0, %v2948
        %2950 = vmatmul.bf16.gmra.mxu0 %v2682
        %v2951 = vpop.f32.mrf.mxu0
        %v2952 = vadd.f32 0.0, %v2951
        %v2953 = vpop.f32.mrf.mxu0
        %v2954 = vadd.f32 0.0, %v2953
        %2955 = vmatmul.bf16.gmra.mxu0 %v2685
        %v2956 = vpop.f32.mrf.mxu0
        %v2957 = vadd.f32 0.0, %v2956
        %v2958 = vpop.f32.mrf.mxu0
        %v2959 = vadd.f32 0.0, %v2958
        %2960 = vdwg.mxu0
        %2961 = vmatpush.bf16.msra.mxu0 %v2844
        %2962 = vmatpush.bf16.msra.mxu0 %v2843
        %2963 = vmatpush.bf16.msra.mxu0 %v2842
        %2964 = vmatpush.bf16.msra.mxu0 %v2841
        %2965 = vmatpush.bf16.msra.mxu0 %v2840
        %2966 = vmatpush.bf16.msra.mxu0 %v2839
        %2967 = vmatpush.bf16.msra.mxu0 %v2838
        %2968 = vmatpush.bf16.msra.mxu0 %v2837
        %2969 = vmatmul.bf16.gmra.mxu0 %v2648
        %v2970 = vpop.f32.mrf.mxu0
        %v2971 = vadd.f32 %v2887, %v2970
        %v2972 = vpop.f32.mrf.mxu0
        %v2973 = vadd.f32 %v2889, %v2972
        %2974 = vmatmul.bf16.gmra.mxu0 %v2651
        %v2975 = vpop.f32.mrf.mxu0
        %v2976 = vadd.f32 %v2892, %v2975
        %v2977 = vpop.f32.mrf.mxu0
        %v2978 = vadd.f32 %v2894, %v2977
        %2979 = vmatmul.bf16.gmra.mxu0 %v2654
        %v2980 = vpop.f32.mrf.mxu0
        %v2981 = vadd.f32 %v2897, %v2980
        %v2982 = vpop.f32.mrf.mxu0
        %v2983 = vadd.f32 %v2899, %v2982
        %2984 = vmatmul.bf16.gmra.mxu0 %v2656
        %v2985 = vpop.f32.mrf.mxu0
        %v2986 = vadd.f32 %v2902, %v2985
        %v2987 = vpop.f32.mrf.mxu0
        %v2988 = vadd.f32 %v2904, %v2987
        %2989 = vmatmul.bf16.gmra.mxu0 %v2659
        %v2990 = vpop.f32.mrf.mxu0
        %v2991 = vadd.f32 %v2907, %v2990
        %v2992 = vpop.f32.mrf.mxu0
        %v2993 = vadd.f32 %v2909, %v2992
        %2994 = vmatmul.bf16.gmra.mxu0 %v2662
        %v2995 = vpop.f32.mrf.mxu0
        %v2996 = vadd.f32 %v2912, %v2995
        %v2997 = vpop.f32.mrf.mxu0
        %v2998 = vadd.f32 %v2914, %v2997
        %2999 = vmatmul.bf16.gmra.mxu0 %v2664
        %v3000 = vpop.f32.mrf.mxu0
        %v3001 = vadd.f32 %v2917, %v3000
        %v3002 = vpop.f32.mrf.mxu0
        %v3003 = vadd.f32 %v2919, %v3002
        %3004 = vmatmul.bf16.gmra.mxu0 %v2667
        %v3005 = vpop.f32.mrf.mxu0
        %v3006 = vadd.f32 %v2922, %v3005
        %v3007 = vpop.f32.mrf.mxu0
        %v3008 = vadd.f32 %v2924, %v3007
        %3009 = vmatmul.bf16.gmra.mxu0 %v2670
        %v3010 = vpop.f32.mrf.mxu0
        %v3011 = vadd.f32 %v2927, %v3010
        %v3012 = vpop.f32.mrf.mxu0
        %v3013 = vadd.f32 %v2929, %v3012
        %3014 = vmatmul.bf16.gmra.mxu0 %v2672
        %v3015 = vpop.f32.mrf.mxu0
        %v3016 = vadd.f32 %v2932, %v3015
        %v3017 = vpop.f32.mrf.mxu0
        %v3018 = vadd.f32 %v2934, %v3017
        %3019 = vmatmul.bf16.gmra.mxu0 %v2675
        %v3020 = vpop.f32.mrf.mxu0
        %v3021 = vadd.f32 %v2937, %v3020
        %v3022 = vpop.f32.mrf.mxu0
        %v3023 = vadd.f32 %v2939, %v3022
        %3024 = vmatmul.bf16.gmra.mxu0 %v2678
        %v3025 = vpop.f32.mrf.mxu0
        %v3026 = vadd.f32 %v2942, %v3025
        %v3027 = vpop.f32.mrf.mxu0
        %v3028 = vadd.f32 %v2944, %v3027
        %3029 = vmatmul.bf16.gmra.mxu0 %v2680
        %v3030 = vpop.f32.mrf.mxu0
        %v3031 = vadd.f32 %v2947, %v3030
        %v3032 = vpop.f32.mrf.mxu0
        %v3033 = vadd.f32 %v2949, %v3032
        %3034 = vmatmul.bf16.gmra.mxu0 %v2683
        %v3035 = vpop.f32.mrf.mxu0
        %v3036 = vadd.f32 %v2952, %v3035
        %v3037 = vpop.f32.mrf.mxu0
        %v3038 = vadd.f32 %v2954, %v3037
        %3039 = vmatmul.bf16.gmra.mxu0 %v2686
        %v3040 = vpop.f32.mrf.mxu0
        %v3041 = vadd.f32 %v2957, %v3040
        %v3042 = vpop.f32.mrf.mxu0
        %v3043 = vadd.f32 %v2959, %v3042
        %3044 = vdwg.mxu0
        %3045 = vmatpush.bf16.msra.mxu0 %v2852
        %3046 = vmatpush.bf16.msra.mxu0 %v2851
        %3047 = vmatpush.bf16.msra.mxu0 %v2850
        %3048 = vmatpush.bf16.msra.mxu0 %v2849
        %3049 = vmatpush.bf16.msra.mxu0 %v2848
        %3050 = vmatpush.bf16.msra.mxu0 %v2847
        %3051 = vmatpush.bf16.msra.mxu0 %v2846
        %3052 = vmatpush.bf16.msra.mxu0 %v2845
        %3053 = vmatmul.bf16.gmra.mxu0 %v2649
        %v3054 = vpop.f32.mrf.mxu0
        %v3055 = vadd.f32 %v2971, %v3054
        %v3056 = vpop.f32.mrf.mxu0
        %v3057 = vadd.f32 %v2973, %v3056
        %3058 = vmatmul.bf16.gmra.mxu0 %v2652
        %v3059 = vpop.f32.mrf.mxu0
        %v3060 = vadd.f32 %v2976, %v3059
        %v3061 = vpop.f32.mrf.mxu0
        %v3062 = vadd.f32 %v2978, %v3061
        %3063 = vmatmul.bf16.gmra.mxu0 %v2655
        %v3064 = vpop.f32.mrf.mxu0
        %v3065 = vadd.f32 %v2981, %v3064
        %v3066 = vpop.f32.mrf.mxu0
        %v3067 = vadd.f32 %v2983, %v3066
        %3068 = vmatmul.bf16.gmra.mxu0 %v2657
        %v3069 = vpop.f32.mrf.mxu0
        %v3070 = vadd.f32 %v2986, %v3069
        %v3071 = vpop.f32.mrf.mxu0
        %v3072 = vadd.f32 %v2988, %v3071
        %3073 = vmatmul.bf16.gmra.mxu0 %v2660
        %v3074 = vpop.f32.mrf.mxu0
        %v3075 = vadd.f32 %v2991, %v3074
        %v3076 = vpop.f32.mrf.mxu0
        %v3077 = vadd.f32 %v2993, %v3076
        %3078 = vmatmul.bf16.gmra.mxu0 %v2663
        %v3079 = vpop.f32.mrf.mxu0
        %v3080 = vadd.f32 %v2996, %v3079
        %v3081 = vpop.f32.mrf.mxu0
        %v3082 = vadd.f32 %v2998, %v3081
        %3083 = vmatmul.bf16.gmra.mxu0 %v2665
        %v3084 = vpop.f32.mrf.mxu0
        %v3085 = vadd.f32 %v3001, %v3084
        %v3086 = vpop.f32.mrf.mxu0
        %v3087 = vadd.f32 %v3003, %v3086
        %3088 = vmatmul.bf16.gmra.mxu0 %v2668
        %v3089 = vpop.f32.mrf.mxu0
        %v3090 = vadd.f32 %v3006, %v3089
        %v3091 = vpop.f32.mrf.mxu0
        %v3092 = vadd.f32 %v3008, %v3091
        %3093 = vmatmul.bf16.gmra.mxu0 %v2671
        %v3094 = vpop.f32.mrf.mxu0
        %v3095 = vadd.f32 %v3011, %v3094
        %v3096 = vpop.f32.mrf.mxu0
        %v3097 = vadd.f32 %v3013, %v3096
        %3098 = vmatmul.bf16.gmra.mxu0 %v2673
        %v3099 = vpop.f32.mrf.mxu0
        %v3100 = vadd.f32 %v3016, %v3099
        %v3101 = vpop.f32.mrf.mxu0
        %v3102 = vadd.f32 %v3018, %v3101
        %3103 = vmatmul.bf16.gmra.mxu0 %v2676
        %v3104 = vpop.f32.mrf.mxu0
        %v3105 = vadd.f32 %v3021, %v3104
        %v3106 = vpop.f32.mrf.mxu0
        %v3107 = vadd.f32 %v3023, %v3106
        %3108 = vmatmul.bf16.gmra.mxu0 %v2679
        %v3109 = vpop.f32.mrf.mxu0
        %v3110 = vadd.f32 %v3026, %v3109
        %v3111 = vpop.f32.mrf.mxu0
        %v3112 = vadd.f32 %v3028, %v3111
        %3113 = vmatmul.bf16.gmra.mxu0 %v2681
        %v3114 = vpop.f32.mrf.mxu0
        %v3115 = vadd.f32 %v3031, %v3114
        %v3116 = vpop.f32.mrf.mxu0
        %v3117 = vadd.f32 %v3033, %v3116
        %3118 = vmatmul.bf16.gmra.mxu0 %v2684
        %v3119 = vpop.f32.mrf.mxu0
        %v3120 = vadd.f32 %v3036, %v3119
        %v3121 = vpop.f32.mrf.mxu0
        %v3122 = vadd.f32 %v3038, %v3121
        %3123 = vmatmul.bf16.gmra.mxu0 %v2687
        %v3124 = vpop.f32.mrf.mxu0
        %v3125 = vadd.f32 %v3041, %v3124
        %v3126 = vpop.f32.mrf.mxu0
        %v3127 = vadd.f32 %v3043, %v3126
        %3128 = vdwg.mxu0
        %v3129 = vadd.f32 %v2101, %v3055
        %v3130 = vadd.f32 %v2103, %v3057
        %v3131 = vadd.f32 %v2106, %v3060
        %v3132 = vadd.f32 %v2108, %v3062
        %v3133 = vadd.f32 %v2111, %v3065
        %v3134 = vadd.f32 %v2113, %v3067
        %v3135 = vadd.f32 %v2116, %v3070
        %v3136 = vadd.f32 %v2118, %v3072
        %v3137 = vadd.f32 %v2121, %v3075
        %v3138 = vadd.f32 %v2123, %v3077
        %v3139 = vadd.f32 %v2126, %v3080
        %v3140 = vadd.f32 %v2128, %v3082
        %v3141 = vadd.f32 %v2131, %v3085
        %v3142 = vadd.f32 %v2133, %v3087
        %v3143 = vadd.f32 %v2136, %v3090
        %v3144 = vadd.f32 %v2138, %v3092
        %v3145 = vadd.f32 %v2141, %v3095
        %v3146 = vadd.f32 %v2143, %v3097
        %v3147 = vadd.f32 %v2146, %v3100
        %v3148 = vadd.f32 %v2148, %v3102
        %v3149 = vadd.f32 %v2151, %v3105
        %v3150 = vadd.f32 %v2153, %v3107
        %v3151 = vadd.f32 %v2156, %v3110
        %v3152 = vadd.f32 %v2158, %v3112
        %v3153 = vadd.f32 %v2161, %v3115
        %v3154 = vadd.f32 %v2163, %v3117
        %v3155 = vadd.f32 %v2166, %v3120
        %v3156 = vadd.f32 %v2168, %v3122
        %v3157 = vadd.f32 %v2171, %v3125
        %v3158 = vadd.f32 %v2173, %v3127
        %v3159 = vstv %s266
        %v3160 = vadd.s32 %v3159, 1
        %v3161 = vadd.s32 %v3159, 2
        %v3162 = vadd.s32 %v3159, 3
        %v3163 = vadd.s32 %v3159, 4
        %v3164 = vadd.s32 %v3159, 5
        %v3165 = vadd.s32 %v3159, 6
        %v3166 = vadd.s32 %v3159, 7
        %v3167 = vadd.s32 %v3159, 8
        %v3168 = vadd.s32 %v3159, 9
        %v3169 = vlaneseq
        %v3170 = vshrl.u32 %v3169, 7
        %v3171 = vadd.s32 %v3170, 8
        %v3172 = vadd.s32 %v3170, 16
        %vm3173 = vcmp.ge.s32.totalorder %v3159, 1
        %vm3174 = vcmp.ge.s32.totalorder %v3160, 1
        %vm3175 = vcmp.ge.s32.totalorder %v3161, 1
        %vm3176 = vcmp.ge.s32.totalorder %v3162, 1
        %vm3177 = vcmp.ge.s32.totalorder %v3163, 1
        %vm3178 = vcmp.ge.s32.totalorder %v3164, 1
        %vm3179 = vcmp.ge.s32.totalorder %v3165, 1
        %vm3180 = vcmp.ge.s32.totalorder %v3166, 1
        %vm3181 = vcmp.ge.s32.totalorder %v3167, 1
        %vm3182 = vcmp.ge.s32.totalorder %v3168, 1
        %vm3183 = vcmp.le.s32.totalorder %v3159, 16
        %vm3184 = vcmp.le.s32.totalorder %v3160, 16
        %vm3185 = vcmp.le.s32.totalorder %v3161, 16
        %vm3186 = vcmp.le.s32.totalorder %v3162, 16
        %vm3187 = vcmp.le.s32.totalorder %v3163, 16
        %vm3188 = vcmp.le.s32.totalorder %v3164, 16
        %vm3189 = vcmp.le.s32.totalorder %v3165, 16
        %vm3190 = vcmp.le.s32.totalorder %v3166, 16
        %vm3191 = vcmp.le.s32.totalorder %v3167, 16
        %vm3192 = vcmp.le.s32.totalorder %v3168, 16
        %vm3193 = vmand %vm3173, %vm3183
        %vm3194 = vmand %vm3174, %vm3184
        %vm3195 = vmand %vm3175, %vm3185
        %vm3196 = vmand %vm3176, %vm3186
        %vm3197 = vmand %vm3177, %vm3187
        %vm3198 = vmand %vm3178, %vm3188
        %vm3199 = vmand %vm3179, %vm3189
        %vm3200 = vmand %vm3180, %vm3190
        %vm3201 = vmand %vm3181, %vm3191
        %vm3202 = vmand %vm3182, %vm3192
        %vm3203 = vcmp.ge.s32.totalorder %v3170, 1
        %vm3204 = vcmp.ge.s32.totalorder %v3171, 1
        %vm3205 = vcmp.ge.s32.totalorder %v3172, 1
        %vm3206 = vmand %vm3193, %vm3203
        %vm3207 = vmand %vm3193, %vm3204
        %vm3208 = vmand %vm3193, %vm3205
        %vm3209 = vmand %vm3194, %vm3203
        %vm3210 = vmand %vm3194, %vm3204
        %vm3211 = vmand %vm3194, %vm3205
        %vm3212 = vmand %vm3195, %vm3203
        %vm3213 = vmand %vm3195, %vm3204
        %vm3214 = vmand %vm3195, %vm3205
        %vm3215 = vmand %vm3196, %vm3203
        %vm3216 = vmand %vm3196, %vm3204
        %vm3217 = vmand %vm3196, %vm3205
        %vm3218 = vmand %vm3197, %vm3203
        %vm3219 = vmand %vm3197, %vm3204
        %vm3220 = vmand %vm3197, %vm3205
        %vm3221 = vmand %vm3198, %vm3203
        %vm3222 = vmand %vm3198, %vm3204
        %vm3223 = vmand %vm3198, %vm3205
        %vm3224 = vmand %vm3199, %vm3203
        %vm3225 = vmand %vm3199, %vm3204
        %vm3226 = vmand %vm3199, %vm3205
        %vm3227 = vmand %vm3200, %vm3203
        %vm3228 = vmand %vm3200, %vm3204
        %vm3229 = vmand %vm3200, %vm3205
        %vm3230 = vmand %vm3201, %vm3203
        %vm3231 = vmand %vm3201, %vm3204
        %vm3232 = vmand %vm3201, %vm3205
        %vm3233 = vmand %vm3202, %vm3203
        %vm3234 = vmand %vm3202, %vm3204
        %vm3235 = vmand %vm3202, %vm3205
        %vm3236 = vcmp.le.s32.totalorder %v3170, 16
        %vm3237 = vcmp.le.s32.totalorder %v3171, 16
        %vm3238 = vcmp.le.s32.totalorder %v3172, 16
        %vm3239 = vmand %vm3206, %vm3236
        %vm3240 = vmand %vm3207, %vm3237
        %vm3241 = vmand %vm3208, %vm3238
        %vm3242 = vmand %vm3209, %vm3236
        %vm3243 = vmand %vm3210, %vm3237
        %vm3244 = vmand %vm3211, %vm3238
        %vm3245 = vmand %vm3212, %vm3236
        %vm3246 = vmand %vm3213, %vm3237
        %vm3247 = vmand %vm3214, %vm3238
        %vm3248 = vmand %vm3215, %vm3236
        %vm3249 = vmand %vm3216, %vm3237
        %vm3250 = vmand %vm3217, %vm3238
        %vm3251 = vmand %vm3218, %vm3236
        %vm3252 = vmand %vm3219, %vm3237
        %vm3253 = vmand %vm3220, %vm3238
        %vm3254 = vmand %vm3221, %vm3236
        %vm3255 = vmand %vm3222, %vm3237
        %vm3256 = vmand %vm3223, %vm3238
        %vm3257 = vmand %vm3224, %vm3236
        %vm3258 = vmand %vm3225, %vm3237
        %vm3259 = vmand %vm3226, %vm3238
        %vm3260 = vmand %vm3227, %vm3236
        %vm3261 = vmand %vm3228, %vm3237
        %vm3262 = vmand %vm3229, %vm3238
        %vm3263 = vmand %vm3230, %vm3236
        %vm3264 = vmand %vm3231, %vm3237
        %vm3265 = vmand %vm3232, %vm3238
        %vm3266 = vmand %vm3233, %vm3236
        %vm3267 = vmand %vm3234, %vm3237
        %vm3268 = vmand %vm3235, %vm3238
        %v3269 = vld [vmem:[%s3] sm:$0x1]
        %v3270 = vperm.slane %v3269, 0
        %v3271 = vadd.f32 %v3129, %v3270
        %v3272 = vadd.f32 %v3130, %v3270
        %v3273 = vadd.f32 %v3131, %v3270
        %v3274 = vadd.f32 %v3132, %v3270
        %v3275 = vadd.f32 %v3133, %v3270
        %v3276 = vadd.f32 %v3134, %v3270
        %v3277 = vadd.f32 %v3135, %v3270
        %v3278 = vadd.f32 %v3136, %v3270
        %v3279 = vadd.f32 %v3137, %v3270
        %v3280 = vadd.f32 %v3138, %v3270
        %v3281 = vadd.f32 %v3139, %v3270
        %v3282 = vadd.f32 %v3140, %v3270
        %v3283 = vadd.f32 %v3141, %v3270
        %v3284 = vadd.f32 %v3142, %v3270
        %v3285 = vadd.f32 %v3143, %v3270
        %v3286 = vadd.f32 %v3144, %v3270
        %v3287 = vadd.f32 %v3145, %v3270
        %v3288 = vadd.f32 %v3146, %v3270
        %v3289 = vadd.f32 %v3147, %v3270
        %v3290 = vadd.f32 %v3148, %v3270
        %v3291 = vadd.f32 %v3149, %v3270
        %v3292 = vadd.f32 %v3150, %v3270
        %v3293 = vadd.f32 %v3151, %v3270
        %v3294 = vadd.f32 %v3152, %v3270
        %v3295 = vadd.f32 %v3153, %v3270
        %v3296 = vadd.f32 %v3154, %v3270
        %v3297 = vadd.f32 %v3155, %v3270
        %v3298 = vadd.f32 %v3156, %v3270
        %v3299 = vadd.f32 %v3157, %v3270
        %v3300 = vadd.f32 %v3158, %v3270
        %v3301 = vmax.f32 %v3271, 0.0
        %v3302 = vmax.f32 %v3272, 0.0
        %v3303 = vmax.f32 %v3273, 0.0
        %v3304 = vmax.f32 %v3274, 0.0
        %v3305 = vmax.f32 %v3275, 0.0
        %v3306 = vmax.f32 %v3276, 0.0
        %v3307 = vmax.f32 %v3277, 0.0
        %v3308 = vmax.f32 %v3278, 0.0
        %v3309 = vmax.f32 %v3279, 0.0
        %v3310 = vmax.f32 %v3280, 0.0
        %v3311 = vmax.f32 %v3281, 0.0
        %v3312 = vmax.f32 %v3282, 0.0
        %v3313 = vmax.f32 %v3283, 0.0
        %v3314 = vmax.f32 %v3284, 0.0
        %v3315 = vmax.f32 %v3285, 0.0
        %v3316 = vmax.f32 %v3286, 0.0
        %v3317 = vmax.f32 %v3287, 0.0
        %v3318 = vmax.f32 %v3288, 0.0
        %v3319 = vmax.f32 %v3289, 0.0
        %v3320 = vmax.f32 %v3290, 0.0
        %v3321 = vmax.f32 %v3291, 0.0
        %v3322 = vmax.f32 %v3292, 0.0
        %v3323 = vmax.f32 %v3293, 0.0
        %v3324 = vmax.f32 %v3294, 0.0
        %v3325 = vmax.f32 %v3295, 0.0
        %v3326 = vmax.f32 %v3296, 0.0
        %v3327 = vmax.f32 %v3297, 0.0
        %v3328 = vmax.f32 %v3298, 0.0
        %v3329 = vmax.f32 %v3299, 0.0
        %v3330 = vmax.f32 %v3300, 0.0
        %v3331 = vsel %vm3239, %v3301, 0.0
        %v3332 = vsel %vm3240, %v3302, 0.0
        %v3333 = vsel %vm3241, %v3303, 0.0
        %v3334 = vsel %vm3242, %v3304, 0.0
        %v3335 = vsel %vm3243, %v3305, 0.0
        %v3336 = vsel %vm3244, %v3306, 0.0
        %v3337 = vsel %vm3245, %v3307, 0.0
        %v3338 = vsel %vm3246, %v3308, 0.0
        %v3339 = vsel %vm3247, %v3309, 0.0
        %v3340 = vsel %vm3248, %v3310, 0.0
        %v3341 = vsel %vm3249, %v3311, 0.0
        %v3342 = vsel %vm3250, %v3312, 0.0
        %v3343 = vsel %vm3251, %v3313, 0.0
        %v3344 = vsel %vm3252, %v3314, 0.0
        %v3345 = vsel %vm3253, %v3315, 0.0
        %v3346 = vsel %vm3254, %v3316, 0.0
        %v3347 = vsel %vm3255, %v3317, 0.0
        %v3348 = vsel %vm3256, %v3318, 0.0
        %v3349 = vsel %vm3257, %v3319, 0.0
        %v3350 = vsel %vm3258, %v3320, 0.0
        %v3351 = vsel %vm3259, %v3321, 0.0
        %v3352 = vsel %vm3260, %v3322, 0.0
        %v3353 = vsel %vm3261, %v3323, 0.0
        %v3354 = vsel %vm3262, %v3324, 0.0
        %v3355 = vsel %vm3263, %v3325, 0.0
        %v3356 = vsel %vm3264, %v3326, 0.0
        %v3357 = vsel %vm3265, %v3327, 0.0
        %v3358 = vsel %vm3266, %v3328, 0.0
        %v3359 = vsel %vm3267, %v3329, 0.0
        %v3360 = vsel %vm3268, %v3330, 0.0
        %v3361 = vpack.c.bf16 %v3331, %v3331
        %v3362 = vpack.c.bf16 %v3332, %v3332
        %v3363 = vpack.c.bf16 %v3333, %v3333
        %v3364 = vpack.c.bf16 %v3334, %v3334
        %v3365 = vpack.c.bf16 %v3335, %v3335
        %v3366 = vpack.c.bf16 %v3336, %v3336
        %v3367 = vpack.c.bf16 %v3337, %v3337
        %v3368 = vpack.c.bf16 %v3338, %v3338
        %v3369 = vpack.c.bf16 %v3339, %v3339
        %v3370 = vpack.c.bf16 %v3340, %v3340
        %v3371 = vpack.c.bf16 %v3341, %v3341
        %v3372 = vpack.c.bf16 %v3342, %v3342
        %v3373 = vpack.c.bf16 %v3343, %v3343
        %v3374 = vpack.c.bf16 %v3344, %v3344
        %v3375 = vpack.c.bf16 %v3345, %v3345
        %v3376 = vpack.c.bf16 %v3346, %v3346
        %v3377 = vpack.c.bf16 %v3347, %v3347
        %v3378 = vpack.c.bf16 %v3348, %v3348
        %v3379 = vpack.c.bf16 %v3349, %v3349
        %v3380 = vpack.c.bf16 %v3350, %v3350
        %v3381 = vpack.c.bf16 %v3351, %v3351
        %v3382 = vpack.c.bf16 %v3352, %v3352
        %v3383 = vpack.c.bf16 %v3353, %v3353
        %v3384 = vpack.c.bf16 %v3354, %v3354
        %v3385 = vpack.c.bf16 %v3355, %v3355
        %v3386 = vpack.c.bf16 %v3356, %v3356
        %v3387 = vpack.c.bf16 %v3357, %v3357
        %v3388 = vpack.c.bf16 %v3358, %v3358
        %v3389 = vpack.c.bf16 %v3359, %v3359
        %v3390 = vpack.c.bf16 %v3360, %v3360
        %3391 = vst [vmem:[#allocation2] sm:$0xf] %v3361
        %3392 = vst [vmem:[#allocation2 + $0x4] sm:$0xf] %v3362
        %3393 = vst [vmem:[#allocation2 + $0x8] sm:$0xf] %v3363
        %3394 = vst [vmem:[#allocation2 + $0xc] sm:$0xf] %v3364
        %3395 = vst [vmem:[#allocation2 + $0x10] sm:$0xf] %v3365
        %3396 = vst [vmem:[#allocation2 + $0x14] sm:$0xf] %v3366
        %3397 = vst [vmem:[#allocation2 + $0x18] sm:$0xf] %v3367
        %3398 = vst [vmem:[#allocation2 + $0x1c] sm:$0xf] %v3368
        %3399 = vst [vmem:[#allocation2 + $0x20] sm:$0xf] %v3369
        %3400 = vst [vmem:[#allocation2 + $0x24] sm:$0xf] %v3370
        %3401 = vst [vmem:[#allocation2 + $0x28] sm:$0xf] %v3371
        %3402 = vst [vmem:[#allocation2 + $0x2c] sm:$0xf] %v3372
        %3403 = vst [vmem:[#allocation2 + $0x30] sm:$0xf] %v3373
        %3404 = vst [vmem:[#allocation2 + $0x34] sm:$0xf] %v3374
        %3405 = vst [vmem:[#allocation2 + $0x38] sm:$0xf] %v3375
        %3406 = vst [vmem:[#allocation2 + $0x3c] sm:$0xf] %v3376
        %3407 = vst [vmem:[#allocation2 + $0x40] sm:$0xf] %v3377
        %3408 = vst [vmem:[#allocation2 + $0x44] sm:$0xf] %v3378
        %3409 = vst [vmem:[#allocation2 + $0x48] sm:$0xf] %v3379
        %3410 = vst [vmem:[#allocation2 + $0x4c] sm:$0xf] %v3380
        %3411 = vst [vmem:[#allocation2 + $0x50] sm:$0xf] %v3381
        %3412 = vst [vmem:[#allocation2 + $0x54] sm:$0xf] %v3382
        %3413 = vst [vmem:[#allocation2 + $0x58] sm:$0xf] %v3383
        %3414 = vst [vmem:[#allocation2 + $0x5c] sm:$0xf] %v3384
        %3415 = vst [vmem:[#allocation2 + $0x60] sm:$0xf] %v3385
        %3416 = vst [vmem:[#allocation2 + $0x64] sm:$0xf] %v3386
        %3417 = vst [vmem:[#allocation2 + $0x68] sm:$0xf] %v3387
        %3418 = vst [vmem:[#allocation2 + $0x6c] sm:$0xf] %v3388
        %3419 = vst [vmem:[#allocation2 + $0x70] sm:$0xf] %v3389
        %3420 = vst [vmem:[#allocation2 + $0x74] sm:$0xf] %v3390
        %v3421 = vld [vmem:[#allocation2] sm:$0xf]
        %v3422 = vld [vmem:[#allocation2 + $0x4] sm:$0xf]
        %v3423 = vld [vmem:[#allocation2 + $0xc] sm:$0xf]
        %v3424 = vld [vmem:[#allocation2 + $0x10] sm:$0xf]
        %v3425 = vld [vmem:[#allocation2 + $0x18] sm:$0xf]
        %v3426 = vld [vmem:[#allocation2 + $0x1c] sm:$0xf]
        %v3427 = vld [vmem:[#allocation2 + $0x24] sm:$0xf]
        %v3428 = vld [vmem:[#allocation2 + $0x28] sm:$0xf]
        %v3429 = vld [vmem:[#allocation2 + $0x30] sm:$0xf]
        %v3430 = vld [vmem:[#allocation2 + $0x34] sm:$0xf]
        %v3431 = vld [vmem:[#allocation2 + $0x3c] sm:$0xf]
        %v3432 = vld [vmem:[#allocation2 + $0x40] sm:$0xf]
        %v3433 = vld [vmem:[#allocation2 + $0x48] sm:$0xf]
        %v3434 = vld [vmem:[#allocation2 + $0x4c] sm:$0xf]
        %v3435 = vld [vmem:[#allocation2 + $0x54] sm:$0xf]
        %v3436 = vld [vmem:[#allocation2 + $0x58] sm:$0xf]
        %v3437 = vld [vmem:[#allocation2 + $0x8] sm:$0x1]
        %v3438 = vld [vmem:[#allocation2 + $0x14] sm:$0x1]
        %v3439 = vld [vmem:[#allocation2 + $0x20] sm:$0x1]
        %v3440 = vld [vmem:[#allocation2 + $0x2c] sm:$0x1]
        %v3441 = vld [vmem:[#allocation2 + $0x38] sm:$0x1]
        %v3442 = vld [vmem:[#allocation2 + $0x44] sm:$0x1]
        %v3443 = vld [vmem:[#allocation2 + $0x50] sm:$0x1]
        %v3444 = vld [vmem:[#allocation2 + $0x5c] sm:$0x1]
        %v3445 = vld [vmem:[#allocation2] sm:$0xe]
        %v3446 = vld [vmem:[#allocation2 + $0xc] sm:$0xe]
        %v3447 = vld [vmem:[#allocation2 + $0x18] sm:$0xe]
        %v3448 = vld [vmem:[#allocation2 + $0x24] sm:$0xe]
        %v3449 = vld [vmem:[#allocation2 + $0x30] sm:$0xe]
        %v3450 = vld [vmem:[#allocation2 + $0x3c] sm:$0xe]
        %v3451 = vld [vmem:[#allocation2 + $0x48] sm:$0xe]
        %v3452 = vld [vmem:[#allocation2 + $0x54] sm:$0xe]
        %v3469 = vunpack.c.l.b16 %v3421
        %v3470 = vunpack.c.l.b16 %v3422
        %v3471 = vunpack.c.l.b16 %v3423
        %v3472 = vunpack.c.l.b16 %v3424
        %v3473 = vunpack.c.l.b16 %v3425
        %v3474 = vunpack.c.l.b16 %v3426
        %v3475 = vunpack.c.l.b16 %v3427
        %v3476 = vunpack.c.l.b16 %v3428
        %v3477 = vunpack.c.l.b16 %v3429
        %v3478 = vunpack.c.l.b16 %v3430
        %v3479 = vunpack.c.l.b16 %v3431
        %v3480 = vunpack.c.l.b16 %v3432
        %v3481 = vunpack.c.l.b16 %v3433
        %v3482 = vunpack.c.l.b16 %v3434
        %v3483 = vunpack.c.l.b16 %v3435
        %v3484 = vunpack.c.l.b16 %v3436
        %v3485 = vpack.c.b16 %v3470, %v3469
        %v3486 = vpack.c.b16 %v3472, %v3471
        %v3487 = vpack.c.b16 %v3474, %v3473
        %v3488 = vpack.c.b16 %v3476, %v3475
        %v3489 = vpack.c.b16 %v3478, %v3477
        %v3490 = vpack.c.b16 %v3480, %v3479
        %v3491 = vpack.c.b16 %v3482, %v3481
        %v3492 = vpack.c.b16 %v3484, %v3483
        %v3509 = vunpack.c.l.b16 %v3437
        %v3510 = vunpack.c.l.b16 %v3438
        %v3511 = vunpack.c.l.b16 %v3439
        %v3512 = vunpack.c.l.b16 %v3440
        %v3513 = vunpack.c.l.b16 %v3441
        %v3514 = vunpack.c.l.b16 %v3442
        %v3515 = vunpack.c.l.b16 %v3443
        %v3516 = vunpack.c.l.b16 %v3444
        %v3517 = vpack.c.b16 %v3509, %v3509
        %v3518 = vpack.c.b16 %v3510, %v3510
        %v3519 = vpack.c.b16 %v3511, %v3511
        %v3520 = vpack.c.b16 %v3512, %v3512
        %v3521 = vpack.c.b16 %v3513, %v3513
        %v3522 = vpack.c.b16 %v3514, %v3514
        %v3523 = vpack.c.b16 %v3515, %v3515
        %v3524 = vpack.c.b16 %v3516, %v3516
        %v3526 = vshrl.u32 %v3485, 16
        %v3528 = vshll.u32 %v3485, 16
        %v3530 = vrot.slane %v3528, 1
        %v3531 = vor.u32 %v3526, %v3530
        %v3533 = vshll.u32 %v3517, 16
        %v3535 = vrot.slane %v3533, 1
        %v3536 = vsel %vm420, %v3531, %v3535
        %v3538 = vshrl.u32 %v3486, 16
        %v3540 = vshll.u32 %v3486, 16
        %v3542 = vrot.slane %v3540, 1
        %v3543 = vor.u32 %v3538, %v3542
        %v3545 = vshll.u32 %v3518, 16
        %v3547 = vrot.slane %v3545, 1
        %v3548 = vsel %vm420, %v3543, %v3547
        %v3550 = vshrl.u32 %v3487, 16
        %v3552 = vshll.u32 %v3487, 16
        %v3554 = vrot.slane %v3552, 1
        %v3555 = vor.u32 %v3550, %v3554
        %v3557 = vshll.u32 %v3519, 16
        %v3559 = vrot.slane %v3557, 1
        %v3560 = vsel %vm420, %v3555, %v3559
        %v3562 = vshrl.u32 %v3488, 16
        %v3564 = vshll.u32 %v3488, 16
        %v3566 = vrot.slane %v3564, 1
        %v3567 = vor.u32 %v3562, %v3566
        %v3569 = vshll.u32 %v3520, 16
        %v3571 = vrot.slane %v3569, 1
        %v3572 = vsel %vm420, %v3567, %v3571
        %v3574 = vshrl.u32 %v3489, 16
        %v3576 = vshll.u32 %v3489, 16
        %v3578 = vrot.slane %v3576, 1
        %v3579 = vor.u32 %v3574, %v3578
        %v3581 = vshll.u32 %v3521, 16
        %v3583 = vrot.slane %v3581, 1
        %v3584 = vsel %vm420, %v3579, %v3583
        %v3586 = vshrl.u32 %v3490, 16
        %v3588 = vshll.u32 %v3490, 16
        %v3590 = vrot.slane %v3588, 1
        %v3591 = vor.u32 %v3586, %v3590
        %v3593 = vshll.u32 %v3522, 16
        %v3595 = vrot.slane %v3593, 1
        %v3596 = vsel %vm420, %v3591, %v3595
        %v3598 = vshrl.u32 %v3491, 16
        %v3600 = vshll.u32 %v3491, 16
        %v3602 = vrot.slane %v3600, 1
        %v3603 = vor.u32 %v3598, %v3602
        %v3605 = vshll.u32 %v3523, 16
        %v3607 = vrot.slane %v3605, 1
        %v3608 = vsel %vm420, %v3603, %v3607
        %v3610 = vshrl.u32 %v3492, 16
        %v3612 = vshll.u32 %v3492, 16
        %v3614 = vrot.slane %v3612, 1
        %v3615 = vor.u32 %v3610, %v3614
        %v3617 = vshll.u32 %v3524, 16
        %v3619 = vrot.slane %v3617, 1
        %v3620 = vsel %vm420, %v3615, %v3619
        %v3637 = vunpack.c.l.b16 %v3445
        %v3638 = vunpack.c.l.b16 %v3446
        %v3639 = vunpack.c.l.b16 %v3447
        %v3640 = vunpack.c.l.b16 %v3448
        %v3641 = vunpack.c.l.b16 %v3449
        %v3642 = vunpack.c.l.b16 %v3450
        %v3643 = vunpack.c.l.b16 %v3451
        %v3644 = vunpack.c.l.b16 %v3452
        %v3645 = vpack.c.b16 %v3470, %v3637
        %v3646 = vpack.c.b16 %v3472, %v3638
        %v3647 = vpack.c.b16 %v3474, %v3639
        %v3648 = vpack.c.b16 %v3476, %v3640
        %v3649 = vpack.c.b16 %v3478, %v3641
        %v3650 = vpack.c.b16 %v3480, %v3642
        %v3651 = vpack.c.b16 %v3482, %v3643
        %v3652 = vpack.c.b16 %v3484, %v3644
        %v3653 = vrot.slane %v3645, 1
        %v3654 = vrot.slane %v3517, 1
        %v3655 = vsel %vm601, %v3653, %v3654
        %v3656 = vrot.slane %v3646, 1
        %v3657 = vrot.slane %v3518, 1
        %v3658 = vsel %vm601, %v3656, %v3657
        %v3659 = vrot.slane %v3647, 1
        %v3660 = vrot.slane %v3519, 1
        %v3661 = vsel %vm601, %v3659, %v3660
        %v3662 = vrot.slane %v3648, 1
        %v3663 = vrot.slane %v3520, 1
        %v3664 = vsel %vm601, %v3662, %v3663
        %v3665 = vrot.slane %v3649, 1
        %v3666 = vrot.slane %v3521, 1
        %v3667 = vsel %vm601, %v3665, %v3666
        %v3668 = vrot.slane %v3650, 1
        %v3669 = vrot.slane %v3522, 1
        %v3670 = vsel %vm601, %v3668, %v3669
        %v3671 = vrot.slane %v3651, 1
        %v3672 = vrot.slane %v3523, 1
        %v3673 = vsel %vm601, %v3671, %v3672
        %v3674 = vrot.slane %v3652, 1
        %v3675 = vrot.slane %v3524, 1
        %v3676 = vsel %vm601, %v3674, %v3675
        %v3685 = vld [vmem:[#allocation8] sm:$0xf]
        %v3686 = vld [vmem:[#allocation8 + $0x4] sm:$0xf]
        %v3687 = vld [vmem:[#allocation8 + $0x8] sm:$0xf]
        %v3688 = vld [vmem:[#allocation8 + $0xc] sm:$0xf]
        %v3689 = vld [vmem:[#allocation8 + $0x10] sm:$0xf]
        %v3690 = vld [vmem:[#allocation8 + $0x14] sm:$0xf]
        %v3691 = vld [vmem:[#allocation8 + $0x18] sm:$0xf]
        %v3692 = vld [vmem:[#allocation8 + $0x1c] sm:$0xf]
        %v3693 = vld [vmem:[#allocation8 + $0x20] sm:$0xf]
        %v3694 = vld [vmem:[#allocation8 + $0x24] sm:$0xf]
        %v3695 = vld [vmem:[#allocation8 + $0x28] sm:$0xf]
        %v3696 = vld [vmem:[#allocation8 + $0x2c] sm:$0xf]
        %v3697 = vld [vmem:[#allocation8 + $0x30] sm:$0xf]
        %v3698 = vld [vmem:[#allocation8 + $0x34] sm:$0xf]
        %v3699 = vld [vmem:[#allocation8 + $0x38] sm:$0xf]
        %v3700 = vld [vmem:[#allocation8 + $0x3c] sm:$0xf]
        %v3701 = vld [vmem:[#allocation8 + $0x40] sm:$0xf]
        %v3702 = vld [vmem:[#allocation8 + $0x44] sm:$0xf]
        %v3703 = vld [vmem:[#allocation8 + $0x48] sm:$0xf]
        %v3704 = vld [vmem:[#allocation8 + $0x4c] sm:$0xf]
        %v3705 = vld [vmem:[#allocation8 + $0x50] sm:$0xf]
        %v3706 = vld [vmem:[#allocation8 + $0x54] sm:$0xf]
        %v3707 = vld [vmem:[#allocation8 + $0x58] sm:$0xf]
        %v3708 = vld [vmem:[#allocation8 + $0x5c] sm:$0xf]
        %v3709 = vld [vmem:[#allocation8 + $0x60] sm:$0xf]
        %v3710 = vld [vmem:[#allocation8 + $0x64] sm:$0xf]
        %v3711 = vld [vmem:[#allocation8 + $0x68] sm:$0xf]
        %v3712 = vld [vmem:[#allocation8 + $0x6c] sm:$0xf]
        %v3713 = vld [vmem:[#allocation8 + $0x70] sm:$0xf]
        %v3714 = vld [vmem:[#allocation8 + $0x74] sm:$0xf]
        %v3715 = vld [vmem:[#allocation8 + $0x78] sm:$0xf]
        %v3716 = vld [vmem:[#allocation8 + $0x7c] sm:$0xf]
        %v3717 = vld [vmem:[#allocation8 + $0x80] sm:$0xf]
        %v3718 = vld [vmem:[#allocation8 + $0x84] sm:$0xf]
        %v3719 = vld [vmem:[#allocation8 + $0x88] sm:$0xf]
        %v3720 = vld [vmem:[#allocation8 + $0x8c] sm:$0xf]
        %v3721 = vld [vmem:[#allocation8 + $0x90] sm:$0xf]
        %v3722 = vld [vmem:[#allocation8 + $0x94] sm:$0xf]
        %v3723 = vld [vmem:[#allocation8 + $0x98] sm:$0xf]
        %v3724 = vld [vmem:[#allocation8 + $0x9c] sm:$0xf]
        %v3725 = vld [vmem:[#allocation8 + $0xa0] sm:$0xf]
        %v3726 = vld [vmem:[#allocation8 + $0xa4] sm:$0xf]
        %v3727 = vld [vmem:[#allocation8 + $0xa8] sm:$0xf]
        %v3728 = vld [vmem:[#allocation8 + $0xac] sm:$0xf]
        %v3729 = vld [vmem:[#allocation8 + $0xb0] sm:$0xf]
        %v3730 = vld [vmem:[#allocation8 + $0xb4] sm:$0xf]
        %v3731 = vld [vmem:[#allocation8 + $0xb8] sm:$0xf]
        %v3732 = vld [vmem:[#allocation8 + $0xbc] sm:$0xf]
        %s3733 = scalar_lea.vmem [#allocation2], 12
        %v3734 = vld [vmem:[%s3733] sm:$0xf]
        %v3735 = vld [vmem:[%s3733 + $0x4] sm:$0xf]
        %v3736 = vld [vmem:[%s3733 + $0xc] sm:$0xf]
        %v3737 = vld [vmem:[%s3733 + $0x10] sm:$0xf]
        %v3738 = vld [vmem:[%s3733 + $0x18] sm:$0xf]
        %v3739 = vld [vmem:[%s3733 + $0x1c] sm:$0xf]
        %v3740 = vld [vmem:[%s3733 + $0x24] sm:$0xf]
        %v3741 = vld [vmem:[%s3733 + $0x28] sm:$0xf]
        %v3742 = vld [vmem:[%s3733 + $0x30] sm:$0xf]
        %v3743 = vld [vmem:[%s3733 + $0x34] sm:$0xf]
        %v3744 = vld [vmem:[%s3733 + $0x3c] sm:$0xf]
        %v3745 = vld [vmem:[%s3733 + $0x40] sm:$0xf]
        %v3746 = vld [vmem:[%s3733 + $0x48] sm:$0xf]
        %v3747 = vld [vmem:[%s3733 + $0x4c] sm:$0xf]
        %v3748 = vld [vmem:[%s3733 + $0x54] sm:$0xf]
        %v3749 = vld [vmem:[%s3733 + $0x58] sm:$0xf]
        %v3750 = vld [vmem:[%s3733 + $0x8] sm:$0x1]
        %v3751 = vld [vmem:[%s3733 + $0x14] sm:$0x1]
        %v3752 = vld [vmem:[%s3733 + $0x20] sm:$0x1]
        %v3753 = vld [vmem:[%s3733 + $0x2c] sm:$0x1]
        %v3754 = vld [vmem:[%s3733 + $0x38] sm:$0x1]
        %v3755 = vld [vmem:[%s3733 + $0x44] sm:$0x1]
        %v3756 = vld [vmem:[%s3733 + $0x50] sm:$0x1]
        %v3757 = vld [vmem:[%s3733 + $0x5c] sm:$0x1]
        %v3758 = vld [vmem:[%s3733] sm:$0xe]
        %v3759 = vld [vmem:[%s3733 + $0xc] sm:$0xe]
        %v3760 = vld [vmem:[%s3733 + $0x18] sm:$0xe]
        %v3761 = vld [vmem:[%s3733 + $0x24] sm:$0xe]
        %v3762 = vld [vmem:[%s3733 + $0x30] sm:$0xe]
        %v3763 = vld [vmem:[%s3733 + $0x3c] sm:$0xe]
        %v3764 = vld [vmem:[%s3733 + $0x48] sm:$0xe]
        %v3765 = vld [vmem:[%s3733 + $0x54] sm:$0xe]
        %v3782 = vunpack.c.l.b16 %v3734
        %v3783 = vunpack.c.l.b16 %v3735
        %v3784 = vunpack.c.l.b16 %v3736
        %v3785 = vunpack.c.l.b16 %v3737
        %v3786 = vunpack.c.l.b16 %v3738
        %v3787 = vunpack.c.l.b16 %v3739
        %v3788 = vunpack.c.l.b16 %v3740
        %v3789 = vunpack.c.l.b16 %v3741
        %v3790 = vunpack.c.l.b16 %v3742
        %v3791 = vunpack.c.l.b16 %v3743
        %v3792 = vunpack.c.l.b16 %v3744
        %v3793 = vunpack.c.l.b16 %v3745
        %v3794 = vunpack.c.l.b16 %v3746
        %v3795 = vunpack.c.l.b16 %v3747
        %v3796 = vunpack.c.l.b16 %v3748
        %v3797 = vunpack.c.l.b16 %v3749
        %v3798 = vpack.c.b16 %v3783, %v3782
        %v3799 = vpack.c.b16 %v3785, %v3784
        %v3800 = vpack.c.b16 %v3787, %v3786
        %v3801 = vpack.c.b16 %v3789, %v3788
        %v3802 = vpack.c.b16 %v3791, %v3790
        %v3803 = vpack.c.b16 %v3793, %v3792
        %v3804 = vpack.c.b16 %v3795, %v3794
        %v3805 = vpack.c.b16 %v3797, %v3796
        %v3822 = vunpack.c.l.b16 %v3750
        %v3823 = vunpack.c.l.b16 %v3751
        %v3824 = vunpack.c.l.b16 %v3752
        %v3825 = vunpack.c.l.b16 %v3753
        %v3826 = vunpack.c.l.b16 %v3754
        %v3827 = vunpack.c.l.b16 %v3755
        %v3828 = vunpack.c.l.b16 %v3756
        %v3829 = vunpack.c.l.b16 %v3757
        %v3830 = vpack.c.b16 %v3822, %v3822
        %v3831 = vpack.c.b16 %v3823, %v3823
        %v3832 = vpack.c.b16 %v3824, %v3824
        %v3833 = vpack.c.b16 %v3825, %v3825
        %v3834 = vpack.c.b16 %v3826, %v3826
        %v3835 = vpack.c.b16 %v3827, %v3827
        %v3836 = vpack.c.b16 %v3828, %v3828
        %v3837 = vpack.c.b16 %v3829, %v3829
        %v3839 = vshrl.u32 %v3798, 16
        %v3841 = vshll.u32 %v3798, 16
        %v3843 = vrot.slane %v3841, 1
        %v3844 = vor.u32 %v3839, %v3843
        %v3846 = vshll.u32 %v3830, 16
        %v3848 = vrot.slane %v3846, 1
        %v3849 = vsel %vm420, %v3844, %v3848
        %v3851 = vshrl.u32 %v3799, 16
        %v3853 = vshll.u32 %v3799, 16
        %v3855 = vrot.slane %v3853, 1
        %v3856 = vor.u32 %v3851, %v3855
        %v3858 = vshll.u32 %v3831, 16
        %v3860 = vrot.slane %v3858, 1
        %v3861 = vsel %vm420, %v3856, %v3860
        %v3863 = vshrl.u32 %v3800, 16
        %v3865 = vshll.u32 %v3800, 16
        %v3867 = vrot.slane %v3865, 1
        %v3868 = vor.u32 %v3863, %v3867
        %v3870 = vshll.u32 %v3832, 16
        %v3872 = vrot.slane %v3870, 1
        %v3873 = vsel %vm420, %v3868, %v3872
        %v3875 = vshrl.u32 %v3801, 16
        %v3877 = vshll.u32 %v3801, 16
        %v3879 = vrot.slane %v3877, 1
        %v3880 = vor.u32 %v3875, %v3879
        %v3882 = vshll.u32 %v3833, 16
        %v3884 = vrot.slane %v3882, 1
        %v3885 = vsel %vm420, %v3880, %v3884
        %v3887 = vshrl.u32 %v3802, 16
        %v3889 = vshll.u32 %v3802, 16
        %v3891 = vrot.slane %v3889, 1
        %v3892 = vor.u32 %v3887, %v3891
        %v3894 = vshll.u32 %v3834, 16
        %v3896 = vrot.slane %v3894, 1
        %v3897 = vsel %vm420, %v3892, %v3896
        %v3899 = vshrl.u32 %v3803, 16
        %v3901 = vshll.u32 %v3803, 16
        %v3903 = vrot.slane %v3901, 1
        %v3904 = vor.u32 %v3899, %v3903
        %v3906 = vshll.u32 %v3835, 16
        %v3908 = vrot.slane %v3906, 1
        %v3909 = vsel %vm420, %v3904, %v3908
        %v3911 = vshrl.u32 %v3804, 16
        %v3913 = vshll.u32 %v3804, 16
        %v3915 = vrot.slane %v3913, 1
        %v3916 = vor.u32 %v3911, %v3915
        %v3918 = vshll.u32 %v3836, 16
        %v3920 = vrot.slane %v3918, 1
        %v3921 = vsel %vm420, %v3916, %v3920
        %v3923 = vshrl.u32 %v3805, 16
        %v3925 = vshll.u32 %v3805, 16
        %v3927 = vrot.slane %v3925, 1
        %v3928 = vor.u32 %v3923, %v3927
        %v3930 = vshll.u32 %v3837, 16
        %v3932 = vrot.slane %v3930, 1
        %v3933 = vsel %vm420, %v3928, %v3932
        %v3950 = vunpack.c.l.b16 %v3758
        %v3951 = vunpack.c.l.b16 %v3759
        %v3952 = vunpack.c.l.b16 %v3760
        %v3953 = vunpack.c.l.b16 %v3761
        %v3954 = vunpack.c.l.b16 %v3762
        %v3955 = vunpack.c.l.b16 %v3763
        %v3956 = vunpack.c.l.b16 %v3764
        %v3957 = vunpack.c.l.b16 %v3765
        %v3958 = vpack.c.b16 %v3783, %v3950
        %v3959 = vpack.c.b16 %v3785, %v3951
        %v3960 = vpack.c.b16 %v3787, %v3952
        %v3961 = vpack.c.b16 %v3789, %v3953
        %v3962 = vpack.c.b16 %v3791, %v3954
        %v3963 = vpack.c.b16 %v3793, %v3955
        %v3964 = vpack.c.b16 %v3795, %v3956
        %v3965 = vpack.c.b16 %v3797, %v3957
        %v3966 = vrot.slane %v3958, 1
        %v3967 = vrot.slane %v3830, 1
        %v3968 = vsel %vm601, %v3966, %v3967
        %v3969 = vrot.slane %v3959, 1
        %v3970 = vrot.slane %v3831, 1
        %v3971 = vsel %vm601, %v3969, %v3970
        %v3972 = vrot.slane %v3960, 1
        %v3973 = vrot.slane %v3832, 1
        %v3974 = vsel %vm601, %v3972, %v3973
        %v3975 = vrot.slane %v3961, 1
        %v3976 = vrot.slane %v3833, 1
        %v3977 = vsel %vm601, %v3975, %v3976
        %v3978 = vrot.slane %v3962, 1
        %v3979 = vrot.slane %v3834, 1
        %v3980 = vsel %vm601, %v3978, %v3979
        %v3981 = vrot.slane %v3963, 1
        %v3982 = vrot.slane %v3835, 1
        %v3983 = vsel %vm601, %v3981, %v3982
        %v3984 = vrot.slane %v3964, 1
        %v3985 = vrot.slane %v3836, 1
        %v3986 = vsel %vm601, %v3984, %v3985
        %v3987 = vrot.slane %v3965, 1
        %v3988 = vrot.slane %v3837, 1
        %v3989 = vsel %vm601, %v3987, %v3988
        %s3998 = scalar_lea.vmem [#allocation8], 192
        %v3999 = vld [vmem:[%s3998] sm:$0xf]
        %v4000 = vld [vmem:[%s3998 + $0x4] sm:$0xf]
        %v4001 = vld [vmem:[%s3998 + $0x8] sm:$0xf]
        %v4002 = vld [vmem:[%s3998 + $0xc] sm:$0xf]
        %v4003 = vld [vmem:[%s3998 + $0x10] sm:$0xf]
        %v4004 = vld [vmem:[%s3998 + $0x14] sm:$0xf]
        %v4005 = vld [vmem:[%s3998 + $0x18] sm:$0xf]
        %v4006 = vld [vmem:[%s3998 + $0x1c] sm:$0xf]
        %v4007 = vld [vmem:[%s3998 + $0x20] sm:$0xf]
        %v4008 = vld [vmem:[%s3998 + $0x24] sm:$0xf]
        %v4009 = vld [vmem:[%s3998 + $0x28] sm:$0xf]
        %v4010 = vld [vmem:[%s3998 + $0x2c] sm:$0xf]
        %v4011 = vld [vmem:[%s3998 + $0x30] sm:$0xf]
        %v4012 = vld [vmem:[%s3998 + $0x34] sm:$0xf]
        %v4013 = vld [vmem:[%s3998 + $0x38] sm:$0xf]
        %v4014 = vld [vmem:[%s3998 + $0x3c] sm:$0xf]
        %v4015 = vld [vmem:[%s3998 + $0x40] sm:$0xf]
        %v4016 = vld [vmem:[%s3998 + $0x44] sm:$0xf]
        %v4017 = vld [vmem:[%s3998 + $0x48] sm:$0xf]
        %v4018 = vld [vmem:[%s3998 + $0x4c] sm:$0xf]
        %v4019 = vld [vmem:[%s3998 + $0x50] sm:$0xf]
        %v4020 = vld [vmem:[%s3998 + $0x54] sm:$0xf]
        %v4021 = vld [vmem:[%s3998 + $0x58] sm:$0xf]
        %v4022 = vld [vmem:[%s3998 + $0x5c] sm:$0xf]
        %v4023 = vld [vmem:[%s3998 + $0x60] sm:$0xf]
        %v4024 = vld [vmem:[%s3998 + $0x64] sm:$0xf]
        %v4025 = vld [vmem:[%s3998 + $0x68] sm:$0xf]
        %v4026 = vld [vmem:[%s3998 + $0x6c] sm:$0xf]
        %v4027 = vld [vmem:[%s3998 + $0x70] sm:$0xf]
        %v4028 = vld [vmem:[%s3998 + $0x74] sm:$0xf]
        %v4029 = vld [vmem:[%s3998 + $0x78] sm:$0xf]
        %v4030 = vld [vmem:[%s3998 + $0x7c] sm:$0xf]
        %v4031 = vld [vmem:[%s3998 + $0x80] sm:$0xf]
        %v4032 = vld [vmem:[%s3998 + $0x84] sm:$0xf]
        %v4033 = vld [vmem:[%s3998 + $0x88] sm:$0xf]
        %v4034 = vld [vmem:[%s3998 + $0x8c] sm:$0xf]
        %v4035 = vld [vmem:[%s3998 + $0x90] sm:$0xf]
        %v4036 = vld [vmem:[%s3998 + $0x94] sm:$0xf]
        %v4037 = vld [vmem:[%s3998 + $0x98] sm:$0xf]
        %v4038 = vld [vmem:[%s3998 + $0x9c] sm:$0xf]
        %v4039 = vld [vmem:[%s3998 + $0xa0] sm:$0xf]
        %v4040 = vld [vmem:[%s3998 + $0xa4] sm:$0xf]
        %v4041 = vld [vmem:[%s3998 + $0xa8] sm:$0xf]
        %v4042 = vld [vmem:[%s3998 + $0xac] sm:$0xf]
        %v4043 = vld [vmem:[%s3998 + $0xb0] sm:$0xf]
        %v4044 = vld [vmem:[%s3998 + $0xb4] sm:$0xf]
        %v4045 = vld [vmem:[%s3998 + $0xb8] sm:$0xf]
        %v4046 = vld [vmem:[%s3998 + $0xbc] sm:$0xf]
        %v4095 = vunpack.c.l.b16 %v3999
        %v4096 = vunpack.c.l.b16 %v4000
        %v4097 = vunpack.c.l.b16 %v4001
        %v4098 = vunpack.c.l.b16 %v4002
        %v4099 = vunpack.c.l.b16 %v4003
        %v4100 = vunpack.c.l.b16 %v4004
        %v4101 = vunpack.c.l.b16 %v4005
        %v4102 = vunpack.c.l.b16 %v4006
        %v4103 = vunpack.c.l.b16 %v4007
        %v4104 = vunpack.c.l.b16 %v4008
        %v4105 = vunpack.c.l.b16 %v4009
        %v4106 = vunpack.c.l.b16 %v4010
        %v4107 = vunpack.c.l.b16 %v4011
        %v4108 = vunpack.c.l.b16 %v4012
        %v4109 = vunpack.c.l.b16 %v4013
        %v4110 = vunpack.c.l.b16 %v4014
        %v4111 = vunpack.c.l.b16 %v4015
        %v4112 = vunpack.c.l.b16 %v4016
        %v4113 = vunpack.c.l.b16 %v4017
        %v4114 = vunpack.c.l.b16 %v4018
        %v4115 = vunpack.c.l.b16 %v4019
        %v4116 = vunpack.c.l.b16 %v4020
        %v4117 = vunpack.c.l.b16 %v4021
        %v4118 = vunpack.c.l.b16 %v4022
        %v4119 = vunpack.c.l.b16 %v4023
        %v4120 = vunpack.c.l.b16 %v4024
        %v4121 = vunpack.c.l.b16 %v4025
        %v4122 = vunpack.c.l.b16 %v4026
        %v4123 = vunpack.c.l.b16 %v4027
        %v4124 = vunpack.c.l.b16 %v4028
        %v4125 = vunpack.c.l.b16 %v4029
        %v4126 = vunpack.c.l.b16 %v4030
        %v4127 = vunpack.c.l.b16 %v4031
        %v4128 = vunpack.c.l.b16 %v4032
        %v4129 = vunpack.c.l.b16 %v4033
        %v4130 = vunpack.c.l.b16 %v4034
        %v4131 = vunpack.c.l.b16 %v4035
        %v4132 = vunpack.c.l.b16 %v4036
        %v4133 = vunpack.c.l.b16 %v4037
        %v4134 = vunpack.c.l.b16 %v4038
        %v4135 = vunpack.c.l.b16 %v4039
        %v4136 = vunpack.c.l.b16 %v4040
        %v4137 = vunpack.c.l.b16 %v4041
        %v4138 = vunpack.c.l.b16 %v4042
        %v4139 = vunpack.c.l.b16 %v4043
        %v4140 = vunpack.c.l.b16 %v4044
        %v4141 = vunpack.c.l.b16 %v4045
        %v4142 = vunpack.c.l.b16 %v4046
        %v4143 = vpack.c.b16 %v4096, %v4095
        %v4144 = vpack.c.b16 %v4098, %v4097
        %v4145 = vpack.c.b16 %v4100, %v4099
        %v4146 = vpack.c.b16 %v4102, %v4101
        %v4147 = vpack.c.b16 %v4104, %v4103
        %v4148 = vpack.c.b16 %v4106, %v4105
        %v4149 = vpack.c.b16 %v4108, %v4107
        %v4150 = vpack.c.b16 %v4110, %v4109
        %v4151 = vpack.c.b16 %v4112, %v4111
        %v4152 = vpack.c.b16 %v4114, %v4113
        %v4153 = vpack.c.b16 %v4116, %v4115
        %v4154 = vpack.c.b16 %v4118, %v4117
        %v4155 = vpack.c.b16 %v4120, %v4119
        %v4156 = vpack.c.b16 %v4122, %v4121
        %v4157 = vpack.c.b16 %v4124, %v4123
        %v4158 = vpack.c.b16 %v4126, %v4125
        %v4159 = vpack.c.b16 %v4128, %v4127
        %v4160 = vpack.c.b16 %v4130, %v4129
        %v4161 = vpack.c.b16 %v4132, %v4131
        %v4162 = vpack.c.b16 %v4134, %v4133
        %v4163 = vpack.c.b16 %v4136, %v4135
        %v4164 = vpack.c.b16 %v4138, %v4137
        %v4165 = vpack.c.b16 %v4140, %v4139
        %v4166 = vpack.c.b16 %v4142, %v4141
        %4191 = vmatpush.bf16.msra.mxu0 %v4150
        %4192 = vmatpush.bf16.msra.mxu0 %v4149
        %4193 = vmatpush.bf16.msra.mxu0 %v4148
        %4194 = vmatpush.bf16.msra.mxu0 %v4147
        %4195 = vmatpush.bf16.msra.mxu0 %v4146
        %4196 = vmatpush.bf16.msra.mxu0 %v4145
        %4197 = vmatpush.bf16.msra.mxu0 %v4144
        %4198 = vmatpush.bf16.msra.mxu0 %v4143
        %4199 = vmatmul.bf16.gmra.mxu0 %v3798
        %v4200 = vpop.f32.mrf.mxu0
        %v4201 = vadd.f32 0.0, %v4200
        %v4202 = vpop.f32.mrf.mxu0
        %v4203 = vadd.f32 0.0, %v4202
        %4204 = vmatmul.bf16.gmra.mxu0 %v3799
        %v4205 = vpop.f32.mrf.mxu0
        %v4206 = vadd.f32 0.0, %v4205
        %v4207 = vpop.f32.mrf.mxu0
        %v4208 = vadd.f32 0.0, %v4207
        %4209 = vmatmul.bf16.gmra.mxu0 %v3800
        %v4210 = vpop.f32.mrf.mxu0
        %v4211 = vadd.f32 0.0, %v4210
        %v4212 = vpop.f32.mrf.mxu0
        %v4213 = vadd.f32 0.0, %v4212
        %4214 = vmatmul.bf16.gmra.mxu0 %v3801
        %v4215 = vpop.f32.mrf.mxu0
        %v4216 = vadd.f32 0.0, %v4215
        %v4217 = vpop.f32.mrf.mxu0
        %v4218 = vadd.f32 0.0, %v4217
        %4219 = vmatmul.bf16.gmra.mxu0 %v3802
        %v4220 = vpop.f32.mrf.mxu0
        %v4221 = vadd.f32 0.0, %v4220
        %v4222 = vpop.f32.mrf.mxu0
        %v4223 = vadd.f32 0.0, %v4222
        %4224 = vmatmul.bf16.gmra.mxu0 %v3803
        %v4225 = vpop.f32.mrf.mxu0
        %v4226 = vadd.f32 0.0, %v4225
        %v4227 = vpop.f32.mrf.mxu0
        %v4228 = vadd.f32 0.0, %v4227
        %4229 = vmatmul.bf16.gmra.mxu0 %v3804
        %v4230 = vpop.f32.mrf.mxu0
        %v4231 = vadd.f32 0.0, %v4230
        %v4232 = vpop.f32.mrf.mxu0
        %v4233 = vadd.f32 0.0, %v4232
        %4234 = vmatmul.bf16.gmra.mxu0 %v3805
        %v4235 = vpop.f32.mrf.mxu0
        %v4236 = vadd.f32 0.0, %v4235
        %v4237 = vpop.f32.mrf.mxu0
        %v4238 = vadd.f32 0.0, %v4237
        %4239 = vdwg.mxu0
        %4240 = vmatpush.bf16.msra.mxu0 %v4158
        %4241 = vmatpush.bf16.msra.mxu0 %v4157
        %4242 = vmatpush.bf16.msra.mxu0 %v4156
        %4243 = vmatpush.bf16.msra.mxu0 %v4155
        %4244 = vmatpush.bf16.msra.mxu0 %v4154
        %4245 = vmatpush.bf16.msra.mxu0 %v4153
        %4246 = vmatpush.bf16.msra.mxu0 %v4152
        %4247 = vmatpush.bf16.msra.mxu0 %v4151
        %4248 = vmatmul.bf16.gmra.mxu0 %v3849
        %v4249 = vpop.f32.mrf.mxu0
        %v4250 = vadd.f32 %v4201, %v4249
        %v4251 = vpop.f32.mrf.mxu0
        %v4252 = vadd.f32 %v4203, %v4251
        %4253 = vmatmul.bf16.gmra.mxu0 %v3861
        %v4254 = vpop.f32.mrf.mxu0
        %v4255 = vadd.f32 %v4206, %v4254
        %v4256 = vpop.f32.mrf.mxu0
        %v4257 = vadd.f32 %v4208, %v4256
        %4258 = vmatmul.bf16.gmra.mxu0 %v3873
        %v4259 = vpop.f32.mrf.mxu0
        %v4260 = vadd.f32 %v4211, %v4259
        %v4261 = vpop.f32.mrf.mxu0
        %v4262 = vadd.f32 %v4213, %v4261
        %4263 = vmatmul.bf16.gmra.mxu0 %v3885
        %v4264 = vpop.f32.mrf.mxu0
        %v4265 = vadd.f32 %v4216, %v4264
        %v4266 = vpop.f32.mrf.mxu0
        %v4267 = vadd.f32 %v4218, %v4266
        %4268 = vmatmul.bf16.gmra.mxu0 %v3897
        %v4269 = vpop.f32.mrf.mxu0
        %v4270 = vadd.f32 %v4221, %v4269
        %v4271 = vpop.f32.mrf.mxu0
        %v4272 = vadd.f32 %v4223, %v4271
        %4273 = vmatmul.bf16.gmra.mxu0 %v3909
        %v4274 = vpop.f32.mrf.mxu0
        %v4275 = vadd.f32 %v4226, %v4274
        %v4276 = vpop.f32.mrf.mxu0
        %v4277 = vadd.f32 %v4228, %v4276
        %4278 = vmatmul.bf16.gmra.mxu0 %v3921
        %v4279 = vpop.f32.mrf.mxu0
        %v4280 = vadd.f32 %v4231, %v4279
        %v4281 = vpop.f32.mrf.mxu0
        %v4282 = vadd.f32 %v4233, %v4281
        %4283 = vmatmul.bf16.gmra.mxu0 %v3933
        %v4284 = vpop.f32.mrf.mxu0
        %v4285 = vadd.f32 %v4236, %v4284
        %v4286 = vpop.f32.mrf.mxu0
        %v4287 = vadd.f32 %v4238, %v4286
        %4288 = vdwg.mxu0
        %4289 = vmatpush.bf16.msra.mxu0 %v4166
        %4290 = vmatpush.bf16.msra.mxu0 %v4165
        %4291 = vmatpush.bf16.msra.mxu0 %v4164
        %4292 = vmatpush.bf16.msra.mxu0 %v4163
        %4293 = vmatpush.bf16.msra.mxu0 %v4162
        %4294 = vmatpush.bf16.msra.mxu0 %v4161
        %4295 = vmatpush.bf16.msra.mxu0 %v4160
        %4296 = vmatpush.bf16.msra.mxu0 %v4159
        %4297 = vmatmul.bf16.gmra.mxu0 %v3968
        %v4298 = vpop.f32.mrf.mxu0
        %v4299 = vadd.f32 %v4250, %v4298
        %v4300 = vpop.f32.mrf.mxu0
        %v4301 = vadd.f32 %v4252, %v4300
        %4302 = vmatmul.bf16.gmra.mxu0 %v3971
        %v4303 = vpop.f32.mrf.mxu0
        %v4304 = vadd.f32 %v4255, %v4303
        %v4305 = vpop.f32.mrf.mxu0
        %v4306 = vadd.f32 %v4257, %v4305
        %4307 = vmatmul.bf16.gmra.mxu0 %v3974
        %v4308 = vpop.f32.mrf.mxu0
        %v4309 = vadd.f32 %v4260, %v4308
        %v4310 = vpop.f32.mrf.mxu0
        %v4311 = vadd.f32 %v4262, %v4310
        %4312 = vmatmul.bf16.gmra.mxu0 %v3977
        %v4313 = vpop.f32.mrf.mxu0
        %v4314 = vadd.f32 %v4265, %v4313
        %v4315 = vpop.f32.mrf.mxu0
        %v4316 = vadd.f32 %v4267, %v4315
        %4317 = vmatmul.bf16.gmra.mxu0 %v3980
        %v4318 = vpop.f32.mrf.mxu0
        %v4319 = vadd.f32 %v4270, %v4318
        %v4320 = vpop.f32.mrf.mxu0
        %v4321 = vadd.f32 %v4272, %v4320
        %4322 = vmatmul.bf16.gmra.mxu0 %v3983
        %v4323 = vpop.f32.mrf.mxu0
        %v4324 = vadd.f32 %v4275, %v4323
        %v4325 = vpop.f32.mrf.mxu0
        %v4326 = vadd.f32 %v4277, %v4325
        %4327 = vmatmul.bf16.gmra.mxu0 %v3986
        %v4328 = vpop.f32.mrf.mxu0
        %v4329 = vadd.f32 %v4280, %v4328
        %v4330 = vpop.f32.mrf.mxu0
        %v4331 = vadd.f32 %v4282, %v4330
        %4332 = vmatmul.bf16.gmra.mxu0 %v3989
        %v4333 = vpop.f32.mrf.mxu0
        %v4334 = vadd.f32 %v4285, %v4333
        %v4335 = vpop.f32.mrf.mxu0
        %v4336 = vadd.f32 %v4287, %v4335
        %4337 = vdwg.mxu0
        %v4386 = vunpack.c.l.b16 %v3685
        %v4387 = vunpack.c.l.b16 %v3686
        %v4388 = vunpack.c.l.b16 %v3687
        %v4389 = vunpack.c.l.b16 %v3688
        %v4390 = vunpack.c.l.b16 %v3689
        %v4391 = vunpack.c.l.b16 %v3690
        %v4392 = vunpack.c.l.b16 %v3691
        %v4393 = vunpack.c.l.b16 %v3692
        %v4394 = vunpack.c.l.b16 %v3693
        %v4395 = vunpack.c.l.b16 %v3694
        %v4396 = vunpack.c.l.b16 %v3695
        %v4397 = vunpack.c.l.b16 %v3696
        %v4398 = vunpack.c.l.b16 %v3697
        %v4399 = vunpack.c.l.b16 %v3698
        %v4400 = vunpack.c.l.b16 %v3699
        %v4401 = vunpack.c.l.b16 %v3700
        %v4402 = vunpack.c.l.b16 %v3701
        %v4403 = vunpack.c.l.b16 %v3702
        %v4404 = vunpack.c.l.b16 %v3703
        %v4405 = vunpack.c.l.b16 %v3704
        %v4406 = vunpack.c.l.b16 %v3705
        %v4407 = vunpack.c.l.b16 %v3706
        %v4408 = vunpack.c.l.b16 %v3707
        %v4409 = vunpack.c.l.b16 %v3708
        %v4410 = vunpack.c.l.b16 %v3709
        %v4411 = vunpack.c.l.b16 %v3710
        %v4412 = vunpack.c.l.b16 %v3711
        %v4413 = vunpack.c.l.b16 %v3712
        %v4414 = vunpack.c.l.b16 %v3713
        %v4415 = vunpack.c.l.b16 %v3714
        %v4416 = vunpack.c.l.b16 %v3715
        %v4417 = vunpack.c.l.b16 %v3716
        %v4418 = vunpack.c.l.b16 %v3717
        %v4419 = vunpack.c.l.b16 %v3718
        %v4420 = vunpack.c.l.b16 %v3719
        %v4421 = vunpack.c.l.b16 %v3720
        %v4422 = vunpack.c.l.b16 %v3721
        %v4423 = vunpack.c.l.b16 %v3722
        %v4424 = vunpack.c.l.b16 %v3723
        %v4425 = vunpack.c.l.b16 %v3724
        %v4426 = vunpack.c.l.b16 %v3725
        %v4427 = vunpack.c.l.b16 %v3726
        %v4428 = vunpack.c.l.b16 %v3727
        %v4429 = vunpack.c.l.b16 %v3728
        %v4430 = vunpack.c.l.b16 %v3729
        %v4431 = vunpack.c.l.b16 %v3730
        %v4432 = vunpack.c.l.b16 %v3731
        %v4433 = vunpack.c.l.b16 %v3732
        %v4434 = vpack.c.b16 %v4387, %v4386
        %v4435 = vpack.c.b16 %v4389, %v4388
        %v4436 = vpack.c.b16 %v4391, %v4390
        %v4437 = vpack.c.b16 %v4393, %v4392
        %v4438 = vpack.c.b16 %v4395, %v4394
        %v4439 = vpack.c.b16 %v4397, %v4396
        %v4440 = vpack.c.b16 %v4399, %v4398
        %v4441 = vpack.c.b16 %v4401, %v4400
        %v4442 = vpack.c.b16 %v4403, %v4402
        %v4443 = vpack.c.b16 %v4405, %v4404
        %v4444 = vpack.c.b16 %v4407, %v4406
        %v4445 = vpack.c.b16 %v4409, %v4408
        %v4446 = vpack.c.b16 %v4411, %v4410
        %v4447 = vpack.c.b16 %v4413, %v4412
        %v4448 = vpack.c.b16 %v4415, %v4414
        %v4449 = vpack.c.b16 %v4417, %v4416
        %v4450 = vpack.c.b16 %v4419, %v4418
        %v4451 = vpack.c.b16 %v4421, %v4420
        %v4452 = vpack.c.b16 %v4423, %v4422
        %v4453 = vpack.c.b16 %v4425, %v4424
        %v4454 = vpack.c.b16 %v4427, %v4426
        %v4455 = vpack.c.b16 %v4429, %v4428
        %v4456 = vpack.c.b16 %v4431, %v4430
        %v4457 = vpack.c.b16 %v4433, %v4432
        %4482 = vmatpush.bf16.msra.mxu0 %v4441
        %4483 = vmatpush.bf16.msra.mxu0 %v4440
        %4484 = vmatpush.bf16.msra.mxu0 %v4439
        %4485 = vmatpush.bf16.msra.mxu0 %v4438
        %4486 = vmatpush.bf16.msra.mxu0 %v4437
        %4487 = vmatpush.bf16.msra.mxu0 %v4436
        %4488 = vmatpush.bf16.msra.mxu0 %v4435
        %4489 = vmatpush.bf16.msra.mxu0 %v4434
        %4490 = vmatmul.bf16.gmra.mxu0 %v3485
        %v4491 = vpop.f32.mrf.mxu0
        %v4492 = vadd.f32 %v4299, %v4491
        %v4493 = vpop.f32.mrf.mxu0
        %v4494 = vadd.f32 %v4301, %v4493
        %4495 = vmatmul.bf16.gmra.mxu0 %v3486
        %v4496 = vpop.f32.mrf.mxu0
        %v4497 = vadd.f32 %v4304, %v4496
        %v4498 = vpop.f32.mrf.mxu0
        %v4499 = vadd.f32 %v4306, %v4498
        %4500 = vmatmul.bf16.gmra.mxu0 %v3487
        %v4501 = vpop.f32.mrf.mxu0
        %v4502 = vadd.f32 %v4309, %v4501
        %v4503 = vpop.f32.mrf.mxu0
        %v4504 = vadd.f32 %v4311, %v4503
        %4505 = vmatmul.bf16.gmra.mxu0 %v3488
        %v4506 = vpop.f32.mrf.mxu0
        %v4507 = vadd.f32 %v4314, %v4506
        %v4508 = vpop.f32.mrf.mxu0
        %v4509 = vadd.f32 %v4316, %v4508
        %4510 = vmatmul.bf16.gmra.mxu0 %v3489
        %v4511 = vpop.f32.mrf.mxu0
        %v4512 = vadd.f32 %v4319, %v4511
        %v4513 = vpop.f32.mrf.mxu0
        %v4514 = vadd.f32 %v4321, %v4513
        %4515 = vmatmul.bf16.gmra.mxu0 %v3490
        %v4516 = vpop.f32.mrf.mxu0
        %v4517 = vadd.f32 %v4324, %v4516
        %v4518 = vpop.f32.mrf.mxu0
        %v4519 = vadd.f32 %v4326, %v4518
        %4520 = vmatmul.bf16.gmra.mxu0 %v3491
        %v4521 = vpop.f32.mrf.mxu0
        %v4522 = vadd.f32 %v4329, %v4521
        %v4523 = vpop.f32.mrf.mxu0
        %v4524 = vadd.f32 %v4331, %v4523
        %4525 = vmatmul.bf16.gmra.mxu0 %v3492
        %v4526 = vpop.f32.mrf.mxu0
        %v4527 = vadd.f32 %v4334, %v4526
        %v4528 = vpop.f32.mrf.mxu0
        %v4529 = vadd.f32 %v4336, %v4528
        %4530 = vdwg.mxu0
        %4531 = vmatpush.bf16.msra.mxu0 %v4449
        %4532 = vmatpush.bf16.msra.mxu0 %v4448
        %4533 = vmatpush.bf16.msra.mxu0 %v4447
        %4534 = vmatpush.bf16.msra.mxu0 %v4446
        %4535 = vmatpush.bf16.msra.mxu0 %v4445
        %4536 = vmatpush.bf16.msra.mxu0 %v4444
        %4537 = vmatpush.bf16.msra.mxu0 %v4443
        %4538 = vmatpush.bf16.msra.mxu0 %v4442
        %4539 = vmatmul.bf16.gmra.mxu0 %v3536
        %v4540 = vpop.f32.mrf.mxu0
        %v4541 = vadd.f32 %v4492, %v4540
        %v4542 = vpop.f32.mrf.mxu0
        %v4543 = vadd.f32 %v4494, %v4542
        %4544 = vmatmul.bf16.gmra.mxu0 %v3548
        %v4545 = vpop.f32.mrf.mxu0
        %v4546 = vadd.f32 %v4497, %v4545
        %v4547 = vpop.f32.mrf.mxu0
        %v4548 = vadd.f32 %v4499, %v4547
        %4549 = vmatmul.bf16.gmra.mxu0 %v3560
        %v4550 = vpop.f32.mrf.mxu0
        %v4551 = vadd.f32 %v4502, %v4550
        %v4552 = vpop.f32.mrf.mxu0
        %v4553 = vadd.f32 %v4504, %v4552
        %4554 = vmatmul.bf16.gmra.mxu0 %v3572
        %v4555 = vpop.f32.mrf.mxu0
        %v4556 = vadd.f32 %v4507, %v4555
        %v4557 = vpop.f32.mrf.mxu0
        %v4558 = vadd.f32 %v4509, %v4557
        %4559 = vmatmul.bf16.gmra.mxu0 %v3584
        %v4560 = vpop.f32.mrf.mxu0
        %v4561 = vadd.f32 %v4512, %v4560
        %v4562 = vpop.f32.mrf.mxu0
        %v4563 = vadd.f32 %v4514, %v4562
        %4564 = vmatmul.bf16.gmra.mxu0 %v3596
        %v4565 = vpop.f32.mrf.mxu0
        %v4566 = vadd.f32 %v4517, %v4565
        %v4567 = vpop.f32.mrf.mxu0
        %v4568 = vadd.f32 %v4519, %v4567
        %4569 = vmatmul.bf16.gmra.mxu0 %v3608
        %v4570 = vpop.f32.mrf.mxu0
        %v4571 = vadd.f32 %v4522, %v4570
        %v4572 = vpop.f32.mrf.mxu0
        %v4573 = vadd.f32 %v4524, %v4572
        %4574 = vmatmul.bf16.gmra.mxu0 %v3620
        %v4575 = vpop.f32.mrf.mxu0
        %v4576 = vadd.f32 %v4527, %v4575
        %v4577 = vpop.f32.mrf.mxu0
        %v4578 = vadd.f32 %v4529, %v4577
        %4579 = vdwg.mxu0
        %4580 = vmatpush.bf16.msra.mxu0 %v4457
        %4581 = vmatpush.bf16.msra.mxu0 %v4456
        %4582 = vmatpush.bf16.msra.mxu0 %v4455
        %4583 = vmatpush.bf16.msra.mxu0 %v4454
        %4584 = vmatpush.bf16.msra.mxu0 %v4453
        %4585 = vmatpush.bf16.msra.mxu0 %v4452
        %4586 = vmatpush.bf16.msra.mxu0 %v4451
        %4587 = vmatpush.bf16.msra.mxu0 %v4450
        %4588 = vmatmul.bf16.gmra.mxu0 %v3655
        %v4589 = vpop.f32.mrf.mxu0
        %v4590 = vadd.f32 %v4541, %v4589
        %v4591 = vpop.f32.mrf.mxu0
        %v4592 = vadd.f32 %v4543, %v4591
        %4593 = vmatmul.bf16.gmra.mxu0 %v3658
        %v4594 = vpop.f32.mrf.mxu0
        %v4595 = vadd.f32 %v4546, %v4594
        %v4596 = vpop.f32.mrf.mxu0
        %v4597 = vadd.f32 %v4548, %v4596
        %4598 = vmatmul.bf16.gmra.mxu0 %v3661
        %v4599 = vpop.f32.mrf.mxu0
        %v4600 = vadd.f32 %v4551, %v4599
        %v4601 = vpop.f32.mrf.mxu0
        %v4602 = vadd.f32 %v4553, %v4601
        %4603 = vmatmul.bf16.gmra.mxu0 %v3664
        %v4604 = vpop.f32.mrf.mxu0
        %v4605 = vadd.f32 %v4556, %v4604
        %v4606 = vpop.f32.mrf.mxu0
        %v4607 = vadd.f32 %v4558, %v4606
        %4608 = vmatmul.bf16.gmra.mxu0 %v3667
        %v4609 = vpop.f32.mrf.mxu0
        %v4610 = vadd.f32 %v4561, %v4609
        %v4611 = vpop.f32.mrf.mxu0
        %v4612 = vadd.f32 %v4563, %v4611
        %4613 = vmatmul.bf16.gmra.mxu0 %v3670
        %v4614 = vpop.f32.mrf.mxu0
        %v4615 = vadd.f32 %v4566, %v4614
        %v4616 = vpop.f32.mrf.mxu0
        %v4617 = vadd.f32 %v4568, %v4616
        %4618 = vmatmul.bf16.gmra.mxu0 %v3673
        %v4619 = vpop.f32.mrf.mxu0
        %v4620 = vadd.f32 %v4571, %v4619
        %v4621 = vpop.f32.mrf.mxu0
        %v4622 = vadd.f32 %v4573, %v4621
        %4623 = vmatmul.bf16.gmra.mxu0 %v3676
        %v4624 = vpop.f32.mrf.mxu0
        %v4625 = vadd.f32 %v4576, %v4624
        %v4626 = vpop.f32.mrf.mxu0
        %v4627 = vadd.f32 %v4578, %v4626
        %4628 = vdwg.mxu0
        %s4629 = scalar_lea.vmem [#allocation2], 24
        %v4630 = vld [vmem:[%s4629] sm:$0xf]
        %v4631 = vld [vmem:[%s4629 + $0x4] sm:$0xf]
        %v4632 = vld [vmem:[%s4629 + $0xc] sm:$0xf]
        %v4633 = vld [vmem:[%s4629 + $0x10] sm:$0xf]
        %v4634 = vld [vmem:[%s4629 + $0x18] sm:$0xf]
        %v4635 = vld [vmem:[%s4629 + $0x1c] sm:$0xf]
        %v4636 = vld [vmem:[%s4629 + $0x24] sm:$0xf]
        %v4637 = vld [vmem:[%s4629 + $0x28] sm:$0xf]
        %v4638 = vld [vmem:[%s4629 + $0x30] sm:$0xf]
        %v4639 = vld [vmem:[%s4629 + $0x34] sm:$0xf]
        %v4640 = vld [vmem:[%s4629 + $0x3c] sm:$0xf]
        %v4641 = vld [vmem:[%s4629 + $0x40] sm:$0xf]
        %v4642 = vld [vmem:[%s4629 + $0x48] sm:$0xf]
        %v4643 = vld [vmem:[%s4629 + $0x4c] sm:$0xf]
        %v4644 = vld [vmem:[%s4629 + $0x54] sm:$0xf]
        %v4645 = vld [vmem:[%s4629 + $0x58] sm:$0xf]
        %v4646 = vld [vmem:[%s4629 + $0x8] sm:$0x1]
        %v4647 = vld [vmem:[%s4629 + $0x14] sm:$0x1]
        %v4648 = vld [vmem:[%s4629 + $0x20] sm:$0x1]
        %v4649 = vld [vmem:[%s4629 + $0x2c] sm:$0x1]
        %v4650 = vld [vmem:[%s4629 + $0x38] sm:$0x1]
        %v4651 = vld [vmem:[%s4629 + $0x44] sm:$0x1]
        %v4652 = vld [vmem:[%s4629 + $0x50] sm:$0x1]
        %v4653 = vld [vmem:[%s4629 + $0x5c] sm:$0x1]
        %v4654 = vld [vmem:[%s4629] sm:$0xe]
        %v4655 = vld [vmem:[%s4629 + $0xc] sm:$0xe]
        %v4656 = vld [vmem:[%s4629 + $0x18] sm:$0xe]
        %v4657 = vld [vmem:[%s4629 + $0x24] sm:$0xe]
        %v4658 = vld [vmem:[%s4629 + $0x30] sm:$0xe]
        %v4659 = vld [vmem:[%s4629 + $0x3c] sm:$0xe]
        %v4660 = vld [vmem:[%s4629 + $0x48] sm:$0xe]
        %v4661 = vld [vmem:[%s4629 + $0x54] sm:$0xe]
        %v4678 = vunpack.c.l.b16 %v4630
        %v4679 = vunpack.c.l.b16 %v4631
        %v4680 = vunpack.c.l.b16 %v4632
        %v4681 = vunpack.c.l.b16 %v4633
        %v4682 = vunpack.c.l.b16 %v4634
        %v4683 = vunpack.c.l.b16 %v4635
        %v4684 = vunpack.c.l.b16 %v4636
        %v4685 = vunpack.c.l.b16 %v4637
        %v4686 = vunpack.c.l.b16 %v4638
        %v4687 = vunpack.c.l.b16 %v4639
        %v4688 = vunpack.c.l.b16 %v4640
        %v4689 = vunpack.c.l.b16 %v4641
        %v4690 = vunpack.c.l.b16 %v4642
        %v4691 = vunpack.c.l.b16 %v4643
        %v4692 = vunpack.c.l.b16 %v4644
        %v4693 = vunpack.c.l.b16 %v4645
        %v4694 = vpack.c.b16 %v4679, %v4678
        %v4695 = vpack.c.b16 %v4681, %v4680
        %v4696 = vpack.c.b16 %v4683, %v4682
        %v4697 = vpack.c.b16 %v4685, %v4684
        %v4698 = vpack.c.b16 %v4687, %v4686
        %v4699 = vpack.c.b16 %v4689, %v4688
        %v4700 = vpack.c.b16 %v4691, %v4690
        %v4701 = vpack.c.b16 %v4693, %v4692
        %v4718 = vunpack.c.l.b16 %v4646
        %v4719 = vunpack.c.l.b16 %v4647
        %v4720 = vunpack.c.l.b16 %v4648
        %v4721 = vunpack.c.l.b16 %v4649
        %v4722 = vunpack.c.l.b16 %v4650
        %v4723 = vunpack.c.l.b16 %v4651
        %v4724 = vunpack.c.l.b16 %v4652
        %v4725 = vunpack.c.l.b16 %v4653
        %v4726 = vpack.c.b16 %v4718, %v4718
        %v4727 = vpack.c.b16 %v4719, %v4719
        %v4728 = vpack.c.b16 %v4720, %v4720
        %v4729 = vpack.c.b16 %v4721, %v4721
        %v4730 = vpack.c.b16 %v4722, %v4722
        %v4731 = vpack.c.b16 %v4723, %v4723
        %v4732 = vpack.c.b16 %v4724, %v4724
        %v4733 = vpack.c.b16 %v4725, %v4725
        %v4735 = vshrl.u32 %v4694, 16
        %v4737 = vshll.u32 %v4694, 16
        %v4739 = vrot.slane %v4737, 1
        %v4740 = vor.u32 %v4735, %v4739
        %v4742 = vshll.u32 %v4726, 16
        %v4744 = vrot.slane %v4742, 1
        %v4745 = vsel %vm420, %v4740, %v4744
        %v4747 = vshrl.u32 %v4695, 16
        %v4749 = vshll.u32 %v4695, 16
        %v4751 = vrot.slane %v4749, 1
        %v4752 = vor.u32 %v4747, %v4751
        %v4754 = vshll.u32 %v4727, 16
        %v4756 = vrot.slane %v4754, 1
        %v4757 = vsel %vm420, %v4752, %v4756
        %v4759 = vshrl.u32 %v4696, 16
        %v4761 = vshll.u32 %v4696, 16
        %v4763 = vrot.slane %v4761, 1
        %v4764 = vor.u32 %v4759, %v4763
        %v4766 = vshll.u32 %v4728, 16
        %v4768 = vrot.slane %v4766, 1
        %v4769 = vsel %vm420, %v4764, %v4768
        %v4771 = vshrl.u32 %v4697, 16
        %v4773 = vshll.u32 %v4697, 16
        %v4775 = vrot.slane %v4773, 1
        %v4776 = vor.u32 %v4771, %v4775
        %v4778 = vshll.u32 %v4729, 16
        %v4780 = vrot.slane %v4778, 1
        %v4781 = vsel %vm420, %v4776, %v4780
        %v4783 = vshrl.u32 %v4698, 16
        %v4785 = vshll.u32 %v4698, 16
        %v4787 = vrot.slane %v4785, 1
        %v4788 = vor.u32 %v4783, %v4787
        %v4790 = vshll.u32 %v4730, 16
        %v4792 = vrot.slane %v4790, 1
        %v4793 = vsel %vm420, %v4788, %v4792
        %v4795 = vshrl.u32 %v4699, 16
        %v4797 = vshll.u32 %v4699, 16
        %v4799 = vrot.slane %v4797, 1
        %v4800 = vor.u32 %v4795, %v4799
        %v4802 = vshll.u32 %v4731, 16
        %v4804 = vrot.slane %v4802, 1
        %v4805 = vsel %vm420, %v4800, %v4804
        %v4807 = vshrl.u32 %v4700, 16
        %v4809 = vshll.u32 %v4700, 16
        %v4811 = vrot.slane %v4809, 1
        %v4812 = vor.u32 %v4807, %v4811
        %v4814 = vshll.u32 %v4732, 16
        %v4816 = vrot.slane %v4814, 1
        %v4817 = vsel %vm420, %v4812, %v4816
        %v4819 = vshrl.u32 %v4701, 16
        %v4821 = vshll.u32 %v4701, 16
        %v4823 = vrot.slane %v4821, 1
        %v4824 = vor.u32 %v4819, %v4823
        %v4826 = vshll.u32 %v4733, 16
        %v4828 = vrot.slane %v4826, 1
        %v4829 = vsel %vm420, %v4824, %v4828
        %v4846 = vunpack.c.l.b16 %v4654
        %v4847 = vunpack.c.l.b16 %v4655
        %v4848 = vunpack.c.l.b16 %v4656
        %v4849 = vunpack.c.l.b16 %v4657
        %v4850 = vunpack.c.l.b16 %v4658
        %v4851 = vunpack.c.l.b16 %v4659
        %v4852 = vunpack.c.l.b16 %v4660
        %v4853 = vunpack.c.l.b16 %v4661
        %v4854 = vpack.c.b16 %v4679, %v4846
        %v4855 = vpack.c.b16 %v4681, %v4847
        %v4856 = vpack.c.b16 %v4683, %v4848
        %v4857 = vpack.c.b16 %v4685, %v4849
        %v4858 = vpack.c.b16 %v4687, %v4850
        %v4859 = vpack.c.b16 %v4689, %v4851
        %v4860 = vpack.c.b16 %v4691, %v4852
        %v4861 = vpack.c.b16 %v4693, %v4853
        %v4862 = vrot.slane %v4854, 1
        %v4863 = vrot.slane %v4726, 1
        %v4864 = vsel %vm601, %v4862, %v4863
        %v4865 = vrot.slane %v4855, 1
        %v4866 = vrot.slane %v4727, 1
        %v4867 = vsel %vm601, %v4865, %v4866
        %v4868 = vrot.slane %v4856, 1
        %v4869 = vrot.slane %v4728, 1
        %v4870 = vsel %vm601, %v4868, %v4869
        %v4871 = vrot.slane %v4857, 1
        %v4872 = vrot.slane %v4729, 1
        %v4873 = vsel %vm601, %v4871, %v4872
        %v4874 = vrot.slane %v4858, 1
        %v4875 = vrot.slane %v4730, 1
        %v4876 = vsel %vm601, %v4874, %v4875
        %v4877 = vrot.slane %v4859, 1
        %v4878 = vrot.slane %v4731, 1
        %v4879 = vsel %vm601, %v4877, %v4878
        %v4880 = vrot.slane %v4860, 1
        %v4881 = vrot.slane %v4732, 1
        %v4882 = vsel %vm601, %v4880, %v4881
        %v4883 = vrot.slane %v4861, 1
        %v4884 = vrot.slane %v4733, 1
        %v4885 = vsel %vm601, %v4883, %v4884
        %s4894 = scalar_lea.vmem [#allocation8], 384
        %v4895 = vld [vmem:[%s4894] sm:$0xf]
        %v4896 = vld [vmem:[%s4894 + $0x4] sm:$0xf]
        %v4897 = vld [vmem:[%s4894 + $0x8] sm:$0xf]
        %v4898 = vld [vmem:[%s4894 + $0xc] sm:$0xf]
        %v4899 = vld [vmem:[%s4894 + $0x10] sm:$0xf]
        %v4900 = vld [vmem:[%s4894 + $0x14] sm:$0xf]
        %v4901 = vld [vmem:[%s4894 + $0x18] sm:$0xf]
        %v4902 = vld [vmem:[%s4894 + $0x1c] sm:$0xf]
        %v4903 = vld [vmem:[%s4894 + $0x20] sm:$0xf]
        %v4904 = vld [vmem:[%s4894 + $0x24] sm:$0xf]
        %v4905 = vld [vmem:[%s4894 + $0x28] sm:$0xf]
        %v4906 = vld [vmem:[%s4894 + $0x2c] sm:$0xf]
        %v4907 = vld [vmem:[%s4894 + $0x30] sm:$0xf]
        %v4908 = vld [vmem:[%s4894 + $0x34] sm:$0xf]
        %v4909 = vld [vmem:[%s4894 + $0x38] sm:$0xf]
        %v4910 = vld [vmem:[%s4894 + $0x3c] sm:$0xf]
        %v4911 = vld [vmem:[%s4894 + $0x40] sm:$0xf]
        %v4912 = vld [vmem:[%s4894 + $0x44] sm:$0xf]
        %v4913 = vld [vmem:[%s4894 + $0x48] sm:$0xf]
        %v4914 = vld [vmem:[%s4894 + $0x4c] sm:$0xf]
        %v4915 = vld [vmem:[%s4894 + $0x50] sm:$0xf]
        %v4916 = vld [vmem:[%s4894 + $0x54] sm:$0xf]
        %v4917 = vld [vmem:[%s4894 + $0x58] sm:$0xf]
        %v4918 = vld [vmem:[%s4894 + $0x5c] sm:$0xf]
        %v4919 = vld [vmem:[%s4894 + $0x60] sm:$0xf]
        %v4920 = vld [vmem:[%s4894 + $0x64] sm:$0xf]
        %v4921 = vld [vmem:[%s4894 + $0x68] sm:$0xf]
        %v4922 = vld [vmem:[%s4894 + $0x6c] sm:$0xf]
        %v4923 = vld [vmem:[%s4894 + $0x70] sm:$0xf]
        %v4924 = vld [vmem:[%s4894 + $0x74] sm:$0xf]
        %v4925 = vld [vmem:[%s4894 + $0x78] sm:$0xf]
        %v4926 = vld [vmem:[%s4894 + $0x7c] sm:$0xf]
        %v4927 = vld [vmem:[%s4894 + $0x80] sm:$0xf]
        %v4928 = vld [vmem:[%s4894 + $0x84] sm:$0xf]
        %v4929 = vld [vmem:[%s4894 + $0x88] sm:$0xf]
        %v4930 = vld [vmem:[%s4894 + $0x8c] sm:$0xf]
        %v4931 = vld [vmem:[%s4894 + $0x90] sm:$0xf]
        %v4932 = vld [vmem:[%s4894 + $0x94] sm:$0xf]
        %v4933 = vld [vmem:[%s4894 + $0x98] sm:$0xf]
        %v4934 = vld [vmem:[%s4894 + $0x9c] sm:$0xf]
        %v4935 = vld [vmem:[%s4894 + $0xa0] sm:$0xf]
        %v4936 = vld [vmem:[%s4894 + $0xa4] sm:$0xf]
        %v4937 = vld [vmem:[%s4894 + $0xa8] sm:$0xf]
        %v4938 = vld [vmem:[%s4894 + $0xac] sm:$0xf]
        %v4939 = vld [vmem:[%s4894 + $0xb0] sm:$0xf]
        %v4940 = vld [vmem:[%s4894 + $0xb4] sm:$0xf]
        %v4941 = vld [vmem:[%s4894 + $0xb8] sm:$0xf]
        %v4942 = vld [vmem:[%s4894 + $0xbc] sm:$0xf]
        %v4991 = vunpack.c.l.b16 %v4895
        %v4992 = vunpack.c.l.b16 %v4896
        %v4993 = vunpack.c.l.b16 %v4897
        %v4994 = vunpack.c.l.b16 %v4898
        %v4995 = vunpack.c.l.b16 %v4899
        %v4996 = vunpack.c.l.b16 %v4900
        %v4997 = vunpack.c.l.b16 %v4901
        %v4998 = vunpack.c.l.b16 %v4902
        %v4999 = vunpack.c.l.b16 %v4903
        %v5000 = vunpack.c.l.b16 %v4904
        %v5001 = vunpack.c.l.b16 %v4905
        %v5002 = vunpack.c.l.b16 %v4906
        %v5003 = vunpack.c.l.b16 %v4907
        %v5004 = vunpack.c.l.b16 %v4908
        %v5005 = vunpack.c.l.b16 %v4909
        %v5006 = vunpack.c.l.b16 %v4910
        %v5007 = vunpack.c.l.b16 %v4911
        %v5008 = vunpack.c.l.b16 %v4912
        %v5009 = vunpack.c.l.b16 %v4913
        %v5010 = vunpack.c.l.b16 %v4914
        %v5011 = vunpack.c.l.b16 %v4915
        %v5012 = vunpack.c.l.b16 %v4916
        %v5013 = vunpack.c.l.b16 %v4917
        %v5014 = vunpack.c.l.b16 %v4918
        %v5015 = vunpack.c.l.b16 %v4919
        %v5016 = vunpack.c.l.b16 %v4920
        %v5017 = vunpack.c.l.b16 %v4921
        %v5018 = vunpack.c.l.b16 %v4922
        %v5019 = vunpack.c.l.b16 %v4923
        %v5020 = vunpack.c.l.b16 %v4924
        %v5021 = vunpack.c.l.b16 %v4925
        %v5022 = vunpack.c.l.b16 %v4926
        %v5023 = vunpack.c.l.b16 %v4927
        %v5024 = vunpack.c.l.b16 %v4928
        %v5025 = vunpack.c.l.b16 %v4929
        %v5026 = vunpack.c.l.b16 %v4930
        %v5027 = vunpack.c.l.b16 %v4931
        %v5028 = vunpack.c.l.b16 %v4932
        %v5029 = vunpack.c.l.b16 %v4933
        %v5030 = vunpack.c.l.b16 %v4934
        %v5031 = vunpack.c.l.b16 %v4935
        %v5032 = vunpack.c.l.b16 %v4936
        %v5033 = vunpack.c.l.b16 %v4937
        %v5034 = vunpack.c.l.b16 %v4938
        %v5035 = vunpack.c.l.b16 %v4939
        %v5036 = vunpack.c.l.b16 %v4940
        %v5037 = vunpack.c.l.b16 %v4941
        %v5038 = vunpack.c.l.b16 %v4942
        %v5039 = vpack.c.b16 %v4992, %v4991
        %v5040 = vpack.c.b16 %v4994, %v4993
        %v5041 = vpack.c.b16 %v4996, %v4995
        %v5042 = vpack.c.b16 %v4998, %v4997
        %v5043 = vpack.c.b16 %v5000, %v4999
        %v5044 = vpack.c.b16 %v5002, %v5001
        %v5045 = vpack.c.b16 %v5004, %v5003
        %v5046 = vpack.c.b16 %v5006, %v5005
        %v5047 = vpack.c.b16 %v5008, %v5007
        %v5048 = vpack.c.b16 %v5010, %v5009
        %v5049 = vpack.c.b16 %v5012, %v5011
        %v5050 = vpack.c.b16 %v5014, %v5013
        %v5051 = vpack.c.b16 %v5016, %v5015
        %v5052 = vpack.c.b16 %v5018, %v5017
        %v5053 = vpack.c.b16 %v5020, %v5019
        %v5054 = vpack.c.b16 %v5022, %v5021
        %v5055 = vpack.c.b16 %v5024, %v5023
        %v5056 = vpack.c.b16 %v5026, %v5025
        %v5057 = vpack.c.b16 %v5028, %v5027
        %v5058 = vpack.c.b16 %v5030, %v5029
        %v5059 = vpack.c.b16 %v5032, %v5031
        %v5060 = vpack.c.b16 %v5034, %v5033
        %v5061 = vpack.c.b16 %v5036, %v5035
        %v5062 = vpack.c.b16 %v5038, %v5037
        %5087 = vmatpush.bf16.msra.mxu0 %v5046
        %5088 = vmatpush.bf16.msra.mxu0 %v5045
        %5089 = vmatpush.bf16.msra.mxu0 %v5044
        %5090 = vmatpush.bf16.msra.mxu0 %v5043
        %5091 = vmatpush.bf16.msra.mxu0 %v5042
        %5092 = vmatpush.bf16.msra.mxu0 %v5041
        %5093 = vmatpush.bf16.msra.mxu0 %v5040
        %5094 = vmatpush.bf16.msra.mxu0 %v5039
        %5095 = vmatmul.bf16.gmra.mxu0 %v4694
        %v5096 = vpop.f32.mrf.mxu0
        %v5097 = vadd.f32 0.0, %v5096
        %v5098 = vpop.f32.mrf.mxu0
        %v5099 = vadd.f32 0.0, %v5098
        %5100 = vmatmul.bf16.gmra.mxu0 %v4695
        %v5101 = vpop.f32.mrf.mxu0
        %v5102 = vadd.f32 0.0, %v5101
        %v5103 = vpop.f32.mrf.mxu0
        %v5104 = vadd.f32 0.0, %v5103
        %5105 = vmatmul.bf16.gmra.mxu0 %v4696
        %v5106 = vpop.f32.mrf.mxu0
        %v5107 = vadd.f32 0.0, %v5106
        %v5108 = vpop.f32.mrf.mxu0
        %v5109 = vadd.f32 0.0, %v5108
        %5110 = vmatmul.bf16.gmra.mxu0 %v4697
        %v5111 = vpop.f32.mrf.mxu0
        %v5112 = vadd.f32 0.0, %v5111
        %v5113 = vpop.f32.mrf.mxu0
        %v5114 = vadd.f32 0.0, %v5113
        %5115 = vmatmul.bf16.gmra.mxu0 %v4698
        %v5116 = vpop.f32.mrf.mxu0
        %v5117 = vadd.f32 0.0, %v5116
        %v5118 = vpop.f32.mrf.mxu0
        %v5119 = vadd.f32 0.0, %v5118
        %5120 = vmatmul.bf16.gmra.mxu0 %v4699
        %v5121 = vpop.f32.mrf.mxu0
        %v5122 = vadd.f32 0.0, %v5121
        %v5123 = vpop.f32.mrf.mxu0
        %v5124 = vadd.f32 0.0, %v5123
        %5125 = vmatmul.bf16.gmra.mxu0 %v4700
        %v5126 = vpop.f32.mrf.mxu0
        %v5127 = vadd.f32 0.0, %v5126
        %v5128 = vpop.f32.mrf.mxu0
        %v5129 = vadd.f32 0.0, %v5128
        %5130 = vmatmul.bf16.gmra.mxu0 %v4701
        %v5131 = vpop.f32.mrf.mxu0
        %v5132 = vadd.f32 0.0, %v5131
        %v5133 = vpop.f32.mrf.mxu0
        %v5134 = vadd.f32 0.0, %v5133
        %5135 = vdwg.mxu0
        %5136 = vmatpush.bf16.msra.mxu0 %v5054
        %5137 = vmatpush.bf16.msra.mxu0 %v5053
        %5138 = vmatpush.bf16.msra.mxu0 %v5052
        %5139 = vmatpush.bf16.msra.mxu0 %v5051
        %5140 = vmatpush.bf16.msra.mxu0 %v5050
        %5141 = vmatpush.bf16.msra.mxu0 %v5049
        %5142 = vmatpush.bf16.msra.mxu0 %v5048
        %5143 = vmatpush.bf16.msra.mxu0 %v5047
        %5144 = vmatmul.bf16.gmra.mxu0 %v4745
        %v5145 = vpop.f32.mrf.mxu0
        %v5146 = vadd.f32 %v5097, %v5145
        %v5147 = vpop.f32.mrf.mxu0
        %v5148 = vadd.f32 %v5099, %v5147
        %5149 = vmatmul.bf16.gmra.mxu0 %v4757
        %v5150 = vpop.f32.mrf.mxu0
        %v5151 = vadd.f32 %v5102, %v5150
        %v5152 = vpop.f32.mrf.mxu0
        %v5153 = vadd.f32 %v5104, %v5152
        %5154 = vmatmul.bf16.gmra.mxu0 %v4769
        %v5155 = vpop.f32.mrf.mxu0
        %v5156 = vadd.f32 %v5107, %v5155
        %v5157 = vpop.f32.mrf.mxu0
        %v5158 = vadd.f32 %v5109, %v5157
        %5159 = vmatmul.bf16.gmra.mxu0 %v4781
        %v5160 = vpop.f32.mrf.mxu0
        %v5161 = vadd.f32 %v5112, %v5160
        %v5162 = vpop.f32.mrf.mxu0
        %v5163 = vadd.f32 %v5114, %v5162
        %5164 = vmatmul.bf16.gmra.mxu0 %v4793
        %v5165 = vpop.f32.mrf.mxu0
        %v5166 = vadd.f32 %v5117, %v5165
        %v5167 = vpop.f32.mrf.mxu0
        %v5168 = vadd.f32 %v5119, %v5167
        %5169 = vmatmul.bf16.gmra.mxu0 %v4805
        %v5170 = vpop.f32.mrf.mxu0
        %v5171 = vadd.f32 %v5122, %v5170
        %v5172 = vpop.f32.mrf.mxu0
        %v5173 = vadd.f32 %v5124, %v5172
        %5174 = vmatmul.bf16.gmra.mxu0 %v4817
        %v5175 = vpop.f32.mrf.mxu0
        %v5176 = vadd.f32 %v5127, %v5175
        %v5177 = vpop.f32.mrf.mxu0
        %v5178 = vadd.f32 %v5129, %v5177
        %5179 = vmatmul.bf16.gmra.mxu0 %v4829
        %v5180 = vpop.f32.mrf.mxu0
        %v5181 = vadd.f32 %v5132, %v5180
        %v5182 = vpop.f32.mrf.mxu0
        %v5183 = vadd.f32 %v5134, %v5182
        %5184 = vdwg.mxu0
        %5185 = vmatpush.bf16.msra.mxu0 %v5062
        %5186 = vmatpush.bf16.msra.mxu0 %v5061
        %5187 = vmatpush.bf16.msra.mxu0 %v5060
        %5188 = vmatpush.bf16.msra.mxu0 %v5059
        %5189 = vmatpush.bf16.msra.mxu0 %v5058
        %5190 = vmatpush.bf16.msra.mxu0 %v5057
        %5191 = vmatpush.bf16.msra.mxu0 %v5056
        %5192 = vmatpush.bf16.msra.mxu0 %v5055
        %5193 = vmatmul.bf16.gmra.mxu0 %v4864
        %v5194 = vpop.f32.mrf.mxu0
        %v5195 = vadd.f32 %v5146, %v5194
        %v5196 = vpop.f32.mrf.mxu0
        %v5197 = vadd.f32 %v5148, %v5196
        %5198 = vmatmul.bf16.gmra.mxu0 %v4867
        %v5199 = vpop.f32.mrf.mxu0
        %v5200 = vadd.f32 %v5151, %v5199
        %v5201 = vpop.f32.mrf.mxu0
        %v5202 = vadd.f32 %v5153, %v5201
        %5203 = vmatmul.bf16.gmra.mxu0 %v4870
        %v5204 = vpop.f32.mrf.mxu0
        %v5205 = vadd.f32 %v5156, %v5204
        %v5206 = vpop.f32.mrf.mxu0
        %v5207 = vadd.f32 %v5158, %v5206
        %5208 = vmatmul.bf16.gmra.mxu0 %v4873
        %v5209 = vpop.f32.mrf.mxu0
        %v5210 = vadd.f32 %v5161, %v5209
        %v5211 = vpop.f32.mrf.mxu0
        %v5212 = vadd.f32 %v5163, %v5211
        %5213 = vmatmul.bf16.gmra.mxu0 %v4876
        %v5214 = vpop.f32.mrf.mxu0
        %v5215 = vadd.f32 %v5166, %v5214
        %v5216 = vpop.f32.mrf.mxu0
        %v5217 = vadd.f32 %v5168, %v5216
        %5218 = vmatmul.bf16.gmra.mxu0 %v4879
        %v5219 = vpop.f32.mrf.mxu0
        %v5220 = vadd.f32 %v5171, %v5219
        %v5221 = vpop.f32.mrf.mxu0
        %v5222 = vadd.f32 %v5173, %v5221
        %5223 = vmatmul.bf16.gmra.mxu0 %v4882
        %v5224 = vpop.f32.mrf.mxu0
        %v5225 = vadd.f32 %v5176, %v5224
        %v5226 = vpop.f32.mrf.mxu0
        %v5227 = vadd.f32 %v5178, %v5226
        %5228 = vmatmul.bf16.gmra.mxu0 %v4885
        %v5229 = vpop.f32.mrf.mxu0
        %v5230 = vadd.f32 %v5181, %v5229
        %v5231 = vpop.f32.mrf.mxu0
        %v5232 = vadd.f32 %v5183, %v5231
        %5233 = vdwg.mxu0
        %v5234 = vadd.f32 %v4590, %v5195
        %v5235 = vadd.f32 %v4592, %v5197
        %v5236 = vadd.f32 %v4595, %v5200
        %v5237 = vadd.f32 %v4597, %v5202
        %v5238 = vadd.f32 %v4600, %v5205
        %v5239 = vadd.f32 %v4602, %v5207
        %v5240 = vadd.f32 %v4605, %v5210
        %v5241 = vadd.f32 %v4607, %v5212
        %v5242 = vadd.f32 %v4610, %v5215
        %v5243 = vadd.f32 %v4612, %v5217
        %v5244 = vadd.f32 %v4615, %v5220
        %v5245 = vadd.f32 %v4617, %v5222
        %v5246 = vadd.f32 %v4620, %v5225
        %v5247 = vadd.f32 %v4622, %v5227
        %v5248 = vadd.f32 %v4625, %v5230
        %v5249 = vadd.f32 %v4627, %v5232
        %v5250 = vld [vmem:[%s3 + $0x1] sm:$0x1]
        %v5251 = vld [vmem:[%s2178] sm:$0xe]
        %v5252 = vld [vmem:[%s2178 + $0x4] sm:$0xf]
        %v5253 = vld [vmem:[%s2178 + $0x8] sm:$0x1]
        %v5254 = vld [vmem:[%s2178 + $0x10] sm:$0xe]
        %v5255 = vld [vmem:[%s2178 + $0x14] sm:$0xf]
        %v5256 = vld [vmem:[%s2178 + $0x18] sm:$0x1]
        %v5257 = vld [vmem:[%s2178 + $0x20] sm:$0xe]
        %v5258 = vld [vmem:[%s2178 + $0x24] sm:$0xf]
        %v5259 = vld [vmem:[%s2178 + $0x28] sm:$0x1]
        %v5260 = vld [vmem:[%s2178 + $0x30] sm:$0xe]
        %v5261 = vld [vmem:[%s2178 + $0x34] sm:$0xf]
        %v5262 = vld [vmem:[%s2178 + $0x38] sm:$0x1]
        %v5263 = vld [vmem:[%s2178 + $0x40] sm:$0xe]
        %v5264 = vld [vmem:[%s2178 + $0x44] sm:$0xf]
        %v5265 = vld [vmem:[%s2178 + $0x48] sm:$0x1]
        %v5266 = vld [vmem:[%s2178 + $0x50] sm:$0xe]
        %v5267 = vld [vmem:[%s2178 + $0x54] sm:$0xf]
        %v5268 = vld [vmem:[%s2178 + $0x58] sm:$0x1]
        %v5269 = vld [vmem:[%s2178 + $0x60] sm:$0xe]
        %v5270 = vld [vmem:[%s2178 + $0x64] sm:$0xf]
        %v5271 = vld [vmem:[%s2178 + $0x68] sm:$0x1]
        %v5272 = vld [vmem:[%s2178 + $0x70] sm:$0xe]
        %v5273 = vld [vmem:[%s2178 + $0x74] sm:$0xf]
        %v5274 = vld [vmem:[%s2178 + $0x78] sm:$0x1]
        %v5275 = vunpack.c.l.bf16 %v5251
        %v5276 = vunpack.c.l.bf16 %v5252
        %v5277 = vunpack.c.l.bf16 %v5253
        %v5278 = vunpack.c.l.bf16 %v5254
        %v5279 = vunpack.c.l.bf16 %v5255
        %v5280 = vunpack.c.l.bf16 %v5256
        %v5281 = vunpack.c.l.bf16 %v5257
        %v5282 = vunpack.c.l.bf16 %v5258
        %v5283 = vunpack.c.l.bf16 %v5259
        %v5284 = vunpack.c.l.bf16 %v5260
        %v5285 = vunpack.c.l.bf16 %v5261
        %v5286 = vunpack.c.l.bf16 %v5262
        %v5287 = vunpack.c.l.bf16 %v5263
        %v5288 = vunpack.c.l.bf16 %v5264
        %v5289 = vunpack.c.l.bf16 %v5265
        %v5290 = vunpack.c.l.bf16 %v5266
        %v5291 = vunpack.c.l.bf16 %v5267
        %v5292 = vunpack.c.l.bf16 %v5268
        %v5293 = vunpack.c.l.bf16 %v5269
        %v5294 = vunpack.c.l.bf16 %v5270
        %v5295 = vunpack.c.l.bf16 %v5271
        %v5296 = vunpack.c.l.bf16 %v5272
        %v5297 = vunpack.c.l.bf16 %v5273
        %v5298 = vunpack.c.l.bf16 %v5274
        %v5299 = vperm.slane %v5250, 0
        %v5300 = vadd.f32 %v5234, %v5299
        %v5301 = vadd.f32 %v5235, %v5299
        %v5302 = vadd.f32 %v5236, %v5299
        %v5303 = vadd.f32 %v5237, %v5299
        %v5304 = vadd.f32 %v5238, %v5299
        %v5305 = vadd.f32 %v5239, %v5299
        %v5306 = vadd.f32 %v5240, %v5299
        %v5307 = vadd.f32 %v5241, %v5299
        %v5308 = vadd.f32 %v5242, %v5299
        %v5309 = vadd.f32 %v5243, %v5299
        %v5310 = vadd.f32 %v5244, %v5299
        %v5311 = vadd.f32 %v5245, %v5299
        %v5312 = vadd.f32 %v5246, %v5299
        %v5313 = vadd.f32 %v5247, %v5299
        %v5314 = vadd.f32 %v5248, %v5299
        %v5315 = vadd.f32 %v5249, %v5299
        %vm5340 = vcmask 1045504
        %v5341 = vrot.slane %v5275, 2
        %v5342 = vrot.slane %v5276, 2
        %v5343 = vsel %vm5340, %v5341, %v5342
        %v5344 = vrot.slane %v5277, 2
        %v5345 = vsel %vm5340, %v5342, %v5344
        %v5346 = vrot.slane %v5278, 2
        %v5347 = vrot.slane %v5279, 2
        %v5348 = vsel %vm5340, %v5346, %v5347
        %v5349 = vrot.slane %v5280, 2
        %v5350 = vsel %vm5340, %v5347, %v5349
        %v5351 = vrot.slane %v5281, 2
        %v5352 = vrot.slane %v5282, 2
        %v5353 = vsel %vm5340, %v5351, %v5352
        %v5354 = vrot.slane %v5283, 2
        %v5355 = vsel %vm5340, %v5352, %v5354
        %v5356 = vrot.slane %v5284, 2
        %v5357 = vrot.slane %v5285, 2
        %v5358 = vsel %vm5340, %v5356, %v5357
        %v5359 = vrot.slane %v5286, 2
        %v5360 = vsel %vm5340, %v5357, %v5359
        %v5361 = vrot.slane %v5287, 2
        %v5362 = vrot.slane %v5288, 2
        %v5363 = vsel %vm5340, %v5361, %v5362
        %v5364 = vrot.slane %v5289, 2
        %v5365 = vsel %vm5340, %v5362, %v5364
        %v5366 = vrot.slane %v5290, 2
        %v5367 = vrot.slane %v5291, 2
        %v5368 = vsel %vm5340, %v5366, %v5367
        %v5369 = vrot.slane %v5292, 2
        %v5370 = vsel %vm5340, %v5367, %v5369
        %v5371 = vrot.slane %v5293, 2
        %v5372 = vrot.slane %v5294, 2
        %v5373 = vsel %vm5340, %v5371, %v5372
        %v5374 = vrot.slane %v5295, 2
        %v5375 = vsel %vm5340, %v5372, %v5374
        %v5376 = vrot.slane %v5296, 2
        %v5377 = vrot.slane %v5297, 2
        %v5378 = vsel %vm5340, %v5376, %v5377
        %v5379 = vrot.slane %v5298, 2
        %v5380 = vsel %vm5340, %v5377, %v5379
        %v5397 = vadd.f32 %v5300, %v5343
        %v5398 = vadd.f32 %v5301, %v5345
        %v5399 = vadd.f32 %v5302, %v5348
        %v5400 = vadd.f32 %v5303, %v5350
        %v5401 = vadd.f32 %v5304, %v5353
        %v5402 = vadd.f32 %v5305, %v5355
        %v5403 = vadd.f32 %v5306, %v5358
        %v5404 = vadd.f32 %v5307, %v5360
        %v5405 = vadd.f32 %v5308, %v5363
        %v5406 = vadd.f32 %v5309, %v5365
        %v5407 = vadd.f32 %v5310, %v5368
        %v5408 = vadd.f32 %v5311, %v5370
        %v5409 = vadd.f32 %v5312, %v5373
        %v5410 = vadd.f32 %v5313, %v5375
        %v5411 = vadd.f32 %v5314, %v5378
        %v5412 = vadd.f32 %v5315, %v5380
        %v5413 = vmax.f32 %v5397, 0.0
        %v5414 = vmax.f32 %v5398, 0.0
        %v5415 = vmax.f32 %v5399, 0.0
        %v5416 = vmax.f32 %v5400, 0.0
        %v5417 = vmax.f32 %v5401, 0.0
        %v5418 = vmax.f32 %v5402, 0.0
        %v5419 = vmax.f32 %v5403, 0.0
        %v5420 = vmax.f32 %v5404, 0.0
        %v5421 = vmax.f32 %v5405, 0.0
        %v5422 = vmax.f32 %v5406, 0.0
        %v5423 = vmax.f32 %v5407, 0.0
        %v5424 = vmax.f32 %v5408, 0.0
        %v5425 = vmax.f32 %v5409, 0.0
        %v5426 = vmax.f32 %v5410, 0.0
        %v5427 = vmax.f32 %v5411, 0.0
        %v5428 = vmax.f32 %v5412, 0.0
        %5429 = vst [vmem:[%s264] sm:$0xff] %v5413
        %5430 = vst [vmem:[%s264 + $0x8] sm:$0xff] %v5414
        %5431 = vst [vmem:[%s264 + $0x10] sm:$0xff] %v5415
        %5432 = vst [vmem:[%s264 + $0x18] sm:$0xff] %v5416
        %5433 = vst [vmem:[%s264 + $0x20] sm:$0xff] %v5417
        %5434 = vst [vmem:[%s264 + $0x28] sm:$0xff] %v5418
        %5435 = vst [vmem:[%s264 + $0x30] sm:$0xff] %v5419
        %5436 = vst [vmem:[%s264 + $0x38] sm:$0xff] %v5420
        %5437 = vst [vmem:[%s264 + $0x40] sm:$0xff] %v5421
        %5438 = vst [vmem:[%s264 + $0x48] sm:$0xff] %v5422
        %5439 = vst [vmem:[%s264 + $0x50] sm:$0xff] %v5423
        %5440 = vst [vmem:[%s264 + $0x58] sm:$0xff] %v5424
        %5441 = vst [vmem:[%s264 + $0x60] sm:$0xff] %v5425
        %5442 = vst [vmem:[%s264 + $0x68] sm:$0xff] %v5426
        %5443 = vst [vmem:[%s264 + $0x70] sm:$0xff] %v5427
        %5444 = vst [vmem:[%s264 + $0x78] sm:$0xff] %v5428
        %s5445 = sand.u32 %s133, 1
        %s5446 = scalar_lea.sflag [#allocation5], %s5445
        %s5447 = sand.u32 %s133, 1
        %s5448 = smul.addr %s5447, 128
        %s5449 = scalar_lea.vmem [#allocation9], %s5448
        // Predicated region
        $region49: #{tpu_custom_call.1} parent=35 // pred_check
          %p5450 = pneg %p143
        $region50: #{tpu_custom_call.1} parent=35 // pred_check_branch
          %5452 = sbr.rel (%p5450) target = $region52
        $region51: #{tpu_custom_call.1} parent=35 // pred_region
          %s5453 = smul.u32 8, %s27
          %5455 = vsyncadd %s5446, 0
          %s5456 = smul.addr %s5453, 2
          %s5457 = smul.addr %s26, 32
          %s5458 = sadd.s32 %s5456, %s5457
          %s5459 = smul.addr %s5458, 8
          %s5460 = scalar_lea.hbm %s4, %s5459
          %s5461 = sshll.u32 %s5449, 4
          %s5462 = int_to_ptr.vmem [resolvable:$true] %s5461
          %s5463 = sshll.u32 %s5460, 4
          %s5464 = int_to_ptr.hbm [resolvable:$true] %s5463
          %5469 = dma.vmem_to_hbm [thread:$0]  %s5462, 2048, %s5464, %s5446, 128, 128, 8
        $region52: #{tpu_custom_call.1} parent=35 // pred_fallthru
          _
      $region36: #{tpu_custom_call.1} parent=5 // pred_fallthru
        _
      %p5470 = scmp.le.s32.totalorder 2, %s17
      // Predicated region
      $region53: #{tpu_custom_call.1} parent=5 // pred_check
        %p5471 = pneg %p5470
      $region54: #{tpu_custom_call.1} parent=5 // pred_check_branch
        %5473 = sbr.rel (%p5471) target = $region56
      $region55: #{tpu_custom_call.1} parent=5 // pred_region
        %s5474 = ssub.s32 %s17, 2
        // Predicated region
        $region57: #{tpu_custom_call.1} parent=55 // pred_check
          %p5475 = pneg %p149
        $region58: #{tpu_custom_call.1} parent=55 // pred_check_branch
          %5477 = sbr.rel (%p5475) target = $region60
        $region59: #{tpu_custom_call.1} parent=55 // pred_region
          %s5478 = sand.u32 %s134, 1
          %s5479 = scalar_lea.sflag [#allocation5], %s5478
          %s5480 = sand.u32 %s134, 1
          %s5481 = smul.addr %s5480, 128
          %s5482 = scalar_lea.vmem [#allocation9], %s5481
          %5484 = dma.done %s5479, 2048
        $region60: #{tpu_custom_call.1} parent=55 // pred_fallthru
          _
      $region56: #{tpu_custom_call.1} parent=5 // pred_fallthru
        _
    $region6: #{tpu_custom_call.1} parent=1 // loop_footer
      %s21 = sadd.s32 1, %s17
    $region7: #{tpu_custom_call.1} parent=1 // loop_footer_branch
      %16 = sbr.rel target = $region3
    $region8: #{tpu_custom_call.1} parent=1 // loop_exit
      _
    %5485 = vsyncpa [#allocation4], 1
    %s5486 = scalar_lea.sflag [#allocation4], 1
    %5487 = vsyncpa %s5486, 1
    %5488 = vsyncpa [#allocation7], 1
    %5489 = vsyncpa [#allocation5], 1
    %s5490 = scalar_lea.sflag [#allocation5], 1
    %5491 = vsyncpa %s5490, 1

</llo_original>
